<compile_context>
chip_gen: v7x
topology: tpu7x:2x2x1
jax: 0.10.0
libtpu: 0.0.40
codegen_flags: <defaults>
</compile_context>

<pallas_src>
import functools

import jax
import jax.numpy as jnp
from jax import lax
from jax.experimental import pallas as pl
from jax.experimental.pallas import tpu as pltpu

_EPS = 1e-5
_HI = jax.lax.Precision.HIGHEST     # reference (ground truth) only
_VMEM_LIMIT = 32 * 1024 * 1024      # explicit scoped-VMEM limit (safe on v5e..v7x)


def _pick_tile(m, pref=512):
    """Largest row tile <= pref (never full m when m > pref).  Prefers
    multiple-of-8 divisors of m so row blocks stay sublane-aligned."""
    if m <= pref:
        return m
    for t in range(pref, 7, -1):           # multiple-of-8 divisors first
        if t % 8 == 0 and m % t == 0:
            return t
    for t in range(pref, 0, -1):           # rare: m has no mult-of-8 divisor
        if m % t == 0:
            return t
    return 1


# ----------------------------- Pallas kernels ------------------------------ #

def _mm_bn_kernel(x_ref, w_ref, b_ref, o_ref, *, relu):
    """One row-block of X @ W + b (BN folded into W, b), optional fused ReLU."""
    acc = jnp.dot(x_ref[...], w_ref[...], preferred_element_type=jnp.float32)
    acc = acc + b_ref[...]
    if relu:
        acc = jnp.maximum(acc, 0.0)
    o_ref[...] = acc.astype(o_ref.dtype)


def matmul_bn(x, w, b, relu, out_dtype=jnp.bfloat16, pref_tile=512):
    """x: (M, K) bf16, w: (K, N) bf16, b: (1, N) f32 -> (M, N), tiled over rows."""
    M, K = x.shape
    N = w.shape[1]
    tm = _pick_tile(M, pref_tile)
    return pl.pallas_call(
        functools.partial(_mm_bn_kernel, relu=relu),
        out_shape=jax.ShapeDtypeStruct((M, N), out_dtype),
        grid=(M // tm,),
        in_specs=[
            pl.BlockSpec((tm, K), lambda i: (i, 0)),
            pl.BlockSpec((K, N), lambda i: (0, 0)),
            pl.BlockSpec((1, N), lambda i: (0, 0)),
        ],
        out_specs=pl.BlockSpec((tm, N), lambda i: (i, 0)),
        compiler_params=pltpu.CompilerParams(
            dimension_semantics=("parallel",),
            vmem_limit_bytes=_VMEM_LIMIT),
    )(x, w, b)


def _conv3x3_kernel(xp_ref, w_ref, b_ref, o_ref, *, taps, tr):
    """3x3 conv + BN + ReLU for one (image, output-row-block): 3 accumulating
    K=3*Cin matmuls over contiguous row slices of the phase-split planes."""
    cout = w_ref.shape[2]
    base = pl.program_id(1) * tr
    if tr % 8 == 0:
        base = pl.multiple_of(base, 8)
    acc = jnp.zeros((tr, cout), jnp.float32)
    for t, (p, off) in enumerate(taps):
        lhs = xp_ref[0, p, pl.ds(base + off, tr), :]          # bf16, no cast
        acc = acc + jnp.dot(lhs, w_ref[t], preferred_element_type=jnp.float32)
    acc = acc + b_ref[...]
    o_ref[0] = jnp.maximum(acc, 0.0).astype(o_ref.dtype)


def conv3x3_bn_relu(x_nhwc, w3tap, b, stride):
    """x: (B,H,W,Cin) bf16; w3tap: (3, 3*Cin, Cout) bf16 (BN folded, dx-merged);
    b: (1,Cout) f32.  Returns (B, Ho*Wo, Cout) bf16 -- exactly the valid output
    rows (no wrap columns), directly consumable by the following 1x1 conv."""
    # TODO(synk): grouped conv (groups > 1) not implemented; module default groups=1.
    B, H, W, Cin = x_nhwc.shape
    Cout = w3tap.shape[2]
    s = stride
    Ho = (H - 1) // s + 1
    Wo = (W - 1) // s + 1
    Hp = H + 2
    Hps = -(-Hp // s)

    xp = jnp.pad(x_nhwc, ((0, 0), (1, 1), (1, 1), (0, 0)))       # bf16 zero pad
    # Width-direction im2col of depth 3 (stride applied): for each output
    # column wo, concatenate the 3 input columns wo*s+dx along channels.  K per
    # tap becomes 3*Cin and the row layout below yields exactly Ho*Wo output
    # rows -> no wrap columns to slice off, no post-conv HBM round trip.
    xcat = jnp.concatenate(
        [xp[:, :, dx:dx + (Wo - 1) * s + 1:s, :] for dx in range(3)], axis=-1)
    # Row-phase split (for stride > 1): phase p holds padded rows p, p+s, ...
    # so each dy tap is a contiguous row slice of one phase plane.
    phases = []
    for p in range(s):
        ph = xcat[:, p::s]
        if ph.shape[1] < Hps:
            ph = jnp.pad(ph, ((0, 0), (0, Hps - ph.shape[1]), (0, 0), (0, 0)))
        phases.append(ph.reshape(B, Hps * Wo, 3 * Cin))
    planes = jnp.stack(phases, axis=1)                  # (B, s, Hps*Wo, 3Cin) bf16

    # Tap dy -> (phase index, flat row offset); output flat row r = ho*Wo + wo.
    taps = tuple((dy % s, (dy // s) * Wo) for dy in range(3))
    r_out = Ho * Wo
    max_off = max(off for _, off in taps)
    R = max(Hps * Wo, r_out + max_off)
    R = -(-R // 16) * 16                                 # bf16 sublane packing
    planes = jnp.pad(planes, ((0, 0), (0, 0), (0, R - Hps * Wo), (0, 0)))

    tr = _pick_tile(r_out, 512)
    nblk = r_out // tr
    return pl.pallas_call(
        functools.partial(_conv3x3_kernel, taps=taps, tr=tr),
        out_shape=jax.ShapeDtypeStruct((B, r_out, Cout), jnp.bfloat16),
        grid=(B, nblk),
        in_specs=[
            # Per-image plane block stays resident across the row-block axis
            # (index_map ignores i); only the output rows are tiled.
            pl.BlockSpec((1, s, R, 3 * Cin), lambda bi, i: (bi, 0, 0, 0)),
            pl.BlockSpec((3, 3 * Cin, Cout), lambda bi, i: (0, 0, 0)),
            pl.BlockSpec((1, Cout), lambda bi, i: (0, 0)),
        ],
        out_specs=pl.BlockSpec((1, tr, Cout), lambda bi, i: (bi, i, 0)),
        compiler_params=pltpu.CompilerParams(
            dimension_semantics=("parallel", "parallel"),
            vmem_limit_bytes=_VMEM_LIMIT),
    )(planes, w3tap, b)


def _mm_bn_gap_kernel(x_ref, w_ref, b_ref, y_ref, s_ref):
    """Final 1x1 conv + BN for one (image, row-block); also accumulates the
    per-image channel sums used by the SE squeeze (global average pool)."""
    acc = jnp.dot(x_ref[0], w_ref[...], preferred_element_type=jnp.float32)
    acc = acc + b_ref[...]
    y_ref[0] = acc.astype(y_ref.dtype)

    @pl.when(pl.program_id(1) == 0)
    def _():
        s_ref[...] = jnp.zeros_like(s_ref)

    s_ref[0] += jnp.sum(acc, axis=0, keepdims=True)


def _se_excite_kernel(sum_ref, w1_ref, b1_ref, w2_ref, b2_ref, o_ref, *, inv_hw):
    """SE squeeze (mean from fused-GAP sums) + excitation MLP + sigmoid,
    computed ONCE per image -- hoisted off the elementwise tail's critical path.
    Tiny MLP kept in f32 (negligible size; avoids extra rounding on the scale)."""
    s = sum_ref[...] * inv_hw                               # (B, C4) squeeze
    h = jnp.dot(s, w1_ref[...], preferred_element_type=jnp.float32) + b1_ref[...]
    h = jnp.maximum(h, 0.0)
    z = jnp.dot(h, w2_ref[...], preferred_element_type=jnp.float32) + b2_ref[...]
    # TODO(synk): SEblock activation_func='tanh' (Tanh+ReLU) variant not
    # implemented; module default 'sigmoid' is used.
    o_ref[...] = jax.nn.sigmoid(z)


def _scale_add_relu_kernel(se_ref, y_ref, id_ref, o_ref):
    """y*se + identity -> ReLU for one row block (pure VPU + stores)."""
    y = y_ref[0].astype(jnp.float32)
    out = jnp.maximum(y * se_ref[0] + id_ref[0].astype(jnp.float32), 0.0)
    o_ref[0] = out.astype(o_ref.dtype)


# ------------------------------ full forward ------------------------------- #

def bottleneck_forward(x_nchw, fp, stride, has_shortcut):
    B, Cin, H, W = x_nchw.shape
    Ho = (H - 1) // stride + 1
    Wo = (W - 1) // stride + 1
    HW = Ho * Wo
    width = fp['w1'].shape[1]
    C4 = fp['w3'].shape[1]

    x = jnp.transpose(x_nchw, (0, 2, 3, 1)).astype(jnp.bfloat16)   # NHWC, bf16

    # shortcut branch
    if has_shortcut:
        xs = x[:, ::stride, ::stride, :]
        identity = matmul_bn(xs.reshape(B * HW, Cin), fp['wsc'], fp['bsc'],
                             relu=False).reshape(B, HW, C4)
    else:
        # Identity shortcut only valid for stride==1 and Cin==C4.
        assert stride == 1 and Cin == C4, "identity path needs stride=1, Cin=C4"
        identity = x.reshape(B, HW, C4)

    # main branch: 1x1+BN+ReLU -> 3x3(stride)+BN+ReLU -> 1x1+BN (GAP fused)
    y1 = matmul_bn(x.reshape(B * H * W, Cin), fp['w1'], fp['b1'], relu=True)
    y2 = conv3x3_bn_relu(y1.reshape(B, H, W, width), fp['w2'], fp['b2'], stride)
    # y2 is already (B, Ho*Wo, width): no slice/reshape HBM round trip here.

    tm = _pick_tile(HW, 512)
    nblk = HW // tm
    y3, ysum = pl.pallas_call(
        _mm_bn_gap_kernel,
        out_shape=(jax.ShapeDtypeStruct((B, HW, C4), jnp.bfloat16),
                   jax.ShapeDtypeStruct((B, 1, C4), jnp.float32)),
        grid=(B, nblk),
        in_specs=[
            pl.BlockSpec((1, tm, width), lambda b, i: (b, i, 0)),
            pl.BlockSpec((width, C4), lambda b, i: (0, 0)),
            pl.BlockSpec((1, C4), lambda b, i: (0, 0)),
        ],
        out_specs=(pl.BlockSpec((1, tm, C4), lambda b, i: (b, i, 0)),
                   pl.BlockSpec((1, 1, C4), lambda b, i: (b, 0, 0))),
        compiler_params=pltpu.CompilerParams(
            dimension_semantics=("parallel", "arbitrary"),
            vmem_limit_bytes=_VMEM_LIMIT),
    )(y2, fp['w3'], fp['b3'])

    # SE excitation: one tiny one-shot kernel (per-image scale), hoisted out of
    # the per-row-block elementwise kernel.
    se = pl.pallas_call(
        functools.partial(_se_excite_kernel, inv_hw=1.0 / HW),
        out_shape=jax.ShapeDtypeStruct((B, C4), jnp.float32),
    )(ysum.reshape(B, C4), fp['fc1w'], fp['fc1b'], fp['fc2w'], fp['fc2b'])

    # channel re-scale + residual add + ReLU, tiled over row blocks, bf16 out.
    out = pl.pallas_call(
        _scale_add_relu_kernel,
        out_shape=jax.ShapeDtypeStruct((B, HW, C4), jnp.bfloat16),
        grid=(B, nblk),
        in_specs=[
            pl.BlockSpec((1, 1, C4), lambda b, i: (b, 0, 0)),
            pl.BlockSpec((1, tm, C4), lambda b, i: (b, i, 0)),
            pl.BlockSpec((1, tm, C4), lambda b, i: (b, i, 0)),
        ],
        out_specs=pl.BlockSpec((1, tm, C4), lambda b, i: (b, i, 0)),
        compiler_params=pltpu.CompilerParams(
            dimension_semantics=("parallel", "parallel"),
            vmem_limit_bytes=_VMEM_LIMIT),
    )(se.reshape(B, 1, C4), y3, identity)

    return jnp.transpose(out.reshape(B, Ho, Wo, C4), (0, 3, 1, 2))  # NCHW, bf16


# -------------------- parameter init & one-time preparation ----------------- #

def init_params(key, in_channels, channels, stride, groups=1, width_per_group=64):
    expansion = 4
    width = int(channels * (width_per_group / 64.0)) * groups
    c4 = channels * expansion
    hidden = c4 // 16
    ks = iter(jax.random.split(key, 32))

    def nrm(shape, fan_in):
        return jax.random.normal(next(ks), shape, jnp.float32) / jnp.sqrt(fan_in)

    def bn(c, prefix, p):
        p[prefix + '_g'] = 1.0 + 0.1 * jax.random.normal(next(ks), (c,), jnp.float32)
        p[prefix + '_b'] = 0.1 * jax.random.normal(next(ks), (c,), jnp.float32)
        p[prefix + '_m'] = 0.1 * jax.random.normal(next(ks), (c,), jnp.float32)
        p[prefix + '_v'] = 0.5 + jax.random.uniform(next(ks), (c,), jnp.float32)

    p = {}
    p['c1_w'] = nrm((width, in_channels, 1, 1), in_channels)
    p['c1_b'] = nrm((width,), width)
    bn(width, 'bn1', p)
    p['c2_w'] = nrm((width, width, 3, 3), 9 * width)
    p['c2_b'] = nrm((width,), width)
    bn(width, 'bn2', p)
    p['c3_w'] = nrm((c4, width, 1, 1), width)
    p['c3_b'] = nrm((c4,), c4)
    bn(c4, 'bn3', p)
    p['sc_w'] = nrm((c4, in_channels, 1, 1), in_channels)
    p['sc_b'] = nrm((c4,), c4)
    bn(c4, 'scbn', p)
    p['fc1_w'] = nrm((hidden, c4), c4)       # torch Linear layout (out, in)
    p['fc1_b'] = nrm((hidden,), hidden)
    p['fc2_w'] = nrm((c4, hidden), hidden)
    p['fc2_b'] = nrm((c4,), c4)
    return p


def _bn_fold(b, g, beta, m, v):
    s = g / jnp.sqrt(v + _EPS)
    return s, (b - m) * s + beta


def prepare_params(p):
    """Fold inference BN into conv weights/biases, pre-transpose to matmul
    layout and cast MXU operands to bf16.  Done once, outside the forward."""
    fp = {}
    s, bias = _bn_fold(p['c1_b'], p['bn1_g'], p['bn1_b'], p['bn1_m'], p['bn1_v'])
    fp['w1'] = (p['c1_w'][:, :, 0, 0].T * s[None, :]).astype(jnp.bfloat16)
    fp['b1'] = bias.reshape(1, -1).astype(jnp.float32)

    s, bias = _bn_fold(p['c2_b'], p['bn2_g'], p['bn2_b'], p['bn2_m'], p['bn2_v'])
    cout, cin = p['c2_w'].shape[0], p['c2_w'].shape[1]
    w9 = jnp.transpose(p['c2_w'], (2, 3, 1, 0)).reshape(9, cin, cout)
    # (3, 3*Cin, Cout): tap dy holds the dx=0..2 weights stacked along K so the
    # conv kernel consumes the width-im2col'd input with K=3*Cin per matmul.
    fp['w2'] = (w9 * s[None, None, :]).astype(jnp.bfloat16).reshape(3, 3 * cin, cout)
    fp['b2'] = bias.reshape(1, -1).astype(jnp.float32)

    s, bias = _bn_fold(p['c3_b'], p['bn3_g'], p['bn3_b'], p['bn3_m'], p['bn3_v'])
    fp['w3'] = (p['c3_w'][:, :, 0, 0].T * s[None, :]).astype(jnp.bfloat16)
    fp['b3'] = bias.reshape(1, -1).astype(jnp.float32)

    s, bias = _bn_fold(p['sc_b'], p['scbn_g'], p['scbn_b'], p['scbn_m'], p['scbn_v'])
    fp['wsc'] = (p['sc_w'][:, :, 0, 0].T * s[None, :]).astype(jnp.bfloat16)
    fp['bsc'] = bias.reshape(1, -1).astype(jnp.float32)

    # SE MLP (tiny, one-shot) kept in f32; torch Linear is (out, in) -> transpose.
    fp['fc1w'] = p['fc1_w'].T.astype(jnp.float32)
    fp['fc1b'] = p['fc1_b'].reshape(1, -1).astype(jnp.float32)
    fp['fc2w'] = p['fc2_w'].T.astype(jnp.float32)
    fp['fc2b'] = p['fc2_b'].reshape(1, -1).astype(jnp.float32)
    return fp


# ------------------------------ plain-JAX ref ------------------------------ #

def _ref_conv(x, w, b, stride=1, pad=0):
    y = lax.conv_general_dilated(
        x, w, (stride, stride), ((pad, pad), (pad, pad)),
        dimension_numbers=('NCHW', 'OIHW', 'NCHW'), precision=_HI)
    return y + b[None, :, None, None]


def _ref_bn(x, g, b, m, v):
    s = g / jnp.sqrt(v + _EPS)
    return (x - m[None, :, None, None]) * s[None, :, None, None] + b[None, :, None, None]


def ref_forward(x, p, stride, has_shortcut):
    if has_shortcut:
        identity = _ref_bn(_ref_conv(x, p['sc_w'], p['sc_b'], stride, 0),
                           p['scbn_g'], p['scbn_b'], p['scbn_m'], p['scbn_v'])
    else:
        identity = x
    y = jax.nn.relu(_ref_bn(_ref_conv(x, p['c1_w'], p['c1_b'], 1, 0),
                            p['bn1_g'], p['bn1_b'], p['bn1_m'], p['bn1_v']))
    y = jax.nn.relu(_ref_bn(_ref_conv(y, p['c2_w'], p['c2_b'], stride, 1),
                            p['bn2_g'], p['bn2_b'], p['bn2_m'], p['bn2_v']))
    y = _ref_bn(_ref_conv(y, p['c3_w'], p['c3_b'], 1, 0),
                p['bn3_g'], p['bn3_b'], p['bn3_m'], p['bn3_v'])
    s = jnp.mean(y, axis=(2, 3))
    h = jax.nn.relu(jnp.dot(s, p['fc1_w'].T, precision=_HI) + p['fc1_b'])
    se = jax.nn.sigmoid(jnp.dot(h, p['fc2_w'].T, precision=_HI) + p['fc2_b'])
    return jax.nn.relu(y * se[:, :, None, None] + identity)


# ----------------------------------- main ----------------------------------- #

if __name__ == "__main__":
    B, Cin, H, W = 2, 8, 16, 16          # NCHW input, matching PyTorch
    channels, stride = 4, 2              # width=4, out channels=16, shortcut active
    has_shortcut = (stride != 1) or (Cin != channels * 4)

    key = jax.random.PRNGKey(0)
    kx, kp = jax.random.split(key)
    x = jax.random.normal(kx, (B, Cin, H, W), jnp.float32)
    params = init_params(kp, Cin, channels, stride)
    fparams = prepare_params(params)     # BN folding / transposes: done once

    fwd = jax.jit(bottleneck_forward, static_argnames=("stride", "has_shortcut"))
    out = jax.block_until_ready(fwd(x, fparams, stride=stride,
                                    has_shortcut=has_shortcut))

    ref = ref_forward(x, params, stride=stride, has_shortcut=has_shortcut)
    Ho = (H - 1) // stride + 1
    assert out.shape == (B, channels * 4, Ho, Ho), out.shape
    # Kernel path is end-to-end bf16 (MXU inputs, activations and the final
    # store; f32 accumulation); reference is f32/HIGHEST -> compare loosely.
    outf = out.astype(jnp.float32)
    err = float(jnp.max(jnp.abs(outf - ref)))
    assert jnp.allclose(outf, ref, atol=1e-1, rtol=5e-2), err

    print("KERNEL_OK")
</pallas_src>

<mosaic_0001>
module attributes {stable_mosaic.version = 11 : i64} {
  func.func @_mm_bn_kernel(%arg0: i32, %arg1: memref<128x8xbf16, #tpu.memory_space<vmem>>, %arg2: memref<8x16xbf16, #tpu.memory_space<vmem>>, %arg3: memref<1x16xf32, #tpu.memory_space<vmem>>, %arg4: memref<128x16xbf16, #tpu.memory_space<vmem>>) attributes {dimension_semantics = [#tpu.dimension_semantics<parallel>], iteration_bounds = array<i64: 1>, scalar_prefetch = 0 : i64, scratch_operands = 0 : i64, tpu.core_type = #tpu.core_type<tc>, window_params = [{transform_indices = @transform_0, window_bounds = array<i64: 128, 8>}, {pipeline_mode = #tpu.pipeline_mode<synchronous>, transform_indices = @transform_1, window_bounds = array<i64: 8, 16>}, {pipeline_mode = #tpu.pipeline_mode<synchronous>, transform_indices = @transform_2, window_bounds = array<i64: 1, 16>}, {transform_indices = @transform_3, window_bounds = array<i64: 128, 16>}]} {
    %c0 = arith.constant 0 : index
    %c0_0 = arith.constant 0 : index
    %0 = vector.load %arg1[%c0, %c0_0] : memref<128x8xbf16, #tpu.memory_space<vmem>>, vector<128x8xbf16>
    %c0_1 = arith.constant 0 : index
    %c0_2 = arith.constant 0 : index
    %1 = vector.load %arg2[%c0_1, %c0_2] : memref<8x16xbf16, #tpu.memory_space<vmem>>, vector<8x16xbf16>
    %cst = arith.constant dense<0.000000e+00> : vector<128x16xf32>
    %2 = tpu.matmul %0, %1, %cst {dimension_numbers = #tpu.dot_dimension_numbers<[1], [0], [0], [1], [0, 0, 1, 1], [], []>} : vector<128x8xbf16>, vector<8x16xbf16>, vector<128x16xf32> -> vector<128x16xf32>
    %c0_3 = arith.constant 0 : index
    %c0_4 = arith.constant 0 : index
    %3 = vector.load %arg3[%c0_3, %c0_4] : memref<1x16xf32, #tpu.memory_space<vmem>>, vector<1x16xf32>
    %4 = vector.broadcast %3 : vector<1x16xf32> to vector<128x16xf32>
    %5 = arith.addf %2, %4 : vector<128x16xf32>
    %6 = arith.truncf %5 : vector<128x16xf32> to vector<128x16xbf16>
    %c0_5 = arith.constant 0 : index
    %c0_6 = arith.constant 0 : index
    %7 = vector.load %arg4[%c0_5, %c0_6] : memref<128x16xbf16, #tpu.memory_space<vmem>>, vector<128x16xbf16>
    tpu.vector_store %arg4[%c0_5, %c0_6], %6 {strides = array<i32>} : memref<128x16xbf16, #tpu.memory_space<vmem>>, vector<128x16xbf16>,
    return
  }
  func.func @transform_0(%arg0: i32) -> (i32, i32) {
    %c0_i32 = arith.constant 0 : i32
    %c0_i32_0 = arith.constant 0 : i32
    return %arg0, %c0_i32 : i32, i32
  }
  func.func @transform_1(%arg0: i32) -> (i32, i32) {
    %c0_i32 = arith.constant 0 : i32
    %c0_i32_0 = arith.constant 0 : i32
    %c0_i32_1 = arith.constant 0 : i32
    return %c0_i32, %c0_i32_0 : i32, i32
  }
  func.func @transform_2(%arg0: i32) -> (i32, i32) {
    %c0_i32 = arith.constant 0 : i32
    %c0_i32_0 = arith.constant 0 : i32
    %c0_i32_1 = arith.constant 0 : i32
    return %c0_i32, %c0_i32_0 : i32, i32
  }
  func.func @transform_3(%arg0: i32) -> (i32, i32) {
    %c0_i32 = arith.constant 0 : i32
    %c0_i32_0 = arith.constant 0 : i32
    return %arg0, %c0_i32 : i32, i32
  }
}

module attributes {stable_mosaic.version = 11 : i64} {
  func.func @_mm_bn_kernel(%arg0: i32, %arg1: memref<512x8xbf16, #tpu.memory_space<vmem>>, %arg2: memref<8x4xbf16, #tpu.memory_space<vmem>>, %arg3: memref<1x4xf32, #tpu.memory_space<vmem>>, %arg4: memref<512x4xbf16, #tpu.memory_space<vmem>>) attributes {dimension_semantics = [#tpu.dimension_semantics<parallel>], iteration_bounds = array<i64: 1>, scalar_prefetch = 0 : i64, scratch_operands = 0 : i64, tpu.core_type = #tpu.core_type<tc>, window_params = [{transform_indices = @transform_0, window_bounds = array<i64: 512, 8>}, {pipeline_mode = #tpu.pipeline_mode<synchronous>, transform_indices = @transform_1, window_bounds = array<i64: 8, 4>}, {pipeline_mode = #tpu.pipeline_mode<synchronous>, transform_indices = @transform_2, window_bounds = array<i64: 1, 4>}, {transform_indices = @transform_3, window_bounds = array<i64: 512, 4>}]} {
    %c0 = arith.constant 0 : index
    %c0_0 = arith.constant 0 : index
    %0 = vector.load %arg1[%c0, %c0_0] : memref<512x8xbf16, #tpu.memory_space<vmem>>, vector<512x8xbf16>
    %c0_1 = arith.constant 0 : index
    %c0_2 = arith.constant 0 : index
    %1 = vector.load %arg2[%c0_1, %c0_2] : memref<8x4xbf16, #tpu.memory_space<vmem>>, vector<8x4xbf16>
    %cst = arith.constant dense<0.000000e+00> : vector<512x4xf32>
    %2 = tpu.matmul %0, %1, %cst {dimension_numbers = #tpu.dot_dimension_numbers<[1], [0], [0], [1], [0, 0, 1, 1], [], []>} : vector<512x8xbf16>, vector<8x4xbf16>, vector<512x4xf32> -> vector<512x4xf32>
    %c0_3 = arith.constant 0 : index
    %c0_4 = arith.constant 0 : index
    %3 = vector.load %arg3[%c0_3, %c0_4] : memref<1x4xf32, #tpu.memory_space<vmem>>, vector<1x4xf32>
    %4 = vector.broadcast %3 : vector<1x4xf32> to vector<512x4xf32>
    %5 = arith.addf %2, %4 : vector<512x4xf32>
    %cst_5 = arith.constant 0.000000e+00 : f32
    %6 = vector.broadcast %cst_5 : f32 to vector<512x4xf32>
    %7 = arith.maximumf %5, %6 : vector<512x4xf32>
    %8 = arith.truncf %7 : vector<512x4xf32> to vector<512x4xbf16>
    %c0_6 = arith.constant 0 : index
    %c0_7 = arith.constant 0 : index
    %9 = vector.load %arg4[%c0_6, %c0_7] : memref<512x4xbf16, #tpu.memory_space<vmem>>, vector<512x4xbf16>
    tpu.vector_store %arg4[%c0_6, %c0_7], %8 {strides = array<i32>} : memref<512x4xbf16, #tpu.memory_space<vmem>>, vector<512x4xbf16>,
    return
  }
  func.func @transform_0(%arg0: i32) -> (i32, i32) {
    %c0_i32 = arith.constant 0 : i32
    %c0_i32_0 = arith.constant 0 : i32
    return %arg0, %c0_i32 : i32, i32
  }
  func.func @transform_1(%arg0: i32) -> (i32, i32) {
    %c0_i32 = arith.constant 0 : i32
    %c0_i32_0 = arith.constant 0 : i32
    %c0_i32_1 = arith.constant 0 : i32
    return %c0_i32, %c0_i32_0 : i32, i32
  }
  func.func @transform_2(%arg0: i32) -> (i32, i32) {
    %c0_i32 = arith.constant 0 : i32
    %c0_i32_0 = arith.constant 0 : i32
    %c0_i32_1 = arith.constant 0 : i32
    return %c0_i32, %c0_i32_0 : i32, i32
  }
  func.func @transform_3(%arg0: i32) -> (i32, i32) {
    %c0_i32 = arith.constant 0 : i32
    %c0_i32_0 = arith.constant 0 : i32
    return %arg0, %c0_i32 : i32, i32
  }
}

module attributes {stable_mosaic.version = 11 : i64} {
  func.func @_se_excite_kernel(%arg0: memref<2x16xf32, #tpu.memory_space<vmem>>, %arg1: memref<16x1xf32, #tpu.memory_space<vmem>>, %arg2: memref<1x1xf32, #tpu.memory_space<vmem>>, %arg3: memref<1x16xf32, #tpu.memory_space<vmem>>, %arg4: memref<1x16xf32, #tpu.memory_space<vmem>>, %arg5: memref<2x16xf32, #tpu.memory_space<vmem>>) attributes {dimension_semantics = [], scalar_prefetch = 0 : i64, scratch_operands = 0 : i64, tpu.core_type = #tpu.core_type<tc>} {
    %c0 = arith.constant 0 : index
    %c0_0 = arith.constant 0 : index
    %0 = vector.load %arg0[%c0, %c0_0] : memref<2x16xf32, #tpu.memory_space<vmem>>, vector<2x16xf32>
    %cst = arith.constant 1.562500e-02 : f32
    %1 = vector.broadcast %cst : f32 to vector<2x16xf32>
    %2 = arith.mulf %0, %1 : vector<2x16xf32>
    %c0_1 = arith.constant 0 : index
    %c0_2 = arith.constant 0 : index
    %3 = vector.load %arg1[%c0_1, %c0_2] : memref<16x1xf32, #tpu.memory_space<vmem>>, vector<16x1xf32>
    %cst_3 = arith.constant dense<0.000000e+00> : vector<2x1xf32>
    %4 = tpu.matmul %2, %3, %cst_3 {dimension_numbers = #tpu.dot_dimension_numbers<[1], [0], [0], [1], [0, 0, 1, 1], [], []>} : vector<2x16xf32>, vector<16x1xf32>, vector<2x1xf32> -> vector<2x1xf32>
    %c0_4 = arith.constant 0 : index
    %c0_5 = arith.constant 0 : index
    %5 = vector.load %arg2[%c0_4, %c0_5] : memref<1x1xf32, #tpu.memory_space<vmem>>, vector<1x1xf32>
    %6 = vector.broadcast %5 : vector<1x1xf32> to vector<2x1xf32>
    %7 = arith.addf %4, %6 : vector<2x1xf32>
    %cst_6 = arith.constant 0.000000e+00 : f32
    %8 = vector.broadcast %cst_6 : f32 to vector<2x1xf32>
    %9 = arith.maximumf %7, %8 : vector<2x1xf32>
    %c0_7 = arith.constant 0 : index
    %c0_8 = arith.constant 0 : index
    %10 = vector.load %arg3[%c0_7, %c0_8] : memref<1x16xf32, #tpu.memory_space<vmem>>, vector<1x16xf32>
    %cst_9 = arith.constant dense<0.000000e+00> : vector<2x16xf32>
    %11 = tpu.matmul %9, %10, %cst_9 {dimension_numbers = #tpu.dot_dimension_numbers<[1], [0], [0], [1], [0, 0, 1, 1], [], []>} : vector<2x1xf32>, vector<1x16xf32>, vector<2x16xf32> -> vector<2x16xf32>
    %c0_10 = arith.constant 0 : index
    %c0_11 = arith.constant 0 : index
    %12 = vector.load %arg4[%c0_10, %c0_11] : memref<1x16xf32, #tpu.memory_space<vmem>>, vector<1x16xf32>
    %13 = vector.broadcast %12 : vector<1x16xf32> to vector<2x16xf32>
    %14 = arith.addf %11, %13 : vector<2x16xf32>
    %15 = arith.negf %14 : vector<2x16xf32>
    %16 = math.exp %15 : vector<2x16xf32>
    %cst_12 = arith.constant 1.000000e+00 : f32
    %17 = vector.broadcast %cst_12 : f32 to vector<2x16xf32>
    %18 = arith.addf %17, %16 : vector<2x16xf32>
    %19 = arith.divf %17, %18 : vector<2x16xf32>
    %c0_13 = arith.constant 0 : index
    %c0_14 = arith.constant 0 : index
    %20 = vector.load %arg5[%c0_13, %c0_14] : memref<2x16xf32, #tpu.memory_space<vmem>>, vector<2x16xf32>
    tpu.vector_store %arg5[%c0_13, %c0_14], %19 {strides = array<i32>} : memref<2x16xf32, #tpu.memory_space<vmem>>, vector<2x16xf32>,
    return
  }
}

module attributes {stable_mosaic.version = 11 : i64} {
  func.func @_conv3x3_kernel(%arg0: i32, %arg1: i32, %arg2: memref<1x2x80x12xbf16, #tpu.memory_space<vmem>>, %arg3: memref<3x12x4xbf16, #tpu.memory_space<vmem>>, %arg4: memref<1x4xf32, #tpu.memory_space<vmem>>, %arg5: memref<1x64x4xbf16, #tpu.memory_space<vmem>>) attributes {dimension_semantics = [#tpu.dimension_semantics<parallel>, #tpu.dimension_semantics<parallel>], iteration_bounds = array<i64: 2, 1>, scalar_prefetch = 0 : i64, scratch_operands = 0 : i64, tpu.core_type = #tpu.core_type<tc>, window_params = [{transform_indices = @transform_0, window_bounds = array<i64: 1, 2, 80, 12>}, {pipeline_mode = #tpu.pipeline_mode<synchronous>, transform_indices = @transform_1, window_bounds = array<i64: 3, 12, 4>}, {pipeline_mode = #tpu.pipeline_mode<synchronous>, transform_indices = @transform_2, window_bounds = array<i64: 1, 4>}, {transform_indices = @transform_3, window_bounds = array<i64: 1, 64, 4>}]} {
    %c64_i32 = arith.constant 64 : i32
    %0 = arith.muli %arg1, %c64_i32 : i32
    %1 = tpu.assume_multiple %0, 8 : i32
    %cst = arith.constant 0.000000e+00 : f32
    %2 = vector.broadcast %cst : f32 to vector<64x4xf32>
    %c0_i32 = arith.constant 0 : i32
    %3 = arith.addi %1, %c0_i32 : i32
    %c0 = arith.constant 0 : index
    %c0_0 = arith.constant 0 : index
    %4 = arith.index_cast %3 : i32 to index
    %c0_1 = arith.constant 0 : index
    %5 = vector.load %arg2[%c0, %c0_0, %4, %c0_1] : memref<1x2x80x12xbf16, #tpu.memory_space<vmem>>, vector<1x1x64x12xbf16>
    %6 = vector.shape_cast %5 : vector<1x1x64x12xbf16> to vector<64x12xbf16>
    %c0_2 = arith.constant 0 : index
    %c0_3 = arith.constant 0 : index
    %c0_4 = arith.constant 0 : index
    %7 = vector.load %arg3[%c0_2, %c0_3, %c0_4] : memref<3x12x4xbf16, #tpu.memory_space<vmem>>, vector<1x12x4xbf16>
    %8 = vector.shape_cast %7 : vector<1x12x4xbf16> to vector<12x4xbf16>
    %cst_5 = arith.constant dense<0.000000e+00> : vector<64x4xf32>
    %9 = tpu.matmul %6, %8, %cst_5 {dimension_numbers = #tpu.dot_dimension_numbers<[1], [0], [0], [1], [0, 0, 1, 1], [], []>} : vector<64x12xbf16>, vector<12x4xbf16>, vector<64x4xf32> -> vector<64x4xf32>
    %10 = arith.addf %2, %9 : vector<64x4xf32>
    %c0_i32_6 = arith.constant 0 : i32
    %11 = arith.addi %1, %c0_i32_6 : i32
    %c0_7 = arith.constant 0 : index
    %c1 = arith.constant 1 : index
    %12 = arith.index_cast %11 : i32 to index
    %c0_8 = arith.constant 0 : index
    %13 = vector.load %arg2[%c0_7, %c1, %12, %c0_8] : memref<1x2x80x12xbf16, #tpu.memory_space<vmem>>, vector<1x1x64x12xbf16>
    %14 = vector.shape_cast %13 : vector<1x1x64x12xbf16> to vector<64x12xbf16>
    %c1_9 = arith.constant 1 : index
    %c0_10 = arith.constant 0 : index
    %c0_11 = arith.constant 0 : index
    %15 = vector.load %arg3[%c1_9, %c0_10, %c0_11] : memref<3x12x4xbf16, #tpu.memory_space<vmem>>, vector<1x12x4xbf16>
    %16 = vector.shape_cast %15 : vector<1x12x4xbf16> to vector<12x4xbf16>
    %cst_12 = arith.constant dense<0.000000e+00> : vector<64x4xf32>
    %17 = tpu.matmul %14, %16, %cst_12 {dimension_numbers = #tpu.dot_dimension_numbers<[1], [0], [0], [1], [0, 0, 1, 1], [], []>} : vector<64x12xbf16>, vector<12x4xbf16>, vector<64x4xf32> -> vector<64x4xf32>
    %18 = arith.addf %10, %17 : vector<64x4xf32>
    %c8_i32 = arith.constant 8 : i32
    %19 = arith.addi %1, %c8_i32 : i32
    %c0_13 = arith.constant 0 : index
    %c0_14 = arith.constant 0 : index
    %20 = arith.index_cast %19 : i32 to index
    %c0_15 = arith.constant 0 : index
    %21 = vector.load %arg2[%c0_13, %c0_14, %20, %c0_15] : memref<1x2x80x12xbf16, #tpu.memory_space<vmem>>, vector<1x1x64x12xbf16>
    %22 = vector.shape_cast %21 : vector<1x1x64x12xbf16> to vector<64x12xbf16>
    %c2 = arith.constant 2 : index
    %c0_16 = arith.constant 0 : index
    %c0_17 = arith.constant 0 : index
    %23 = vector.load %arg3[%c2, %c0_16, %c0_17] : memref<3x12x4xbf16, #tpu.memory_space<vmem>>, vector<1x12x4xbf16>
    %24 = vector.shape_cast %23 : vector<1x12x4xbf16> to vector<12x4xbf16>
    %cst_18 = arith.constant dense<0.000000e+00> : vector<64x4xf32>
    %25 = tpu.matmul %22, %24, %cst_18 {dimension_numbers = #tpu.dot_dimension_numbers<[1], [0], [0], [1], [0, 0, 1, 1], [], []>} : vector<64x12xbf16>, vector<12x4xbf16>, vector<64x4xf32> -> vector<64x4xf32>
    %26 = arith.addf %18, %25 : vector<64x4xf32>
    %c0_19 = arith.constant 0 : index
    %c0_20 = arith.constant 0 : index
    %27 = vector.load %arg4[%c0_19, %c0_20] : memref<1x4xf32, #tpu.memory_space<vmem>>, vector<1x4xf32>
    %28 = vector.broadcast %27 : vector<1x4xf32> to vector<64x4xf32>
    %29 = arith.addf %26, %28 : vector<64x4xf32>
    %cst_21 = arith.constant 0.000000e+00 : f32
    %30 = vector.broadcast %cst_21 : f32 to vector<64x4xf32>
    %31 = arith.maximumf %29, %30 : vector<64x4xf32>
    %32 = arith.truncf %31 : vector<64x4xf32> to vector<64x4xbf16>
    %c0_22 = arith.constant 0 : index
    %c0_23 = arith.constant 0 : index
    %c0_24 = arith.constant 0 : index
    %33 = vector.load %arg5[%c0_22, %c0_23, %c0_24] : memref<1x64x4xbf16, #tpu.memory_space<vmem>>, vector<1x64x4xbf16>
    %34 = vector.shape_cast %33 : vector<1x64x4xbf16> to vector<64x4xbf16>
    %35 = vector.shape_cast %32 : vector<64x4xbf16> to vector<1x64x4xbf16>
    tpu.vector_store %arg5[%c0_22, %c0_23, %c0_24], %35 {strides = array<i32>} : memref<1x64x4xbf16, #tpu.memory_space<vmem>>, vector<1x64x4xbf16>,
    return
  }
  func.func @transform_0(%arg0: i32, %arg1: i32) -> (i32, i32, i32, i32) {
    %c0_i32 = arith.constant 0 : i32
    %c0_i32_0 = arith.constant 0 : i32
    %c0_i32_1 = arith.constant 0 : i32
    %c0_i32_2 = arith.constant 0 : i32
    return %arg0, %c0_i32, %c0_i32_0, %c0_i32_1 : i32, i32, i32, i32
  }
  func.func @transform_1(%arg0: i32, %arg1: i32) -> (i32, i32, i32) {
    %c0_i32 = arith.constant 0 : i32
    %c0_i32_0 = arith.constant 0 : i32
    %c0_i32_1 = arith.constant 0 : i32
    %c0_i32_2 = arith.constant 0 : i32
    return %c0_i32, %c0_i32_0, %c0_i32_1 : i32, i32, i32
  }
  func.func @transform_2(%arg0: i32, %arg1: i32) -> (i32, i32) {
    %c0_i32 = arith.constant 0 : i32
    %c0_i32_0 = arith.constant 0 : i32
    %c0_i32_1 = arith.constant 0 : i32
    return %c0_i32, %c0_i32_0 : i32, i32
  }
  func.func @transform_3(%arg0: i32, %arg1: i32) -> (i32, i32, i32) {
    %c0_i32 = arith.constant 0 : i32
    %c0_i32_0 = arith.constant 0 : i32
    return %arg0, %arg1, %c0_i32 : i32, i32, i32
  }
}

module attributes {stable_mosaic.version = 11 : i64} {
  func.func @_mm_bn_gap_kernel(%arg0: i32, %arg1: i32, %arg2: memref<1x64x4xbf16, #tpu.memory_space<vmem>>, %arg3: memref<4x16xbf16, #tpu.memory_space<vmem>>, %arg4: memref<1x16xf32, #tpu.memory_space<vmem>>, %arg5: memref<1x64x16xbf16, #tpu.memory_space<vmem>>, %arg6: memref<1x1x16xf32, #tpu.memory_space<vmem>>) attributes {dimension_semantics = [#tpu.dimension_semantics<parallel>, #tpu.dimension_semantics<arbitrary>], iteration_bounds = array<i64: 2, 1>, scalar_prefetch = 0 : i64, scratch_operands = 0 : i64, tpu.core_type = #tpu.core_type<tc>, window_params = [{transform_indices = @transform_0, window_bounds = array<i64: 1, 64, 4>}, {pipeline_mode = #tpu.pipeline_mode<synchronous>, transform_indices = @transform_1, window_bounds = array<i64: 4, 16>}, {pipeline_mode = #tpu.pipeline_mode<synchronous>, transform_indices = @transform_2, window_bounds = array<i64: 1, 16>}, {transform_indices = @transform_3, window_bounds = array<i64: 1, 64, 16>}, {transform_indices = @transform_4, window_bounds = array<i64: 1, 1, 16>}]} {
    %c0 = arith.constant 0 : index
    %c0_0 = arith.constant 0 : index
    %c0_1 = arith.constant 0 : index
    %0 = vector.load %arg2[%c0, %c0_0, %c0_1] : memref<1x64x4xbf16, #tpu.memory_space<vmem>>, vector<1x64x4xbf16>
    %1 = vector.shape_cast %0 : vector<1x64x4xbf16> to vector<64x4xbf16>
    %c0_2 = arith.constant 0 : index
    %c0_3 = arith.constant 0 : index
    %2 = vector.load %arg3[%c0_2, %c0_3] : memref<4x16xbf16, #tpu.memory_space<vmem>>, vector<4x16xbf16>
    %cst = arith.constant dense<0.000000e+00> : vector<64x16xf32>
    %3 = tpu.matmul %1, %2, %cst {dimension_numbers = #tpu.dot_dimension_numbers<[1], [0], [0], [1], [0, 0, 1, 1], [], []>} : vector<64x4xbf16>, vector<4x16xbf16>, vector<64x16xf32> -> vector<64x16xf32>
    %c0_4 = arith.constant 0 : index
    %c0_5 = arith.constant 0 : index
    %4 = vector.load %arg4[%c0_4, %c0_5] : memref<1x16xf32, #tpu.memory_space<vmem>>, vector<1x16xf32>
    %5 = vector.broadcast %4 : vector<1x16xf32> to vector<64x16xf32>
    %6 = arith.addf %3, %5 : vector<64x16xf32>
    %7 = arith.truncf %6 : vector<64x16xf32> to vector<64x16xbf16>
    %c0_6 = arith.constant 0 : index
    %c0_7 = arith.constant 0 : index
    %c0_8 = arith.constant 0 : index
    %8 = vector.load %arg5[%c0_6, %c0_7, %c0_8] : memref<1x64x16xbf16, #tpu.memory_space<vmem>>, vector<1x64x16xbf16>
    %9 = vector.shape_cast %8 : vector<1x64x16xbf16> to vector<64x16xbf16>
    %10 = vector.shape_cast %7 : vector<64x16xbf16> to vector<1x64x16xbf16>
    tpu.vector_store %arg5[%c0_6, %c0_7, %c0_8], %10 {strides = array<i32>} : memref<1x64x16xbf16, #tpu.memory_space<vmem>>, vector<1x64x16xbf16>,
    %c0_i32 = arith.constant 0 : i32
    %11 = arith.cmpi eq, %arg1, %c0_i32 : i32
    %12 = arith.extui %11 : i1 to i32
    %c0_i32_9 = arith.constant 0 : i32
    %13 = arith.cmpi ne, %12, %c0_i32_9 : i32
    scf.if %13 {
      %cst_17 = arith.constant 0.000000e+00 : f32
      %22 = vector.broadcast %cst_17 : f32 to vector<1x1x16xf32>
      %c0_18 = arith.constant 0 : index
      %c0_19 = arith.constant 0 : index
      %c0_20 = arith.constant 0 : index
      %23 = vector.load %arg6[%c0_18, %c0_19, %c0_20] : memref<1x1x16xf32, #tpu.memory_space<vmem>>, vector<1x1x16xf32>
      tpu.vector_store %arg6[%c0_18, %c0_19, %c0_20], %22 {strides = array<i32>} : memref<1x1x16xf32, #tpu.memory_space<vmem>>, vector<1x1x16xf32>,
    } else {
    }
    %c0_10 = arith.constant 0 : index
    %c0_11 = arith.constant 0 : index
    %c0_12 = arith.constant 0 : index
    %14 = vector.load %arg6[%c0_10, %c0_11, %c0_12] : memref<1x1x16xf32, #tpu.memory_space<vmem>>, vector<1x1x16xf32>
    %15 = vector.shape_cast %14 : vector<1x1x16xf32> to vector<1x16xf32>
    %cst_13 = arith.constant dense<0.000000e+00> : vector<16xf32>
    %16 = vector.multi_reduction <add>, %6, %cst_13 [0] : vector<64x16xf32> to vector<16xf32>
    %17 = vector.shape_cast %16 : vector<16xf32> to vector<1x16xf32>
    %18 = arith.addf %15, %17 : vector<1x16xf32>
    %c0_14 = arith.constant 0 : index
    %c0_15 = arith.constant 0 : index
    %c0_16 = arith.constant 0 : index
    %19 = vector.load %arg6[%c0_14, %c0_15, %c0_16] : memref<1x1x16xf32, #tpu.memory_space<vmem>>, vector<1x1x16xf32>
    %20 = vector.shape_cast %19 : vector<1x1x16xf32> to vector<1x16xf32>
    %21 = vector.shape_cast %18 : vector<1x16xf32> to vector<1x1x16xf32>
    tpu.vector_store %arg6[%c0_14, %c0_15, %c0_16], %21 {strides = array<i32>} : memref<1x1x16xf32, #tpu.memory_space<vmem>>, vector<1x1x16xf32>,
    return
  }
  func.func @transform_0(%arg0: i32, %arg1: i32) -> (i32, i32, i32) {
    %c0_i32 = arith.constant 0 : i32
    %c0_i32_0 = arith.constant 0 : i32
    return %arg0, %arg1, %c0_i32 : i32, i32, i32
  }
  func.func @transform_1(%arg0: i32, %arg1: i32) -> (i32, i32) {
    %c0_i32 = arith.constant 0 : i32
    %c0_i32_0 = arith.constant 0 : i32
    %c0_i32_1 = arith.constant 0 : i32
    return %c0_i32, %c0_i32_0 : i32, i32
  }
  func.func @transform_2(%arg0: i32, %arg1: i32) -> (i32, i32) {
    %c0_i32 = arith.constant 0 : i32
    %c0_i32_0 = arith.constant 0 : i32
    %c0_i32_1 = arith.constant 0 : i32
    return %c0_i32, %c0_i32_0 : i32, i32
  }
  func.func @transform_3(%arg0: i32, %arg1: i32) -> (i32, i32, i32) {
    %c0_i32 = arith.constant 0 : i32
    %c0_i32_0 = arith.constant 0 : i32
    return %arg0, %arg1, %c0_i32 : i32, i32, i32
  }
  func.func @transform_4(%arg0: i32, %arg1: i32) -> (i32, i32, i32) {
    %c0_i32 = arith.constant 0 : i32
    %c0_i32_0 = arith.constant 0 : i32
    %c0_i32_1 = arith.constant 0 : i32
    return %arg0, %c0_i32, %c0_i32_0 : i32, i32, i32
  }
}

module attributes {stable_mosaic.version = 11 : i64} {
  func.func @_scale_add_relu_kernel(%arg0: i32, %arg1: i32, %arg2: memref<1x1x16xf32, #tpu.memory_space<vmem>>, %arg3: memref<1x64x16xbf16, #tpu.memory_space<vmem>>, %arg4: memref<1x64x16xbf16, #tpu.memory_space<vmem>>, %arg5: memref<1x64x16xbf16, #tpu.memory_space<vmem>>) attributes {dimension_semantics = [#tpu.dimension_semantics<parallel>, #tpu.dimension_semantics<parallel>], iteration_bounds = array<i64: 2, 1>, scalar_prefetch = 0 : i64, scratch_operands = 0 : i64, tpu.core_type = #tpu.core_type<tc>, window_params = [{transform_indices = @transform_0, window_bounds = array<i64: 1, 1, 16>}, {transform_indices = @transform_1, window_bounds = array<i64: 1, 64, 16>}, {transform_indices = @transform_2, window_bounds = array<i64: 1, 64, 16>}, {transform_indices = @transform_3, window_bounds = array<i64: 1, 64, 16>}]} {
    %c0 = arith.constant 0 : index
    %c0_0 = arith.constant 0 : index
    %c0_1 = arith.constant 0 : index
    %0 = vector.load %arg3[%c0, %c0_0, %c0_1] : memref<1x64x16xbf16, #tpu.memory_space<vmem>>, vector<1x64x16xbf16>
    %1 = vector.shape_cast %0 : vector<1x64x16xbf16> to vector<64x16xbf16>
    %2 = arith.extf %1 : vector<64x16xbf16> to vector<64x16xf32>
    %c0_2 = arith.constant 0 : index
    %c0_3 = arith.constant 0 : index
    %c0_4 = arith.constant 0 : index
    %3 = vector.load %arg2[%c0_2, %c0_3, %c0_4] : memref<1x1x16xf32, #tpu.memory_space<vmem>>, vector<1x1x16xf32>
    %4 = vector.shape_cast %3 : vector<1x1x16xf32> to vector<1x16xf32>
    %5 = vector.broadcast %4 : vector<1x16xf32> to vector<64x16xf32>
    %6 = arith.mulf %2, %5 : vector<64x16xf32>
    %c0_5 = arith.constant 0 : index
    %c0_6 = arith.constant 0 : index
    %c0_7 = arith.constant 0 : index
    %7 = vector.load %arg4[%c0_5, %c0_6, %c0_7] : memref<1x64x16xbf16, #tpu.memory_space<vmem>>, vector<1x64x16xbf16>
    %8 = vector.shape_cast %7 : vector<1x64x16xbf16> to vector<64x16xbf16>
    %9 = arith.extf %8 : vector<64x16xbf16> to vector<64x16xf32>
    %10 = arith.addf %6, %9 : vector<64x16xf32>
    %cst = arith.constant 0.000000e+00 : f32
    %11 = vector.broadcast %cst : f32 to vector<64x16xf32>
    %12 = arith.maximumf %10, %11 : vector<64x16xf32>
    %13 = arith.truncf %12 : vector<64x16xf32> to vector<64x16xbf16>
    %c0_8 = arith.constant 0 : index
    %c0_9 = arith.constant 0 : index
    %c0_10 = arith.constant 0 : index
    %14 = vector.load %arg5[%c0_8, %c0_9, %c0_10] : memref<1x64x16xbf16, #tpu.memory_space<vmem>>, vector<1x64x16xbf16>
    %15 = vector.shape_cast %14 : vector<1x64x16xbf16> to vector<64x16xbf16>
    %16 = vector.shape_cast %13 : vector<64x16xbf16> to vector<1x64x16xbf16>
    tpu.vector_store %arg5[%c0_8, %c0_9, %c0_10], %16 {strides = array<i32>} : memref<1x64x16xbf16, #tpu.memory_space<vmem>>, vector<1x64x16xbf16>,
    return
  }
  func.func @transform_0(%arg0: i32, %arg1: i32) -> (i32, i32, i32) {
    %c0_i32 = arith.constant 0 : i32
    %c0_i32_0 = arith.constant 0 : i32
    %c0_i32_1 = arith.constant 0 : i32
    return %arg0, %c0_i32, %c0_i32_0 : i32, i32, i32
  }
  func.func @transform_1(%arg0: i32, %arg1: i32) -> (i32, i32, i32) {
    %c0_i32 = arith.constant 0 : i32
    %c0_i32_0 = arith.constant 0 : i32
    return %arg0, %arg1, %c0_i32 : i32, i32, i32
  }
  func.func @transform_2(%arg0: i32, %arg1: i32) -> (i32, i32, i32) {
    %c0_i32 = arith.constant 0 : i32
    %c0_i32_0 = arith.constant 0 : i32
    return %arg0, %arg1, %c0_i32 : i32, i32, i32
  }
  func.func @transform_3(%arg0: i32, %arg1: i32) -> (i32, i32, i32) {
    %c0_i32 = arith.constant 0 : i32
    %c0_i32_0 = arith.constant 0 : i32
    return %arg0, %arg1, %c0_i32 : i32, i32, i32
  }
}

</mosaic_0001>

<llo_original>
// kernel: bottleneck_forward.6
$region0: #{bottleneck_forward.6}
  #allocation0 [shape = 'u32[]', space=smem, size = 0x4, offset = 0x4, fixed_abs, tag = 'smem constant byte address 0x4 - core index']
  #allocation1 [shape = 'u32[144,128]{1,0:T(1,128)}', space=vmem, size = 0x12000, scoped, tag = 'internal scratch']
  %s0 = inlined_call_operand.vmem [shape: bf16[128,8], index: 0, kind: input, shape index: {}]
  %s1 = inlined_call_operand.vmem [shape: bf16[8,16], index: 1, kind: input, shape index: {}]
  %s2 = inlined_call_operand.vmem [shape: f32[1,16], index: 2, kind: input, shape index: {}]
  %s3 = inlined_call_operand.vmem [shape: bf16[128,16], index: 3, kind: output, shape index: {}]
  %s4 = sld [smem:[#allocation0]]
  $region22: #{bottleneck_forward.6} parent=0
    _
  %s6 = ssub.s32 1, %s4
  %s7 = scalar_select 0, %s6, %s4
  // Predicated region
  $region2: #{bottleneck_forward.6} parent=0 // pred_check
    _
  $region3: #{bottleneck_forward.6} parent=0 // pred_check_branch
    %9 = sbr.rel (0) target = $region5
  $region4: #{bottleneck_forward.6} parent=0 // pred_region
    _
  $region5: #{bottleneck_forward.6} parent=0 // pred_fallthru
    _
  // Predicated region
  $region6: #{bottleneck_forward.6} parent=0 // pred_check
    _
  $region7: #{bottleneck_forward.6} parent=0 // pred_check_branch
    %11 = sbr.rel (0) target = $region9
  $region8: #{bottleneck_forward.6} parent=0 // pred_region
    _
  $region9: #{bottleneck_forward.6} parent=0 // pred_fallthru
    _
  // Predicated region
  $region10: #{bottleneck_forward.6} parent=0 // pred_check
    _
  $region11: #{bottleneck_forward.6} parent=0 // pred_check_branch
    %13 = sbr.rel (0) target = $region13
  $region12: #{bottleneck_forward.6} parent=0 // pred_region
    _
  $region13: #{bottleneck_forward.6} parent=0 // pred_fallthru
    _
  %v15 = vld [vmem:[%s0] sm:$0xf]
  %v16 = vld [vmem:[%s0 + $0x4] sm:$0xf]
  %v17 = vld [vmem:[%s0 + $0x8] sm:$0xf]
  %v18 = vld [vmem:[%s0 + $0xc] sm:$0xf]
  %v19 = vld [vmem:[%s0 + $0x10] sm:$0xf]
  %v20 = vld [vmem:[%s0 + $0x14] sm:$0xf]
  %v21 = vld [vmem:[%s0 + $0x18] sm:$0xf]
  %v22 = vld [vmem:[%s0 + $0x1c] sm:$0xf]
  %v23 = vld [vmem:[%s0 + $0x20] sm:$0xf]
  %v24 = vld [vmem:[%s0 + $0x24] sm:$0xf]
  %v25 = vld [vmem:[%s0 + $0x28] sm:$0xf]
  %v26 = vld [vmem:[%s0 + $0x2c] sm:$0xf]
  %v27 = vld [vmem:[%s0 + $0x30] sm:$0xf]
  %v28 = vld [vmem:[%s0 + $0x34] sm:$0xf]
  %v29 = vld [vmem:[%s0 + $0x38] sm:$0xf]
  %v30 = vld [vmem:[%s0 + $0x3c] sm:$0xf]
  %v31 = vld [vmem:[%s1] sm:$0xf]
  %v32 = vld [vmem:[%s2] sm:$0x1]
  %v34 = vlaneseq
  %v35 = vshrl.u32 %v34, 7
  %v36 = vsub.s32 0, %v35
  %v37 = vrot.slane %v32, %v36
  %v55 = vunpack.c.l.b16 %v15
  %v56 = vunpack.c.l.b16 %v16
  %v57 = vunpack.c.l.b16 %v17
  %v58 = vunpack.c.l.b16 %v18
  %v59 = vunpack.c.l.b16 %v19
  %v60 = vunpack.c.l.b16 %v20
  %v61 = vunpack.c.l.b16 %v21
  %v62 = vunpack.c.l.b16 %v22
  %v63 = vunpack.c.l.b16 %v23
  %v64 = vunpack.c.l.b16 %v24
  %v65 = vunpack.c.l.b16 %v25
  %v66 = vunpack.c.l.b16 %v26
  %v67 = vunpack.c.l.b16 %v27
  %v68 = vunpack.c.l.b16 %v28
  %v69 = vunpack.c.l.b16 %v29
  %v70 = vunpack.c.l.b16 %v30
  %v71 = vpack.c.b16 %v56, %v55
  %v72 = vpack.c.b16 %v58, %v57
  %v73 = vpack.c.b16 %v60, %v59
  %v74 = vpack.c.b16 %v62, %v61
  %v75 = vpack.c.b16 %v64, %v63
  %v76 = vpack.c.b16 %v66, %v65
  %v77 = vpack.c.b16 %v68, %v67
  %v78 = vpack.c.b16 %v70, %v69
  %vm79 = vcmask 64512
  %v81 = vsel %vm79, %v71, 0
  %v84 = vsel %vm79, %v72, 0
  %v87 = vsel %vm79, %v73, 0
  %v90 = vsel %vm79, %v74, 0
  %v93 = vsel %vm79, %v75, 0
  %v96 = vsel %vm79, %v76, 0
  %v99 = vsel %vm79, %v77, 0
  %v102 = vsel %vm79, %v78, 0
  %vm104 = vcmask 1043456
  %v106 = vsel %vm104, %v31, 0
  %108 = vmatprep.subr.bf16.mxu0 0
  %109 = vmatpush1.bf16.msra.mxu0 %v106
  %110 = vmatprep.subr.bf16.mxu0 0
  %111 = vmatpush1.bf16.msra.mxu0 0
  %112 = vmatprep.subr.bf16.mxu0 0
  %113 = vmatpush1.bf16.msra.mxu0 0
  %114 = vmatprep.subr.bf16.mxu0 0
  %115 = vmatpush1.bf16.msra.mxu0 0
  %116 = vmatprep.subr.bf16.mxu0 0
  %117 = vmatpush1.bf16.msra.mxu0 0
  %118 = vmatprep.subr.bf16.mxu0 0
  %119 = vmatpush1.bf16.msra.mxu0 0
  %120 = vmatprep.subr.bf16.mxu0 0
  %121 = vmatpush1.bf16.msra.mxu0 0
  %122 = vmatprep.subr.bf16.mxu0 0
  %123 = vmatpush1.bf16.msra.mxu0 0
  %124 = vmatprep.subr.bf16.mxu0 0
  %125 = vmatpush1.bf16.msra.mxu0 0
  %126 = vmatprep.subr.bf16.mxu0 0
  %127 = vmatpush1.bf16.msra.mxu0 0
  %128 = vmatprep.subr.bf16.mxu0 0
  %129 = vmatpush1.bf16.msra.mxu0 0
  %130 = vmatprep.subr.bf16.mxu0 0
  %131 = vmatpush1.bf16.msra.mxu0 0
  %132 = vmatprep.subr.bf16.mxu0 0
  %133 = vmatpush1.bf16.msra.mxu0 0
  %134 = vmatprep.subr.bf16.mxu0 0
  %135 = vmatpush1.bf16.msra.mxu0 0
  %136 = vmatprep.subr.bf16.mxu0 0
  %137 = vmatpush1.bf16.msra.mxu0 0
  %138 = vmatprep.subr.bf16.mxu0 0
  %139 = vmatpush1.bf16.msra.mxu0 0
  %140 = vmatprep.mubr.bf16.mxu0 0
  %141 = vmatmul.mubr.bf16.gmra.mrb[0].mxu0 %v81
  %v142 = vpop.f32.mrb[0].mxu0
  %v143 = vadd.f32 %v37, %v142
  %v144 = vpop.f32.mrb[0].mxu0
  %v145 = vpop.f32.mrb[0].mxu0
  %v146 = vadd.f32 %v37, %v145
  %v147 = vpop.f32.mrb[0].mxu0
  %148 = vmatprep.mubr.bf16.mxu0 0
  %149 = vmatmul.mubr.bf16.gmra.mrb[0].mxu0 %v84
  %v150 = vpop.f32.mrb[0].mxu0
  %v151 = vadd.f32 %v37, %v150
  %v152 = vpop.f32.mrb[0].mxu0
  %v153 = vpop.f32.mrb[0].mxu0
  %v154 = vadd.f32 %v37, %v153
  %v155 = vpop.f32.mrb[0].mxu0
  %156 = vmatprep.mubr.bf16.mxu0 0
  %157 = vmatmul.mubr.bf16.gmra.mrb[0].mxu0 %v87
  %v158 = vpop.f32.mrb[0].mxu0
  %v159 = vadd.f32 %v37, %v158
  %v160 = vpop.f32.mrb[0].mxu0
  %v161 = vpop.f32.mrb[0].mxu0
  %v162 = vadd.f32 %v37, %v161
  %v163 = vpop.f32.mrb[0].mxu0
  %164 = vmatprep.mubr.bf16.mxu0 0
  %165 = vmatmul.mubr.bf16.gmra.mrb[0].mxu0 %v90
  %v166 = vpop.f32.mrb[0].mxu0
  %v167 = vadd.f32 %v37, %v166
  %v168 = vpop.f32.mrb[0].mxu0
  %v169 = vpop.f32.mrb[0].mxu0
  %v170 = vadd.f32 %v37, %v169
  %v171 = vpop.f32.mrb[0].mxu0
  %172 = vmatprep.mubr.bf16.mxu0 0
  %173 = vmatmul.mubr.bf16.gmra.mrb[0].mxu0 %v93
  %v174 = vpop.f32.mrb[0].mxu0
  %v175 = vadd.f32 %v37, %v174
  %v176 = vpop.f32.mrb[0].mxu0
  %v177 = vpop.f32.mrb[0].mxu0
  %v178 = vadd.f32 %v37, %v177
  %v179 = vpop.f32.mrb[0].mxu0
  %180 = vmatprep.mubr.bf16.mxu0 0
  %181 = vmatmul.mubr.bf16.gmra.mrb[0].mxu0 %v96
  %v182 = vpop.f32.mrb[0].mxu0
  %v183 = vadd.f32 %v37, %v182
  %v184 = vpop.f32.mrb[0].mxu0
  %v185 = vpop.f32.mrb[0].mxu0
  %v186 = vadd.f32 %v37, %v185
  %v187 = vpop.f32.mrb[0].mxu0
  %188 = vmatprep.mubr.bf16.mxu0 0
  %189 = vmatmul.mubr.bf16.gmra.mrb[0].mxu0 %v99
  %v190 = vpop.f32.mrb[0].mxu0
  %v191 = vadd.f32 %v37, %v190
  %v192 = vpop.f32.mrb[0].mxu0
  %v193 = vpop.f32.mrb[0].mxu0
  %v194 = vadd.f32 %v37, %v193
  %v195 = vpop.f32.mrb[0].mxu0
  %196 = vmatprep.mubr.bf16.mxu0 0
  %197 = vmatmul.mubr.bf16.gmra.mrb[0].mxu0 %v102
  %v198 = vpop.f32.mrb[0].mxu0
  %v199 = vadd.f32 %v37, %v198
  %v200 = vpop.f32.mrb[0].mxu0
  %v201 = vpop.f32.mrb[0].mxu0
  %v202 = vadd.f32 %v37, %v201
  %v203 = vpop.f32.mrb[0].mxu0
  %204 = vdwg.mxu0
  %v205 = vpack.c.bf16 %v146, %v143
  %v206 = vpack.c.bf16 %v154, %v151
  %v207 = vpack.c.bf16 %v162, %v159
  %v208 = vpack.c.bf16 %v170, %v167
  %v209 = vpack.c.bf16 %v178, %v175
  %v210 = vpack.c.bf16 %v186, %v183
  %v211 = vpack.c.bf16 %v194, %v191
  %v212 = vpack.c.bf16 %v202, %v199
  %v221 = vunpack.c.l.b16 %v205
  %v222 = vunpack.c.h.b16 %v205
  %v223 = vunpack.c.l.b16 %v206
  %v224 = vunpack.c.h.b16 %v206
  %v225 = vunpack.c.l.b16 %v207
  %v226 = vunpack.c.h.b16 %v207
  %v227 = vunpack.c.l.b16 %v208
  %v228 = vunpack.c.h.b16 %v208
  %v229 = vunpack.c.l.b16 %v209
  %v230 = vunpack.c.h.b16 %v209
  %v231 = vunpack.c.l.b16 %v210
  %v232 = vunpack.c.h.b16 %v210
  %v233 = vunpack.c.l.b16 %v211
  %v234 = vunpack.c.h.b16 %v211
  %v235 = vunpack.c.l.b16 %v212
  %v236 = vunpack.c.h.b16 %v212
  %v237 = vpack.c.b16 %v221, %v221
  %v238 = vpack.c.b16 %v222, %v222
  %v239 = vpack.c.b16 %v223, %v223
  %v240 = vpack.c.b16 %v224, %v224
  %v241 = vpack.c.b16 %v225, %v225
  %v242 = vpack.c.b16 %v226, %v226
  %v243 = vpack.c.b16 %v227, %v227
  %v244 = vpack.c.b16 %v228, %v228
  %v245 = vpack.c.b16 %v229, %v229
  %v246 = vpack.c.b16 %v230, %v230
  %v247 = vpack.c.b16 %v231, %v231
  %v248 = vpack.c.b16 %v232, %v232
  %v249 = vpack.c.b16 %v233, %v233
  %v250 = vpack.c.b16 %v234, %v234
  %v251 = vpack.c.b16 %v235, %v235
  %v252 = vpack.c.b16 %v236, %v236
  %vm269 = vcmask 125952
  %270 = vst.msk [vmem:[%s3] sm:$0xf] %vm269, %v237
  %271 = vst.msk [vmem:[%s3 + $0x4] sm:$0xf] %vm269, %v238
  %272 = vst.msk [vmem:[%s3 + $0x8] sm:$0xf] %vm269, %v239
  %273 = vst.msk [vmem:[%s3 + $0xc] sm:$0xf] %vm269, %v240
  %274 = vst.msk [vmem:[%s3 + $0x10] sm:$0xf] %vm269, %v241
  %275 = vst.msk [vmem:[%s3 + $0x14] sm:$0xf] %vm269, %v242
  %276 = vst.msk [vmem:[%s3 + $0x18] sm:$0xf] %vm269, %v243
  %277 = vst.msk [vmem:[%s3 + $0x1c] sm:$0xf] %vm269, %v244
  %278 = vst.msk [vmem:[%s3 + $0x20] sm:$0xf] %vm269, %v245
  %279 = vst.msk [vmem:[%s3 + $0x24] sm:$0xf] %vm269, %v246
  %280 = vst.msk [vmem:[%s3 + $0x28] sm:$0xf] %vm269, %v247
  %281 = vst.msk [vmem:[%s3 + $0x2c] sm:$0xf] %vm269, %v248
  %282 = vst.msk [vmem:[%s3 + $0x30] sm:$0xf] %vm269, %v249
  %283 = vst.msk [vmem:[%s3 + $0x34] sm:$0xf] %vm269, %v250
  %284 = vst.msk [vmem:[%s3 + $0x38] sm:$0xf] %vm269, %v251
  %285 = vst.msk [vmem:[%s3 + $0x3c] sm:$0xf] %vm269, %v252
  // Predicated region
  $region14: #{bottleneck_forward.6} parent=0 // pred_check
    _
  $region15: #{bottleneck_forward.6} parent=0 // pred_check_branch
    %287 = sbr.rel (0) target = $region17
  $region16: #{bottleneck_forward.6} parent=0 // pred_region
    _
  $region17: #{bottleneck_forward.6} parent=0 // pred_fallthru
    _
  // Predicated region
  $region18: #{bottleneck_forward.6} parent=0 // pred_check
    _
  $region19: #{bottleneck_forward.6} parent=0 // pred_check_branch
    %289 = sbr.rel (0) target = $region21
  $region20: #{bottleneck_forward.6} parent=0 // pred_region
    _
  $region21: #{bottleneck_forward.6} parent=0 // pred_fallthru
    _

// kernel: bottleneck_forward.7
$region0: #{bottleneck_forward.7}
  #allocation0 [shape = 'u32[]', space=smem, size = 0x4, offset = 0x4, fixed_abs, tag = 'smem constant byte address 0x4 - core index']
  #allocation1 [shape = 'u32[144,128]{1,0:T(1,128)}', space=vmem, size = 0x12000, scoped, tag = 'internal scratch']
  %s0 = inlined_call_operand.vmem [shape: bf16[512,8], index: 0, kind: input, shape index: {}]
  %s1 = inlined_call_operand.vmem [shape: bf16[8,4], index: 1, kind: input, shape index: {}]
  %s2 = inlined_call_operand.vmem [shape: f32[1,4], index: 2, kind: input, shape index: {}]
  %s3 = inlined_call_operand.vmem [shape: bf16[512,4], index: 3, kind: output, shape index: {}]
  %s4 = sld [smem:[#allocation0]]
  $region22: #{bottleneck_forward.7} parent=0
    _
  %s6 = ssub.s32 1, %s4
  %s7 = scalar_select 0, %s6, %s4
  // Predicated region
  $region2: #{bottleneck_forward.7} parent=0 // pred_check
    _
  $region3: #{bottleneck_forward.7} parent=0 // pred_check_branch
    %9 = sbr.rel (0) target = $region5
  $region4: #{bottleneck_forward.7} parent=0 // pred_region
    _
  $region5: #{bottleneck_forward.7} parent=0 // pred_fallthru
    _
  // Predicated region
  $region6: #{bottleneck_forward.7} parent=0 // pred_check
    _
  $region7: #{bottleneck_forward.7} parent=0 // pred_check_branch
    %11 = sbr.rel (0) target = $region9
  $region8: #{bottleneck_forward.7} parent=0 // pred_region
    _
  $region9: #{bottleneck_forward.7} parent=0 // pred_fallthru
    _
  // Predicated region
  $region10: #{bottleneck_forward.7} parent=0 // pred_check
    _
  $region11: #{bottleneck_forward.7} parent=0 // pred_check_branch
    %13 = sbr.rel (0) target = $region13
  $region12: #{bottleneck_forward.7} parent=0 // pred_region
    _
  $region13: #{bottleneck_forward.7} parent=0 // pred_fallthru
    _
  %v15 = vld [vmem:[%s0] sm:$0xf]
  %v16 = vld [vmem:[%s0 + $0x4] sm:$0xf]
  %v17 = vld [vmem:[%s0 + $0x8] sm:$0xf]
  %v18 = vld [vmem:[%s0 + $0xc] sm:$0xf]
  %v19 = vld [vmem:[%s0 + $0x10] sm:$0xf]
  %v20 = vld [vmem:[%s0 + $0x14] sm:$0xf]
  %v21 = vld [vmem:[%s0 + $0x18] sm:$0xf]
  %v22 = vld [vmem:[%s0 + $0x1c] sm:$0xf]
  %v23 = vld [vmem:[%s0 + $0x20] sm:$0xf]
  %v24 = vld [vmem:[%s0 + $0x24] sm:$0xf]
  %v25 = vld [vmem:[%s0 + $0x28] sm:$0xf]
  %v26 = vld [vmem:[%s0 + $0x2c] sm:$0xf]
  %v27 = vld [vmem:[%s0 + $0x30] sm:$0xf]
  %v28 = vld [vmem:[%s0 + $0x34] sm:$0xf]
  %v29 = vld [vmem:[%s0 + $0x38] sm:$0xf]
  %v30 = vld [vmem:[%s0 + $0x3c] sm:$0xf]
  %v31 = vld [vmem:[%s0 + $0x40] sm:$0xf]
  %v32 = vld [vmem:[%s0 + $0x44] sm:$0xf]
  %v33 = vld [vmem:[%s0 + $0x48] sm:$0xf]
  %v34 = vld [vmem:[%s0 + $0x4c] sm:$0xf]
  %v35 = vld [vmem:[%s0 + $0x50] sm:$0xf]
  %v36 = vld [vmem:[%s0 + $0x54] sm:$0xf]
  %v37 = vld [vmem:[%s0 + $0x58] sm:$0xf]
  %v38 = vld [vmem:[%s0 + $0x5c] sm:$0xf]
  %v39 = vld [vmem:[%s0 + $0x60] sm:$0xf]
  %v40 = vld [vmem:[%s0 + $0x64] sm:$0xf]
  %v41 = vld [vmem:[%s0 + $0x68] sm:$0xf]
  %v42 = vld [vmem:[%s0 + $0x6c] sm:$0xf]
  %v43 = vld [vmem:[%s0 + $0x70] sm:$0xf]
  %v44 = vld [vmem:[%s0 + $0x74] sm:$0xf]
  %v45 = vld [vmem:[%s0 + $0x78] sm:$0xf]
  %v46 = vld [vmem:[%s0 + $0x7c] sm:$0xf]
  %v47 = vld [vmem:[%s0 + $0x80] sm:$0xf]
  %v48 = vld [vmem:[%s0 + $0x84] sm:$0xf]
  %v49 = vld [vmem:[%s0 + $0x88] sm:$0xf]
  %v50 = vld [vmem:[%s0 + $0x8c] sm:$0xf]
  %v51 = vld [vmem:[%s0 + $0x90] sm:$0xf]
  %v52 = vld [vmem:[%s0 + $0x94] sm:$0xf]
  %v53 = vld [vmem:[%s0 + $0x98] sm:$0xf]
  %v54 = vld [vmem:[%s0 + $0x9c] sm:$0xf]
  %v55 = vld [vmem:[%s0 + $0xa0] sm:$0xf]
  %v56 = vld [vmem:[%s0 + $0xa4] sm:$0xf]
  %v57 = vld [vmem:[%s0 + $0xa8] sm:$0xf]
  %v58 = vld [vmem:[%s0 + $0xac] sm:$0xf]
  %v59 = vld [vmem:[%s0 + $0xb0] sm:$0xf]
  %v60 = vld [vmem:[%s0 + $0xb4] sm:$0xf]
  %v61 = vld [vmem:[%s0 + $0xb8] sm:$0xf]
  %v62 = vld [vmem:[%s0 + $0xbc] sm:$0xf]
  %v63 = vld [vmem:[%s0 + $0xc0] sm:$0xf]
  %v64 = vld [vmem:[%s0 + $0xc4] sm:$0xf]
  %v65 = vld [vmem:[%s0 + $0xc8] sm:$0xf]
  %v66 = vld [vmem:[%s0 + $0xcc] sm:$0xf]
  %v67 = vld [vmem:[%s0 + $0xd0] sm:$0xf]
  %v68 = vld [vmem:[%s0 + $0xd4] sm:$0xf]
  %v69 = vld [vmem:[%s0 + $0xd8] sm:$0xf]
  %v70 = vld [vmem:[%s0 + $0xdc] sm:$0xf]
  %v71 = vld [vmem:[%s0 + $0xe0] sm:$0xf]
  %v72 = vld [vmem:[%s0 + $0xe4] sm:$0xf]
  %v73 = vld [vmem:[%s0 + $0xe8] sm:$0xf]
  %v74 = vld [vmem:[%s0 + $0xec] sm:$0xf]
  %v75 = vld [vmem:[%s0 + $0xf0] sm:$0xf]
  %v76 = vld [vmem:[%s0 + $0xf4] sm:$0xf]
  %v77 = vld [vmem:[%s0 + $0xf8] sm:$0xf]
  %v78 = vld [vmem:[%s0 + $0xfc] sm:$0xf]
  %v79 = vld [vmem:[%s1] sm:$0xf]
  %v80 = vld [vmem:[%s2] sm:$0x1]
  %v82 = vlaneseq
  %v83 = vshrl.u32 %v82, 7
  %v84 = vsub.s32 0, %v83
  %v85 = vrot.slane %v80, %v84
  %v151 = vunpack.c.l.b16 %v15
  %v152 = vunpack.c.l.b16 %v16
  %v153 = vunpack.c.l.b16 %v17
  %v154 = vunpack.c.l.b16 %v18
  %v155 = vunpack.c.l.b16 %v19
  %v156 = vunpack.c.l.b16 %v20
  %v157 = vunpack.c.l.b16 %v21
  %v158 = vunpack.c.l.b16 %v22
  %v159 = vunpack.c.l.b16 %v23
  %v160 = vunpack.c.l.b16 %v24
  %v161 = vunpack.c.l.b16 %v25
  %v162 = vunpack.c.l.b16 %v26
  %v163 = vunpack.c.l.b16 %v27
  %v164 = vunpack.c.l.b16 %v28
  %v165 = vunpack.c.l.b16 %v29
  %v166 = vunpack.c.l.b16 %v30
  %v167 = vunpack.c.l.b16 %v31
  %v168 = vunpack.c.l.b16 %v32
  %v169 = vunpack.c.l.b16 %v33
  %v170 = vunpack.c.l.b16 %v34
  %v171 = vunpack.c.l.b16 %v35
  %v172 = vunpack.c.l.b16 %v36
  %v173 = vunpack.c.l.b16 %v37
  %v174 = vunpack.c.l.b16 %v38
  %v175 = vunpack.c.l.b16 %v39
  %v176 = vunpack.c.l.b16 %v40
  %v177 = vunpack.c.l.b16 %v41
  %v178 = vunpack.c.l.b16 %v42
  %v179 = vunpack.c.l.b16 %v43
  %v180 = vunpack.c.l.b16 %v44
  %v181 = vunpack.c.l.b16 %v45
  %v182 = vunpack.c.l.b16 %v46
  %v183 = vunpack.c.l.b16 %v47
  %v184 = vunpack.c.l.b16 %v48
  %v185 = vunpack.c.l.b16 %v49
  %v186 = vunpack.c.l.b16 %v50
  %v187 = vunpack.c.l.b16 %v51
  %v188 = vunpack.c.l.b16 %v52
  %v189 = vunpack.c.l.b16 %v53
  %v190 = vunpack.c.l.b16 %v54
  %v191 = vunpack.c.l.b16 %v55
  %v192 = vunpack.c.l.b16 %v56
  %v193 = vunpack.c.l.b16 %v57
  %v194 = vunpack.c.l.b16 %v58
  %v195 = vunpack.c.l.b16 %v59
  %v196 = vunpack.c.l.b16 %v60
  %v197 = vunpack.c.l.b16 %v61
  %v198 = vunpack.c.l.b16 %v62
  %v199 = vunpack.c.l.b16 %v63
  %v200 = vunpack.c.l.b16 %v64
  %v201 = vunpack.c.l.b16 %v65
  %v202 = vunpack.c.l.b16 %v66
  %v203 = vunpack.c.l.b16 %v67
  %v204 = vunpack.c.l.b16 %v68
  %v205 = vunpack.c.l.b16 %v69
  %v206 = vunpack.c.l.b16 %v70
  %v207 = vunpack.c.l.b16 %v71
  %v208 = vunpack.c.l.b16 %v72
  %v209 = vunpack.c.l.b16 %v73
  %v210 = vunpack.c.l.b16 %v74
  %v211 = vunpack.c.l.b16 %v75
  %v212 = vunpack.c.l.b16 %v76
  %v213 = vunpack.c.l.b16 %v77
  %v214 = vunpack.c.l.b16 %v78
  %v215 = vpack.c.b16 %v152, %v151
  %v216 = vpack.c.b16 %v154, %v153
  %v217 = vpack.c.b16 %v156, %v155
  %v218 = vpack.c.b16 %v158, %v157
  %v219 = vpack.c.b16 %v160, %v159
  %v220 = vpack.c.b16 %v162, %v161
  %v221 = vpack.c.b16 %v164, %v163
  %v222 = vpack.c.b16 %v166, %v165
  %v223 = vpack.c.b16 %v168, %v167
  %v224 = vpack.c.b16 %v170, %v169
  %v225 = vpack.c.b16 %v172, %v171
  %v226 = vpack.c.b16 %v174, %v173
  %v227 = vpack.c.b16 %v176, %v175
  %v228 = vpack.c.b16 %v178, %v177
  %v229 = vpack.c.b16 %v180, %v179
  %v230 = vpack.c.b16 %v182, %v181
  %v231 = vpack.c.b16 %v184, %v183
  %v232 = vpack.c.b16 %v186, %v185
  %v233 = vpack.c.b16 %v188, %v187
  %v234 = vpack.c.b16 %v190, %v189
  %v235 = vpack.c.b16 %v192, %v191
  %v236 = vpack.c.b16 %v194, %v193
  %v237 = vpack.c.b16 %v196, %v195
  %v238 = vpack.c.b16 %v198, %v197
  %v239 = vpack.c.b16 %v200, %v199
  %v240 = vpack.c.b16 %v202, %v201
  %v241 = vpack.c.b16 %v204, %v203
  %v242 = vpack.c.b16 %v206, %v205
  %v243 = vpack.c.b16 %v208, %v207
  %v244 = vpack.c.b16 %v210, %v209
  %v245 = vpack.c.b16 %v212, %v211
  %v246 = vpack.c.b16 %v214, %v213
  %vm247 = vcmask 64512
  %v249 = vsel %vm247, %v215, 0
  %v252 = vsel %vm247, %v216, 0
  %v255 = vsel %vm247, %v217, 0
  %v258 = vsel %vm247, %v218, 0
  %v261 = vsel %vm247, %v219, 0
  %v264 = vsel %vm247, %v220, 0
  %v267 = vsel %vm247, %v221, 0
  %v270 = vsel %vm247, %v222, 0
  %v273 = vsel %vm247, %v223, 0
  %v276 = vsel %vm247, %v224, 0
  %v279 = vsel %vm247, %v225, 0
  %v282 = vsel %vm247, %v226, 0
  %v285 = vsel %vm247, %v227, 0
  %v288 = vsel %vm247, %v228, 0
  %v291 = vsel %vm247, %v229, 0
  %v294 = vsel %vm247, %v230, 0
  %v297 = vsel %vm247, %v231, 0
  %v300 = vsel %vm247, %v232, 0
  %v303 = vsel %vm247, %v233, 0
  %v306 = vsel %vm247, %v234, 0
  %v309 = vsel %vm247, %v235, 0
  %v312 = vsel %vm247, %v236, 0
  %v315 = vsel %vm247, %v237, 0
  %v318 = vsel %vm247, %v238, 0
  %v321 = vsel %vm247, %v239, 0
  %v324 = vsel %vm247, %v240, 0
  %v327 = vsel %vm247, %v241, 0
  %v330 = vsel %vm247, %v242, 0
  %v333 = vsel %vm247, %v243, 0
  %v336 = vsel %vm247, %v244, 0
  %v339 = vsel %vm247, %v245, 0
  %v342 = vsel %vm247, %v246, 0
  %vm344 = vcmask 1043456
  %v346 = vsel %vm344, %v79, 0
  %348 = vmatprep.subr.bf16.mxu0 0
  %349 = vmatpush1.bf16.msra.mxu0 %v346
  %350 = vmatprep.subr.bf16.mxu0 0
  %351 = vmatpush1.bf16.msra.mxu0 0
  %352 = vmatprep.subr.bf16.mxu0 0
  %353 = vmatpush1.bf16.msra.mxu0 0
  %354 = vmatprep.subr.bf16.mxu0 0
  %355 = vmatpush1.bf16.msra.mxu0 0
  %356 = vmatprep.subr.bf16.mxu0 0
  %357 = vmatpush1.bf16.msra.mxu0 0
  %358 = vmatprep.subr.bf16.mxu0 0
  %359 = vmatpush1.bf16.msra.mxu0 0
  %360 = vmatprep.subr.bf16.mxu0 0
  %361 = vmatpush1.bf16.msra.mxu0 0
  %362 = vmatprep.subr.bf16.mxu0 0
  %363 = vmatpush1.bf16.msra.mxu0 0
  %364 = vmatprep.subr.bf16.mxu0 0
  %365 = vmatpush1.bf16.msra.mxu0 0
  %366 = vmatprep.subr.bf16.mxu0 0
  %367 = vmatpush1.bf16.msra.mxu0 0
  %368 = vmatprep.subr.bf16.mxu0 0
  %369 = vmatpush1.bf16.msra.mxu0 0
  %370 = vmatprep.subr.bf16.mxu0 0
  %371 = vmatpush1.bf16.msra.mxu0 0
  %372 = vmatprep.subr.bf16.mxu0 0
  %373 = vmatpush1.bf16.msra.mxu0 0
  %374 = vmatprep.subr.bf16.mxu0 0
  %375 = vmatpush1.bf16.msra.mxu0 0
  %376 = vmatprep.subr.bf16.mxu0 0
  %377 = vmatpush1.bf16.msra.mxu0 0
  %378 = vmatprep.subr.bf16.mxu0 0
  %379 = vmatpush1.bf16.msra.mxu0 0
  %380 = vmatprep.mubr.bf16.mxu0 0
  %381 = vmatmul.mubr.bf16.gmra.mrb[0].mxu0 %v249
  %v382 = vpop.f32.mrb[0].mxu0
  %v383 = vadd.f32 %v85, %v382
  %v384 = vpop.f32.mrb[0].mxu0
  %v385 = vpop.f32.mrb[0].mxu0
  %v386 = vadd.f32 %v85, %v385
  %v387 = vpop.f32.mrb[0].mxu0
  %388 = vmatprep.mubr.bf16.mxu0 0
  %389 = vmatmul.mubr.bf16.gmra.mrb[0].mxu0 %v252
  %v390 = vpop.f32.mrb[0].mxu0
  %v391 = vadd.f32 %v85, %v390
  %v392 = vpop.f32.mrb[0].mxu0
  %v393 = vpop.f32.mrb[0].mxu0
  %v394 = vadd.f32 %v85, %v393
  %v395 = vpop.f32.mrb[0].mxu0
  %396 = vmatprep.mubr.bf16.mxu0 0
  %397 = vmatmul.mubr.bf16.gmra.mrb[0].mxu0 %v255
  %v398 = vpop.f32.mrb[0].mxu0
  %v399 = vadd.f32 %v85, %v398
  %v400 = vpop.f32.mrb[0].mxu0
  %v401 = vpop.f32.mrb[0].mxu0
  %v402 = vadd.f32 %v85, %v401
  %v403 = vpop.f32.mrb[0].mxu0
  %404 = vmatprep.mubr.bf16.mxu0 0
  %405 = vmatmul.mubr.bf16.gmra.mrb[0].mxu0 %v258
  %v406 = vpop.f32.mrb[0].mxu0
  %v407 = vadd.f32 %v85, %v406
  %v408 = vpop.f32.mrb[0].mxu0
  %v409 = vpop.f32.mrb[0].mxu0
  %v410 = vadd.f32 %v85, %v409
  %v411 = vpop.f32.mrb[0].mxu0
  %412 = vmatprep.mubr.bf16.mxu0 0
  %413 = vmatmul.mubr.bf16.gmra.mrb[0].mxu0 %v261
  %v414 = vpop.f32.mrb[0].mxu0
  %v415 = vadd.f32 %v85, %v414
  %v416 = vpop.f32.mrb[0].mxu0
  %v417 = vpop.f32.mrb[0].mxu0
  %v418 = vadd.f32 %v85, %v417
  %v419 = vpop.f32.mrb[0].mxu0
  %420 = vmatprep.mubr.bf16.mxu0 0
  %421 = vmatmul.mubr.bf16.gmra.mrb[0].mxu0 %v264
  %v422 = vpop.f32.mrb[0].mxu0
  %v423 = vadd.f32 %v85, %v422
  %v424 = vpop.f32.mrb[0].mxu0
  %v425 = vpop.f32.mrb[0].mxu0
  %v426 = vadd.f32 %v85, %v425
  %v427 = vpop.f32.mrb[0].mxu0
  %428 = vmatprep.mubr.bf16.mxu0 0
  %429 = vmatmul.mubr.bf16.gmra.mrb[0].mxu0 %v267
  %v430 = vpop.f32.mrb[0].mxu0
  %v431 = vadd.f32 %v85, %v430
  %v432 = vpop.f32.mrb[0].mxu0
  %v433 = vpop.f32.mrb[0].mxu0
  %v434 = vadd.f32 %v85, %v433
  %v435 = vpop.f32.mrb[0].mxu0
  %436 = vmatprep.mubr.bf16.mxu0 0
  %437 = vmatmul.mubr.bf16.gmra.mrb[0].mxu0 %v270
  %v438 = vpop.f32.mrb[0].mxu0
  %v439 = vadd.f32 %v85, %v438
  %v440 = vpop.f32.mrb[0].mxu0
  %v441 = vpop.f32.mrb[0].mxu0
  %v442 = vadd.f32 %v85, %v441
  %v443 = vpop.f32.mrb[0].mxu0
  %444 = vmatprep.mubr.bf16.mxu0 0
  %445 = vmatmul.mubr.bf16.gmra.mrb[0].mxu0 %v273
  %v446 = vpop.f32.mrb[0].mxu0
  %v447 = vadd.f32 %v85, %v446
  %v448 = vpop.f32.mrb[0].mxu0
  %v449 = vpop.f32.mrb[0].mxu0
  %v450 = vadd.f32 %v85, %v449
  %v451 = vpop.f32.mrb[0].mxu0
  %452 = vmatprep.mubr.bf16.mxu0 0
  %453 = vmatmul.mubr.bf16.gmra.mrb[0].mxu0 %v276
  %v454 = vpop.f32.mrb[0].mxu0
  %v455 = vadd.f32 %v85, %v454
  %v456 = vpop.f32.mrb[0].mxu0
  %v457 = vpop.f32.mrb[0].mxu0
  %v458 = vadd.f32 %v85, %v457
  %v459 = vpop.f32.mrb[0].mxu0
  %460 = vmatprep.mubr.bf16.mxu0 0
  %461 = vmatmul.mubr.bf16.gmra.mrb[0].mxu0 %v279
  %v462 = vpop.f32.mrb[0].mxu0
  %v463 = vadd.f32 %v85, %v462
  %v464 = vpop.f32.mrb[0].mxu0
  %v465 = vpop.f32.mrb[0].mxu0
  %v466 = vadd.f32 %v85, %v465
  %v467 = vpop.f32.mrb[0].mxu0
  %468 = vmatprep.mubr.bf16.mxu0 0
  %469 = vmatmul.mubr.bf16.gmra.mrb[0].mxu0 %v282
  %v470 = vpop.f32.mrb[0].mxu0
  %v471 = vadd.f32 %v85, %v470
  %v472 = vpop.f32.mrb[0].mxu0
  %v473 = vpop.f32.mrb[0].mxu0
  %v474 = vadd.f32 %v85, %v473
  %v475 = vpop.f32.mrb[0].mxu0
  %476 = vmatprep.mubr.bf16.mxu0 0
  %477 = vmatmul.mubr.bf16.gmra.mrb[0].mxu0 %v285
  %v478 = vpop.f32.mrb[0].mxu0
  %v479 = vadd.f32 %v85, %v478
  %v480 = vpop.f32.mrb[0].mxu0
  %v481 = vpop.f32.mrb[0].mxu0
  %v482 = vadd.f32 %v85, %v481
  %v483 = vpop.f32.mrb[0].mxu0
  %484 = vmatprep.mubr.bf16.mxu0 0
  %485 = vmatmul.mubr.bf16.gmra.mrb[0].mxu0 %v288
  %v486 = vpop.f32.mrb[0].mxu0
  %v487 = vadd.f32 %v85, %v486
  %v488 = vpop.f32.mrb[0].mxu0
  %v489 = vpop.f32.mrb[0].mxu0
  %v490 = vadd.f32 %v85, %v489
  %v491 = vpop.f32.mrb[0].mxu0
  %492 = vmatprep.mubr.bf16.mxu0 0
  %493 = vmatmul.mubr.bf16.gmra.mrb[0].mxu0 %v291
  %v494 = vpop.f32.mrb[0].mxu0
  %v495 = vadd.f32 %v85, %v494
  %v496 = vpop.f32.mrb[0].mxu0
  %v497 = vpop.f32.mrb[0].mxu0
  %v498 = vadd.f32 %v85, %v497
  %v499 = vpop.f32.mrb[0].mxu0
  %500 = vmatprep.mubr.bf16.mxu0 0
  %501 = vmatmul.mubr.bf16.gmra.mrb[0].mxu0 %v294
  %v502 = vpop.f32.mrb[0].mxu0
  %v503 = vadd.f32 %v85, %v502
  %v504 = vpop.f32.mrb[0].mxu0
  %v505 = vpop.f32.mrb[0].mxu0
  %v506 = vadd.f32 %v85, %v505
  %v507 = vpop.f32.mrb[0].mxu0
  %508 = vmatprep.mubr.bf16.mxu0 0
  %509 = vmatmul.mubr.bf16.gmra.mrb[0].mxu0 %v297
  %v510 = vpop.f32.mrb[0].mxu0
  %v511 = vadd.f32 %v85, %v510
  %v512 = vpop.f32.mrb[0].mxu0
  %v513 = vpop.f32.mrb[0].mxu0
  %v514 = vadd.f32 %v85, %v513
  %v515 = vpop.f32.mrb[0].mxu0
  %516 = vmatprep.mubr.bf16.mxu0 0
  %517 = vmatmul.mubr.bf16.gmra.mrb[0].mxu0 %v300
  %v518 = vpop.f32.mrb[0].mxu0
  %v519 = vadd.f32 %v85, %v518
  %v520 = vpop.f32.mrb[0].mxu0
  %v521 = vpop.f32.mrb[0].mxu0
  %v522 = vadd.f32 %v85, %v521
  %v523 = vpop.f32.mrb[0].mxu0
  %524 = vmatprep.mubr.bf16.mxu0 0
  %525 = vmatmul.mubr.bf16.gmra.mrb[0].mxu0 %v303
  %v526 = vpop.f32.mrb[0].mxu0
  %v527 = vadd.f32 %v85, %v526
  %v528 = vpop.f32.mrb[0].mxu0
  %v529 = vpop.f32.mrb[0].mxu0
  %v530 = vadd.f32 %v85, %v529
  %v531 = vpop.f32.mrb[0].mxu0
  %532 = vmatprep.mubr.bf16.mxu0 0
  %533 = vmatmul.mubr.bf16.gmra.mrb[0].mxu0 %v306
  %v534 = vpop.f32.mrb[0].mxu0
  %v535 = vadd.f32 %v85, %v534
  %v536 = vpop.f32.mrb[0].mxu0
  %v537 = vpop.f32.mrb[0].mxu0
  %v538 = vadd.f32 %v85, %v537
  %v539 = vpop.f32.mrb[0].mxu0
  %540 = vmatprep.mubr.bf16.mxu0 0
  %541 = vmatmul.mubr.bf16.gmra.mrb[0].mxu0 %v309
  %v542 = vpop.f32.mrb[0].mxu0
  %v543 = vadd.f32 %v85, %v542
  %v544 = vpop.f32.mrb[0].mxu0
  %v545 = vpop.f32.mrb[0].mxu0
  %v546 = vadd.f32 %v85, %v545
  %v547 = vpop.f32.mrb[0].mxu0
  %548 = vmatprep.mubr.bf16.mxu0 0
  %549 = vmatmul.mubr.bf16.gmra.mrb[0].mxu0 %v312
  %v550 = vpop.f32.mrb[0].mxu0
  %v551 = vadd.f32 %v85, %v550
  %v552 = vpop.f32.mrb[0].mxu0
  %v553 = vpop.f32.mrb[0].mxu0
  %v554 = vadd.f32 %v85, %v553
  %v555 = vpop.f32.mrb[0].mxu0
  %556 = vmatprep.mubr.bf16.mxu0 0
  %557 = vmatmul.mubr.bf16.gmra.mrb[0].mxu0 %v315
  %v558 = vpop.f32.mrb[0].mxu0
  %v559 = vadd.f32 %v85, %v558
  %v560 = vpop.f32.mrb[0].mxu0
  %v561 = vpop.f32.mrb[0].mxu0
  %v562 = vadd.f32 %v85, %v561
  %v563 = vpop.f32.mrb[0].mxu0
  %564 = vmatprep.mubr.bf16.mxu0 0
  %565 = vmatmul.mubr.bf16.gmra.mrb[0].mxu0 %v318
  %v566 = vpop.f32.mrb[0].mxu0
  %v567 = vadd.f32 %v85, %v566
  %v568 = vpop.f32.mrb[0].mxu0
  %v569 = vpop.f32.mrb[0].mxu0
  %v570 = vadd.f32 %v85, %v569
  %v571 = vpop.f32.mrb[0].mxu0
  %572 = vmatprep.mubr.bf16.mxu0 0
  %573 = vmatmul.mubr.bf16.gmra.mrb[0].mxu0 %v321
  %v574 = vpop.f32.mrb[0].mxu0
  %v575 = vadd.f32 %v85, %v574
  %v576 = vpop.f32.mrb[0].mxu0
  %v577 = vpop.f32.mrb[0].mxu0
  %v578 = vadd.f32 %v85, %v577
  %v579 = vpop.f32.mrb[0].mxu0
  %580 = vmatprep.mubr.bf16.mxu0 0
  %581 = vmatmul.mubr.bf16.gmra.mrb[0].mxu0 %v324
  %v582 = vpop.f32.mrb[0].mxu0
  %v583 = vadd.f32 %v85, %v582
  %v584 = vpop.f32.mrb[0].mxu0
  %v585 = vpop.f32.mrb[0].mxu0
  %v586 = vadd.f32 %v85, %v585
  %v587 = vpop.f32.mrb[0].mxu0
  %588 = vmatprep.mubr.bf16.mxu0 0
  %589 = vmatmul.mubr.bf16.gmra.mrb[0].mxu0 %v327
  %v590 = vpop.f32.mrb[0].mxu0
  %v591 = vadd.f32 %v85, %v590
  %v592 = vpop.f32.mrb[0].mxu0
  %v593 = vpop.f32.mrb[0].mxu0
  %v594 = vadd.f32 %v85, %v593
  %v595 = vpop.f32.mrb[0].mxu0
  %596 = vmatprep.mubr.bf16.mxu0 0
  %597 = vmatmul.mubr.bf16.gmra.mrb[0].mxu0 %v330
  %v598 = vpop.f32.mrb[0].mxu0
  %v599 = vadd.f32 %v85, %v598
  %v600 = vpop.f32.mrb[0].mxu0
  %v601 = vpop.f32.mrb[0].mxu0
  %v602 = vadd.f32 %v85, %v601
  %v603 = vpop.f32.mrb[0].mxu0
  %604 = vmatprep.mubr.bf16.mxu0 0
  %605 = vmatmul.mubr.bf16.gmra.mrb[0].mxu0 %v333
  %v606 = vpop.f32.mrb[0].mxu0
  %v607 = vadd.f32 %v85, %v606
  %v608 = vpop.f32.mrb[0].mxu0
  %v609 = vpop.f32.mrb[0].mxu0
  %v610 = vadd.f32 %v85, %v609
  %v611 = vpop.f32.mrb[0].mxu0
  %612 = vmatprep.mubr.bf16.mxu0 0
  %613 = vmatmul.mubr.bf16.gmra.mrb[0].mxu0 %v336
  %v614 = vpop.f32.mrb[0].mxu0
  %v615 = vadd.f32 %v85, %v614
  %v616 = vpop.f32.mrb[0].mxu0
  %v617 = vpop.f32.mrb[0].mxu0
  %v618 = vadd.f32 %v85, %v617
  %v619 = vpop.f32.mrb[0].mxu0
  %620 = vmatprep.mubr.bf16.mxu0 0
  %621 = vmatmul.mubr.bf16.gmra.mrb[0].mxu0 %v339
  %v622 = vpop.f32.mrb[0].mxu0
  %v623 = vadd.f32 %v85, %v622
  %v624 = vpop.f32.mrb[0].mxu0
  %v625 = vpop.f32.mrb[0].mxu0
  %v626 = vadd.f32 %v85, %v625
  %v627 = vpop.f32.mrb[0].mxu0
  %628 = vmatprep.mubr.bf16.mxu0 0
  %629 = vmatmul.mubr.bf16.gmra.mrb[0].mxu0 %v342
  %v630 = vpop.f32.mrb[0].mxu0
  %v631 = vadd.f32 %v85, %v630
  %v632 = vpop.f32.mrb[0].mxu0
  %v633 = vpop.f32.mrb[0].mxu0
  %v634 = vadd.f32 %v85, %v633
  %v635 = vpop.f32.mrb[0].mxu0
  %636 = vdwg.mxu0
  %v637 = vmax.f32 %v383, 0.0
  %v638 = vmax.f32 %v386, 0.0
  %v639 = vmax.f32 %v391, 0.0
  %v640 = vmax.f32 %v394, 0.0
  %v641 = vmax.f32 %v399, 0.0
  %v642 = vmax.f32 %v402, 0.0
  %v643 = vmax.f32 %v407, 0.0
  %v644 = vmax.f32 %v410, 0.0
  %v645 = vmax.f32 %v415, 0.0
  %v646 = vmax.f32 %v418, 0.0
  %v647 = vmax.f32 %v423, 0.0
  %v648 = vmax.f32 %v426, 0.0
  %v649 = vmax.f32 %v431, 0.0
  %v650 = vmax.f32 %v434, 0.0
  %v651 = vmax.f32 %v439, 0.0
  %v652 = vmax.f32 %v442, 0.0
  %v653 = vmax.f32 %v447, 0.0
  %v654 = vmax.f32 %v450, 0.0
  %v655 = vmax.f32 %v455, 0.0
  %v656 = vmax.f32 %v458, 0.0
  %v657 = vmax.f32 %v463, 0.0
  %v658 = vmax.f32 %v466, 0.0
  %v659 = vmax.f32 %v471, 0.0
  %v660 = vmax.f32 %v474, 0.0
  %v661 = vmax.f32 %v479, 0.0
  %v662 = vmax.f32 %v482, 0.0
  %v663 = vmax.f32 %v487, 0.0
  %v664 = vmax.f32 %v490, 0.0
  %v665 = vmax.f32 %v495, 0.0
  %v666 = vmax.f32 %v498, 0.0
  %v667 = vmax.f32 %v503, 0.0
  %v668 = vmax.f32 %v506, 0.0
  %v669 = vmax.f32 %v511, 0.0
  %v670 = vmax.f32 %v514, 0.0
  %v671 = vmax.f32 %v519, 0.0
  %v672 = vmax.f32 %v522, 0.0
  %v673 = vmax.f32 %v527, 0.0
  %v674 = vmax.f32 %v530, 0.0
  %v675 = vmax.f32 %v535, 0.0
  %v676 = vmax.f32 %v538, 0.0
  %v677 = vmax.f32 %v543, 0.0
  %v678 = vmax.f32 %v546, 0.0
  %v679 = vmax.f32 %v551, 0.0
  %v680 = vmax.f32 %v554, 0.0
  %v681 = vmax.f32 %v559, 0.0
  %v682 = vmax.f32 %v562, 0.0
  %v683 = vmax.f32 %v567, 0.0
  %v684 = vmax.f32 %v570, 0.0
  %v685 = vmax.f32 %v575, 0.0
  %v686 = vmax.f32 %v578, 0.0
  %v687 = vmax.f32 %v583, 0.0
  %v688 = vmax.f32 %v586, 0.0
  %v689 = vmax.f32 %v591, 0.0
  %v690 = vmax.f32 %v594, 0.0
  %v691 = vmax.f32 %v599, 0.0
  %v692 = vmax.f32 %v602, 0.0
  %v693 = vmax.f32 %v607, 0.0
  %v694 = vmax.f32 %v610, 0.0
  %v695 = vmax.f32 %v615, 0.0
  %v696 = vmax.f32 %v618, 0.0
  %v697 = vmax.f32 %v623, 0.0
  %v698 = vmax.f32 %v626, 0.0
  %v699 = vmax.f32 %v631, 0.0
  %v700 = vmax.f32 %v634, 0.0
  %v701 = vpack.c.bf16 %v638, %v637
  %v702 = vpack.c.bf16 %v640, %v639
  %v703 = vpack.c.bf16 %v642, %v641
  %v704 = vpack.c.bf16 %v644, %v643
  %v705 = vpack.c.bf16 %v646, %v645
  %v706 = vpack.c.bf16 %v648, %v647
  %v707 = vpack.c.bf16 %v650, %v649
  %v708 = vpack.c.bf16 %v652, %v651
  %v709 = vpack.c.bf16 %v654, %v653
  %v710 = vpack.c.bf16 %v656, %v655
  %v711 = vpack.c.bf16 %v658, %v657
  %v712 = vpack.c.bf16 %v660, %v659
  %v713 = vpack.c.bf16 %v662, %v661
  %v714 = vpack.c.bf16 %v664, %v663
  %v715 = vpack.c.bf16 %v666, %v665
  %v716 = vpack.c.bf16 %v668, %v667
  %v717 = vpack.c.bf16 %v670, %v669
  %v718 = vpack.c.bf16 %v672, %v671
  %v719 = vpack.c.bf16 %v674, %v673
  %v720 = vpack.c.bf16 %v676, %v675
  %v721 = vpack.c.bf16 %v678, %v677
  %v722 = vpack.c.bf16 %v680, %v679
  %v723 = vpack.c.bf16 %v682, %v681
  %v724 = vpack.c.bf16 %v684, %v683
  %v725 = vpack.c.bf16 %v686, %v685
  %v726 = vpack.c.bf16 %v688, %v687
  %v727 = vpack.c.bf16 %v690, %v689
  %v728 = vpack.c.bf16 %v692, %v691
  %v729 = vpack.c.bf16 %v694, %v693
  %v730 = vpack.c.bf16 %v696, %v695
  %v731 = vpack.c.bf16 %v698, %v697
  %v732 = vpack.c.bf16 %v700, %v699
  %v765 = vunpack.c.l.b16 %v701
  %v766 = vunpack.c.h.b16 %v701
  %v767 = vunpack.c.l.b16 %v702
  %v768 = vunpack.c.h.b16 %v702
  %v769 = vunpack.c.l.b16 %v703
  %v770 = vunpack.c.h.b16 %v703
  %v771 = vunpack.c.l.b16 %v704
  %v772 = vunpack.c.h.b16 %v704
  %v773 = vunpack.c.l.b16 %v705
  %v774 = vunpack.c.h.b16 %v705
  %v775 = vunpack.c.l.b16 %v706
  %v776 = vunpack.c.h.b16 %v706
  %v777 = vunpack.c.l.b16 %v707
  %v778 = vunpack.c.h.b16 %v707
  %v779 = vunpack.c.l.b16 %v708
  %v780 = vunpack.c.h.b16 %v708
  %v781 = vunpack.c.l.b16 %v709
  %v782 = vunpack.c.h.b16 %v709
  %v783 = vunpack.c.l.b16 %v710
  %v784 = vunpack.c.h.b16 %v710
  %v785 = vunpack.c.l.b16 %v711
  %v786 = vunpack.c.h.b16 %v711
  %v787 = vunpack.c.l.b16 %v712
  %v788 = vunpack.c.h.b16 %v712
  %v789 = vunpack.c.l.b16 %v713
  %v790 = vunpack.c.h.b16 %v713
  %v791 = vunpack.c.l.b16 %v714
  %v792 = vunpack.c.h.b16 %v714
  %v793 = vunpack.c.l.b16 %v715
  %v794 = vunpack.c.h.b16 %v715
  %v795 = vunpack.c.l.b16 %v716
  %v796 = vunpack.c.h.b16 %v716
  %v797 = vunpack.c.l.b16 %v717
  %v798 = vunpack.c.h.b16 %v717
  %v799 = vunpack.c.l.b16 %v718
  %v800 = vunpack.c.h.b16 %v718
  %v801 = vunpack.c.l.b16 %v719
  %v802 = vunpack.c.h.b16 %v719
  %v803 = vunpack.c.l.b16 %v720
  %v804 = vunpack.c.h.b16 %v720
  %v805 = vunpack.c.l.b16 %v721
  %v806 = vunpack.c.h.b16 %v721
  %v807 = vunpack.c.l.b16 %v722
  %v808 = vunpack.c.h.b16 %v722
  %v809 = vunpack.c.l.b16 %v723
  %v810 = vunpack.c.h.b16 %v723
  %v811 = vunpack.c.l.b16 %v724
  %v812 = vunpack.c.h.b16 %v724
  %v813 = vunpack.c.l.b16 %v725
  %v814 = vunpack.c.h.b16 %v725
  %v815 = vunpack.c.l.b16 %v726
  %v816 = vunpack.c.h.b16 %v726
  %v817 = vunpack.c.l.b16 %v727
  %v818 = vunpack.c.h.b16 %v727
  %v819 = vunpack.c.l.b16 %v728
  %v820 = vunpack.c.h.b16 %v728
  %v821 = vunpack.c.l.b16 %v729
  %v822 = vunpack.c.h.b16 %v729
  %v823 = vunpack.c.l.b16 %v730
  %v824 = vunpack.c.h.b16 %v730
  %v825 = vunpack.c.l.b16 %v731
  %v826 = vunpack.c.h.b16 %v731
  %v827 = vunpack.c.l.b16 %v732
  %v828 = vunpack.c.h.b16 %v732
  %v829 = vpack.c.b16 %v765, %v765
  %v830 = vpack.c.b16 %v766, %v766
  %v831 = vpack.c.b16 %v767, %v767
  %v832 = vpack.c.b16 %v768, %v768
  %v833 = vpack.c.b16 %v769, %v769
  %v834 = vpack.c.b16 %v770, %v770
  %v835 = vpack.c.b16 %v771, %v771
  %v836 = vpack.c.b16 %v772, %v772
  %v837 = vpack.c.b16 %v773, %v773
  %v838 = vpack.c.b16 %v774, %v774
  %v839 = vpack.c.b16 %v775, %v775
  %v840 = vpack.c.b16 %v776, %v776
  %v841 = vpack.c.b16 %v777, %v777
  %v842 = vpack.c.b16 %v778, %v778
  %v843 = vpack.c.b16 %v779, %v779
  %v844 = vpack.c.b16 %v780, %v780
  %v845 = vpack.c.b16 %v781, %v781
  %v846 = vpack.c.b16 %v782, %v782
  %v847 = vpack.c.b16 %v783, %v783
  %v848 = vpack.c.b16 %v784, %v784
  %v849 = vpack.c.b16 %v785, %v785
  %v850 = vpack.c.b16 %v786, %v786
  %v851 = vpack.c.b16 %v787, %v787
  %v852 = vpack.c.b16 %v788, %v788
  %v853 = vpack.c.b16 %v789, %v789
  %v854 = vpack.c.b16 %v790, %v790
  %v855 = vpack.c.b16 %v791, %v791
  %v856 = vpack.c.b16 %v792, %v792
  %v857 = vpack.c.b16 %v793, %v793
  %v858 = vpack.c.b16 %v794, %v794
  %v859 = vpack.c.b16 %v795, %v795
  %v860 = vpack.c.b16 %v796, %v796
  %v861 = vpack.c.b16 %v797, %v797
  %v862 = vpack.c.b16 %v798, %v798
  %v863 = vpack.c.b16 %v799, %v799
  %v864 = vpack.c.b16 %v800, %v800
  %v865 = vpack.c.b16 %v801, %v801
  %v866 = vpack.c.b16 %v802, %v802
  %v867 = vpack.c.b16 %v803, %v803
  %v868 = vpack.c.b16 %v804, %v804
  %v869 = vpack.c.b16 %v805, %v805
  %v870 = vpack.c.b16 %v806, %v806
  %v871 = vpack.c.b16 %v807, %v807
  %v872 = vpack.c.b16 %v808, %v808
  %v873 = vpack.c.b16 %v809, %v809
  %v874 = vpack.c.b16 %v810, %v810
  %v875 = vpack.c.b16 %v811, %v811
  %v876 = vpack.c.b16 %v812, %v812
  %v877 = vpack.c.b16 %v813, %v813
  %v878 = vpack.c.b16 %v814, %v814
  %v879 = vpack.c.b16 %v815, %v815
  %v880 = vpack.c.b16 %v816, %v816
  %v881 = vpack.c.b16 %v817, %v817
  %v882 = vpack.c.b16 %v818, %v818
  %v883 = vpack.c.b16 %v819, %v819
  %v884 = vpack.c.b16 %v820, %v820
  %v885 = vpack.c.b16 %v821, %v821
  %v886 = vpack.c.b16 %v822, %v822
  %v887 = vpack.c.b16 %v823, %v823
  %v888 = vpack.c.b16 %v824, %v824
  %v889 = vpack.c.b16 %v825, %v825
  %v890 = vpack.c.b16 %v826, %v826
  %v891 = vpack.c.b16 %v827, %v827
  %v892 = vpack.c.b16 %v828, %v828
  %vm957 = vcmask 27648
  %958 = vst.msk [vmem:[%s3] sm:$0xf] %vm957, %v829
  %959 = vst.msk [vmem:[%s3 + $0x4] sm:$0xf] %vm957, %v830
  %960 = vst.msk [vmem:[%s3 + $0x8] sm:$0xf] %vm957, %v831
  %961 = vst.msk [vmem:[%s3 + $0xc] sm:$0xf] %vm957, %v832
  %962 = vst.msk [vmem:[%s3 + $0x10] sm:$0xf] %vm957, %v833
  %963 = vst.msk [vmem:[%s3 + $0x14] sm:$0xf] %vm957, %v834
  %964 = vst.msk [vmem:[%s3 + $0x18] sm:$0xf] %vm957, %v835
  %965 = vst.msk [vmem:[%s3 + $0x1c] sm:$0xf] %vm957, %v836
  %966 = vst.msk [vmem:[%s3 + $0x20] sm:$0xf] %vm957, %v837
  %967 = vst.msk [vmem:[%s3 + $0x24] sm:$0xf] %vm957, %v838
  %968 = vst.msk [vmem:[%s3 + $0x28] sm:$0xf] %vm957, %v839
  %969 = vst.msk [vmem:[%s3 + $0x2c] sm:$0xf] %vm957, %v840
  %970 = vst.msk [vmem:[%s3 + $0x30] sm:$0xf] %vm957, %v841
  %971 = vst.msk [vmem:[%s3 + $0x34] sm:$0xf] %vm957, %v842
  %972 = vst.msk [vmem:[%s3 + $0x38] sm:$0xf] %vm957, %v843
  %973 = vst.msk [vmem:[%s3 + $0x3c] sm:$0xf] %vm957, %v844
  %974 = vst.msk [vmem:[%s3 + $0x40] sm:$0xf] %vm957, %v845
  %975 = vst.msk [vmem:[%s3 + $0x44] sm:$0xf] %vm957, %v846
  %976 = vst.msk [vmem:[%s3 + $0x48] sm:$0xf] %vm957, %v847
  %977 = vst.msk [vmem:[%s3 + $0x4c] sm:$0xf] %vm957, %v848
  %978 = vst.msk [vmem:[%s3 + $0x50] sm:$0xf] %vm957, %v849
  %979 = vst.msk [vmem:[%s3 + $0x54] sm:$0xf] %vm957, %v850
  %980 = vst.msk [vmem:[%s3 + $0x58] sm:$0xf] %vm957, %v851
  %981 = vst.msk [vmem:[%s3 + $0x5c] sm:$0xf] %vm957, %v852
  %982 = vst.msk [vmem:[%s3 + $0x60] sm:$0xf] %vm957, %v853
  %983 = vst.msk [vmem:[%s3 + $0x64] sm:$0xf] %vm957, %v854
  %984 = vst.msk [vmem:[%s3 + $0x68] sm:$0xf] %vm957, %v855
  %985 = vst.msk [vmem:[%s3 + $0x6c] sm:$0xf] %vm957, %v856
  %986 = vst.msk [vmem:[%s3 + $0x70] sm:$0xf] %vm957, %v857
  %987 = vst.msk [vmem:[%s3 + $0x74] sm:$0xf] %vm957, %v858
  %988 = vst.msk [vmem:[%s3 + $0x78] sm:$0xf] %vm957, %v859
  %989 = vst.msk [vmem:[%s3 + $0x7c] sm:$0xf] %vm957, %v860
  %990 = vst.msk [vmem:[%s3 + $0x80] sm:$0xf] %vm957, %v861
  %991 = vst.msk [vmem:[%s3 + $0x84] sm:$0xf] %vm957, %v862
  %992 = vst.msk [vmem:[%s3 + $0x88] sm:$0xf] %vm957, %v863
  %993 = vst.msk [vmem:[%s3 + $0x8c] sm:$0xf] %vm957, %v864
  %994 = vst.msk [vmem:[%s3 + $0x90] sm:$0xf] %vm957, %v865
  %995 = vst.msk [vmem:[%s3 + $0x94] sm:$0xf] %vm957, %v866
  %996 = vst.msk [vmem:[%s3 + $0x98] sm:$0xf] %vm957, %v867
  %997 = vst.msk [vmem:[%s3 + $0x9c] sm:$0xf] %vm957, %v868
  %998 = vst.msk [vmem:[%s3 + $0xa0] sm:$0xf] %vm957, %v869
  %999 = vst.msk [vmem:[%s3 + $0xa4] sm:$0xf] %vm957, %v870
  %1000 = vst.msk [vmem:[%s3 + $0xa8] sm:$0xf] %vm957, %v871
  %1001 = vst.msk [vmem:[%s3 + $0xac] sm:$0xf] %vm957, %v872
  %1002 = vst.msk [vmem:[%s3 + $0xb0] sm:$0xf] %vm957, %v873
  %1003 = vst.msk [vmem:[%s3 + $0xb4] sm:$0xf] %vm957, %v874
  %1004 = vst.msk [vmem:[%s3 + $0xb8] sm:$0xf] %vm957, %v875
  %1005 = vst.msk [vmem:[%s3 + $0xbc] sm:$0xf] %vm957, %v876
  %1006 = vst.msk [vmem:[%s3 + $0xc0] sm:$0xf] %vm957, %v877
  %1007 = vst.msk [vmem:[%s3 + $0xc4] sm:$0xf] %vm957, %v878
  %1008 = vst.msk [vmem:[%s3 + $0xc8] sm:$0xf] %vm957, %v879
  %1009 = vst.msk [vmem:[%s3 + $0xcc] sm:$0xf] %vm957, %v880
  %1010 = vst.msk [vmem:[%s3 + $0xd0] sm:$0xf] %vm957, %v881
  %1011 = vst.msk [vmem:[%s3 + $0xd4] sm:$0xf] %vm957, %v882
  %1012 = vst.msk [vmem:[%s3 + $0xd8] sm:$0xf] %vm957, %v883
  %1013 = vst.msk [vmem:[%s3 + $0xdc] sm:$0xf] %vm957, %v884
  %1014 = vst.msk [vmem:[%s3 + $0xe0] sm:$0xf] %vm957, %v885
  %1015 = vst.msk [vmem:[%s3 + $0xe4] sm:$0xf] %vm957, %v886
  %1016 = vst.msk [vmem:[%s3 + $0xe8] sm:$0xf] %vm957, %v887
  %1017 = vst.msk [vmem:[%s3 + $0xec] sm:$0xf] %vm957, %v888
  %1018 = vst.msk [vmem:[%s3 + $0xf0] sm:$0xf] %vm957, %v889
  %1019 = vst.msk [vmem:[%s3 + $0xf4] sm:$0xf] %vm957, %v890
  %1020 = vst.msk [vmem:[%s3 + $0xf8] sm:$0xf] %vm957, %v891
  %1021 = vst.msk [vmem:[%s3 + $0xfc] sm:$0xf] %vm957, %v892
  // Predicated region
  $region14: #{bottleneck_forward.7} parent=0 // pred_check
    _
  $region15: #{bottleneck_forward.7} parent=0 // pred_check_branch
    %1023 = sbr.rel (0) target = $region17
  $region16: #{bottleneck_forward.7} parent=0 // pred_region
    _
  $region17: #{bottleneck_forward.7} parent=0 // pred_fallthru
    _
  // Predicated region
  $region18: #{bottleneck_forward.7} parent=0 // pred_check
    _
  $region19: #{bottleneck_forward.7} parent=0 // pred_check_branch
    %1025 = sbr.rel (0) target = $region21
  $region20: #{bottleneck_forward.7} parent=0 // pred_region
    _
  $region21: #{bottleneck_forward.7} parent=0 // pred_fallthru
    _

// kernel: bottleneck_forward.10
$region0: #{bottleneck_forward.10}
  #allocation0 [shape = 'u32[]', space=smem, size = 0x4, offset = 0x4, fixed_abs, tag = 'smem constant byte address 0x4 - core index']
  #allocation1 [shape = 'u32[144,128]{1,0:T(1,128)}', space=vmem, size = 0x12000, scoped, tag = 'internal scratch']
  #allocation2 [shape = 'f32[1,1]{1,0:T(1,128)S(1)}', space=vmem, size = 0x200, scoped, tag = 'scoped memory for bottleneck_forward.10']
  %s0 = inlined_call_operand.vmem [shape: f32[2,16], index: 0, kind: input, shape index: {}]
  %s1 = inlined_call_operand.vmem [shape: f32[16,1], index: 1, kind: input, shape index: {}]
  %s2 = inlined_call_operand.<no memory space> [shape: f32[1,1], index: 2, kind: input, shape index: {}]
  %s3 = inlined_call_operand.vmem [shape: f32[1,16], index: 3, kind: input, shape index: {}]
  %s4 = inlined_call_operand.vmem [shape: f32[1,16], index: 4, kind: input, shape index: {}]
  %s5 = inlined_call_operand.vmem [shape: f32[2,16], index: 5, kind: output, shape index: {}]
  %s6 = sld [smem:[#allocation0]]
  $region30: #{bottleneck_forward.10} parent=0
    _
  %s8 = ssub.s32 1, %s6
  %s9 = scalar_select 0, %s8, %s6
  %v10 = vstv %s2
  %11 = vst [vmem:[#allocation2] sm:$0x1] %v10
  // Predicated region
  $region2: #{bottleneck_forward.10} parent=0 // pred_check
    _
  $region3: #{bottleneck_forward.10} parent=0 // pred_check_branch
    %13 = sbr.rel (0) target = $region5
  $region4: #{bottleneck_forward.10} parent=0 // pred_region
    _
  $region5: #{bottleneck_forward.10} parent=0 // pred_fallthru
    _
  // Predicated region
  $region6: #{bottleneck_forward.10} parent=0 // pred_check
    _
  $region7: #{bottleneck_forward.10} parent=0 // pred_check_branch
    %15 = sbr.rel (0) target = $region9
  $region8: #{bottleneck_forward.10} parent=0 // pred_region
    _
  $region9: #{bottleneck_forward.10} parent=0 // pred_fallthru
    _
  // Predicated region
  $region10: #{bottleneck_forward.10} parent=0 // pred_check
    _
  $region11: #{bottleneck_forward.10} parent=0 // pred_check_branch
    %17 = sbr.rel (0) target = $region13
  $region12: #{bottleneck_forward.10} parent=0 // pred_region
    _
  $region13: #{bottleneck_forward.10} parent=0 // pred_fallthru
    _
  // Predicated region
  $region14: #{bottleneck_forward.10} parent=0 // pred_check
    _
  $region15: #{bottleneck_forward.10} parent=0 // pred_check_branch
    %19 = sbr.rel (0) target = $region17
  $region16: #{bottleneck_forward.10} parent=0 // pred_region
    _
  $region17: #{bottleneck_forward.10} parent=0 // pred_fallthru
    _
  // Predicated region
  $region18: #{bottleneck_forward.10} parent=0 // pred_check
    _
  $region19: #{bottleneck_forward.10} parent=0 // pred_check_branch
    %21 = sbr.rel (0) target = $region21
  $region20: #{bottleneck_forward.10} parent=0 // pred_region
    _
  $region21: #{bottleneck_forward.10} parent=0 // pred_fallthru
    _
  %v22 = vld [vmem:[%s0] sm:$0x3]
  %v23 = vmul.f32 %v22, 0.015625
  %v24 = vld [vmem:[%s1] sm:$0xff]
  %v25 = vld [vmem:[%s1 + $0x8] sm:$0xff]
  %v26 = vld [vmem:[#allocation2] sm:$0x1]
  %v28 = vlaneseq
  %v29 = vshrl.u32 %v28, 7
  %v30 = vsub.s32 0, %v29
  %v31 = vrot.slane %v26, %v30
  %vm33 = vcmask 130048
  %v35 = vsel %vm33, %v23, 0
  %37 = vmatprep.subr.mxu0 0.0
  %38 = vmatpush1.msra.mxu0 %v24
  %39 = vmatprep.subr.mxu0 0.0
  %40 = vmatpush1.msra.mxu0 %v25
  %41 = vmatprep.subr.mxu0 0.0
  %42 = vmatpush1.msra.mxu0 0.0
  %43 = vmatprep.subr.mxu0 0.0
  %44 = vmatpush1.msra.mxu0 0.0
  %45 = vmatprep.subr.mxu0 0.0
  %46 = vmatpush1.msra.mxu0 0.0
  %47 = vmatprep.subr.mxu0 0.0
  %48 = vmatpush1.msra.mxu0 0.0
  %49 = vmatprep.subr.mxu0 0.0
  %50 = vmatpush1.msra.mxu0 0.0
  %51 = vmatprep.subr.mxu0 0.0
  %52 = vmatpush1.msra.mxu0 0.0
  %53 = vmatprep.subr.mxu0 0.0
  %54 = vmatpush1.msra.mxu0 0.0
  %55 = vmatprep.subr.mxu0 0.0
  %56 = vmatpush1.msra.mxu0 0.0
  %57 = vmatprep.subr.mxu0 0.0
  %58 = vmatpush1.msra.mxu0 0.0
  %59 = vmatprep.subr.mxu0 0.0
  %60 = vmatpush1.msra.mxu0 0.0
  %61 = vmatprep.subr.mxu0 0.0
  %62 = vmatpush1.msra.mxu0 0.0
  %63 = vmatprep.subr.mxu0 0.0
  %64 = vmatpush1.msra.mxu0 0.0
  %65 = vmatprep.subr.mxu0 0.0
  %66 = vmatpush1.msra.mxu0 0.0
  %67 = vmatprep.subr.mxu0 0.0
  %68 = vmatpush1.msra.mxu0 0.0
  %69 = vmatprep.subr.mxu0 0.0
  %70 = vmatpush1.msra.mxu0 0.0
  %71 = vmatprep.subr.mxu0 0.0
  %72 = vmatpush1.msra.mxu0 0.0
  %73 = vmatprep.subr.mxu0 0.0
  %74 = vmatpush1.msra.mxu0 0.0
  %75 = vmatprep.subr.mxu0 0.0
  %76 = vmatpush1.msra.mxu0 0.0
  %77 = vmatprep.subr.mxu0 0.0
  %78 = vmatpush1.msra.mxu0 0.0
  %79 = vmatprep.subr.mxu0 0.0
  %80 = vmatpush1.msra.mxu0 0.0
  %81 = vmatprep.subr.mxu0 0.0
  %82 = vmatpush1.msra.mxu0 0.0
  %83 = vmatprep.subr.mxu0 0.0
  %84 = vmatpush1.msra.mxu0 0.0
  %85 = vmatprep.subr.mxu0 0.0
  %86 = vmatpush1.msra.mxu0 0.0
  %87 = vmatprep.subr.mxu0 0.0
  %88 = vmatpush1.msra.mxu0 0.0
  %89 = vmatprep.subr.mxu0 0.0
  %90 = vmatpush1.msra.mxu0 0.0
  %91 = vmatprep.subr.mxu0 0.0
  %92 = vmatpush1.msra.mxu0 0.0
  %93 = vmatprep.subr.mxu0 0.0
  %94 = vmatpush1.msra.mxu0 0.0
  %95 = vmatprep.subr.mxu0 0.0
  %96 = vmatpush1.msra.mxu0 0.0
  %97 = vmatprep.subr.mxu0 0.0
  %98 = vmatpush1.msra.mxu0 0.0
  %99 = vmatprep.subr.mxu0 0.0
  %100 = vmatpush1.msra.mxu0 0.0
  %101 = vmatprep.mubr.f32.mxu0 0.0
  %102 = vmatmul.mubr.f32.gmra.mrb[0].mxu0 %v35
  %v103 = vpop.f32.mrb[0].mxu0
  %v104 = vadd.f32 %v31, %v103
  %v105 = vpop.f32.mrb[0].mxu0
  %106 = vdwg.mxu0
  %v107 = vmax.f32 %v104, 0.0
  %v108 = vld [vmem:[%s3] sm:$0x1]
  %v109 = vld [vmem:[%s4] sm:$0x1]
  %v111 = vlaneseq
  %v112 = vshrl.u32 %v111, 7
  %v113 = vsub.s32 0, %v112
  %v114 = vrot.slane %v109, %v113
  %vm116 = vcmask 7168
  %v118 = vsel %vm116, %v107, 0
  %vm120 = vcmask 1040384
  %v122 = vsel %vm120, %v108, 0
  %124 = vmatprep.subr.mxu0 0.0
  %125 = vmatpush1.msra.mxu0 %v122
  %126 = vmatprep.subr.mxu0 0.0
  %127 = vmatpush1.msra.mxu0 0.0
  %128 = vmatprep.subr.mxu0 0.0
  %129 = vmatpush1.msra.mxu0 0.0
  %130 = vmatprep.subr.mxu0 0.0
  %131 = vmatpush1.msra.mxu0 0.0
  %132 = vmatprep.subr.mxu0 0.0
  %133 = vmatpush1.msra.mxu0 0.0
  %134 = vmatprep.subr.mxu0 0.0
  %135 = vmatpush1.msra.mxu0 0.0
  %136 = vmatprep.subr.mxu0 0.0
  %137 = vmatpush1.msra.mxu0 0.0
  %138 = vmatprep.subr.mxu0 0.0
  %139 = vmatpush1.msra.mxu0 0.0
  %140 = vmatprep.subr.mxu0 0.0
  %141 = vmatpush1.msra.mxu0 0.0
  %142 = vmatprep.subr.mxu0 0.0
  %143 = vmatpush1.msra.mxu0 0.0
  %144 = vmatprep.subr.mxu0 0.0
  %145 = vmatpush1.msra.mxu0 0.0
  %146 = vmatprep.subr.mxu0 0.0
  %147 = vmatpush1.msra.mxu0 0.0
  %148 = vmatprep.subr.mxu0 0.0
  %149 = vmatpush1.msra.mxu0 0.0
  %150 = vmatprep.subr.mxu0 0.0
  %151 = vmatpush1.msra.mxu0 0.0
  %152 = vmatprep.subr.mxu0 0.0
  %153 = vmatpush1.msra.mxu0 0.0
  %154 = vmatprep.subr.mxu0 0.0
  %155 = vmatpush1.msra.mxu0 0.0
  %156 = vmatprep.subr.mxu0 0.0
  %157 = vmatpush1.msra.mxu0 0.0
  %158 = vmatprep.subr.mxu0 0.0
  %159 = vmatpush1.msra.mxu0 0.0
  %160 = vmatprep.subr.mxu0 0.0
  %161 = vmatpush1.msra.mxu0 0.0
  %162 = vmatprep.subr.mxu0 0.0
  %163 = vmatpush1.msra.mxu0 0.0
  %164 = vmatprep.subr.mxu0 0.0
  %165 = vmatpush1.msra.mxu0 0.0
  %166 = vmatprep.subr.mxu0 0.0
  %167 = vmatpush1.msra.mxu0 0.0
  %168 = vmatprep.subr.mxu0 0.0
  %169 = vmatpush1.msra.mxu0 0.0
  %170 = vmatprep.subr.mxu0 0.0
  %171 = vmatpush1.msra.mxu0 0.0
  %172 = vmatprep.subr.mxu0 0.0
  %173 = vmatpush1.msra.mxu0 0.0
  %174 = vmatprep.subr.mxu0 0.0
  %175 = vmatpush1.msra.mxu0 0.0
  %176 = vmatprep.subr.mxu0 0.0
  %177 = vmatpush1.msra.mxu0 0.0
  %178 = vmatprep.subr.mxu0 0.0
  %179 = vmatpush1.msra.mxu0 0.0
  %180 = vmatprep.subr.mxu0 0.0
  %181 = vmatpush1.msra.mxu0 0.0
  %182 = vmatprep.subr.mxu0 0.0
  %183 = vmatpush1.msra.mxu0 0.0
  %184 = vmatprep.subr.mxu0 0.0
  %185 = vmatpush1.msra.mxu0 0.0
  %186 = vmatprep.subr.mxu0 0.0
  %187 = vmatpush1.msra.mxu0 0.0
  %188 = vmatprep.mubr.f32.mxu0 0.0
  %189 = vmatmul.mubr.f32.gmra.mrb[0].mxu0 %v118
  %v190 = vpop.f32.mrb[0].mxu0
  %v191 = vadd.f32 %v114, %v190
  %v192 = vpop.f32.mrb[0].mxu0
  %193 = vdwg.mxu0
  %v194 = vxor.u32 %v191, 2147483648
  %v195 = vmul.f32 %v194, 1.442695
  %v196 = vpow.pop %v195
  %v197 = vadd.f32 %v196, 1.0
  %v198 = vrcp.pop %v197
  %v199 = vmul.f32 1.0, %v198
  %vm200 = vcmask 123904
  %201 = vst.msk [vmem:[%s5] sm:$0x3] %vm200, %v199
  // Predicated region
  $region22: #{bottleneck_forward.10} parent=0 // pred_check
    _
  $region23: #{bottleneck_forward.10} parent=0 // pred_check_branch
    %203 = sbr.rel (0) target = $region25
  $region24: #{bottleneck_forward.10} parent=0 // pred_region
    _
  $region25: #{bottleneck_forward.10} parent=0 // pred_fallthru
    _
  // Predicated region
  $region26: #{bottleneck_forward.10} parent=0 // pred_check
    _
  $region27: #{bottleneck_forward.10} parent=0 // pred_check_branch
    %205 = sbr.rel (0) target = $region29
  $region28: #{bottleneck_forward.10} parent=0 // pred_region
    _
  $region29: #{bottleneck_forward.10} parent=0 // pred_fallthru
    _

// kernel: bottleneck_forward.11
$region0: #{bottleneck_forward.11}
  #allocation0 [shape = 'u32[]', space=smem, size = 0x4, offset = 0x4, fixed_abs, tag = 'smem constant byte address 0x4 - core index']
  #allocation1 [shape = 'u32[144,128]{1,0:T(1,128)}', space=vmem, size = 0x12000, scoped, tag = 'internal scratch']
  %s0 = inlined_call_operand.vmem [shape: f32[2,1,16], index: 0, kind: input, shape index: {}]
  %s1 = inlined_call_operand.vmem [shape: bf16[2,64,16], index: 1, kind: input, shape index: {}]
  %s2 = inlined_call_operand.vmem [shape: bf16[2,64,16], index: 2, kind: input, shape index: {}]
  %s3 = inlined_call_operand.hbm [shape: bf16[2,64,16], index: 3, kind: output, shape index: {}]
  %s4 = sld [smem:[#allocation0]]
  $region45: #{bottleneck_forward.11} parent=0
    _
  %s6 = ssub.s32 1, %s4
  %s7 = scalar_select 0, %s6, %s4
  $region1: #{bottleneck_forward.11} parent=0
    #allocation2 [shape = 'u8[32768]{0}', space=vmem, size = 0x8000, scoped, tag = 'output window, operand 0']
    #allocation3 [shape = 's32[2]{0}', space=sflag, size = 0x8, scoped, tag = 'scoped memory for bottleneck_forward.11']
    %8 = vsyncpa [#allocation3], 0
    %s9 = scalar_lea.sflag [#allocation3], 1
    %10 = vsyncpa %s9, 0
    loop: start=0, step=1, limit=4
    $region2: #{bottleneck_forward.11} parent=1 // loop_pre_header
      _
    $region3: #{bottleneck_forward.11} parent=1 // loop_header
      %s12 = sphi 0, %s16
      %p13 = scmp.ge.s32.totalorder %s12, 4
      %s19 = sphi 0, %s31
      %s20 = sphi 0, %s27
      %s21 = sphi 0, %s19
      %s22 = sphi 0, %s20
      %s23 = sphi 0, %s21
      %s24 = sphi 0, %s22
      %s34 = sphi 0, %s36
      %s37 = sphi 0, %s34
      %s38 = sphi 0, %s37
      %s54 = sphi 0, %s38
      %s62 = sphi 0, %s64
      %s65 = sphi 0, %s62
      %s66 = sphi 0, %s65
      %s82 = sphi 0, %s66
      %s90 = sphi 0, %s92
      %s93 = sphi 0, %s90
      %s94 = sphi 0, %s93
      %s110 = sphi 0, %s94
      %s118 = sphi 0, %s120
      %s121 = sphi 0, %s118
      %s122 = sphi 0, %s121
      %s138 = sphi 0, %s122
    $region4: #{bottleneck_forward.11} parent=1 // loop_header_branch
      %15 = sbr.rel (%p13) target = $region8
    $region5: #{bottleneck_forward.11} parent=1 // loop_body
      %s17 = ssub.s32 %s12, 1
      %s18 = ssub.s32 %s12, 2
      %s25 = sadd.s32 1, %s20
      %p26 = scmp.ge.s32.totalorder %s25, 1
      %s27 = scalar_select %p26, 0, %s25
      %s28 = sadd.s32 1, %s19
      %s29 = scalar_select %p26, %s28, %s19
      %p30 = scmp.ge.s32.totalorder %s29, 2
      %s31 = scalar_select %p30, 0, %s29
      %s32 = ssub.s32 %s19, %s31
      %p33 = scmp.eq.s32.totalorder %s32, 0
      %s35 = sadd.s32 %s34, 1
      %s36 = scalar_select %p33, %s34, %s35
      %p39 = pneg %p33
      %p40 = scmp.eq.s32.totalorder %s12, 1
      %p41 = por %p39, %p40
      %p42 = scmp.ne.s32.totalorder %s34, %s37
      %p43 = scmp.eq.s32.totalorder %s12, 0
      %p44 = por %p42, %p43
      %p45 = scmp.ne.s32.totalorder %s34, %s37
      %p46 = scmp.eq.s32.totalorder %s17, 1
      %p47 = por %p45, %p46
      %p48 = scmp.ne.s32.totalorder %s37, %s38
      %p49 = scmp.eq.s32.totalorder %s17, 0
      %p50 = por %p48, %p49
      %p51 = scmp.ne.s32.totalorder %s37, %s38
      %p52 = scmp.eq.s32.totalorder %s18, 1
      %p53 = por %p51, %p52
      %p55 = scmp.ne.s32.totalorder %s38, %s54
      %p56 = scmp.eq.s32.totalorder %s18, 0
      %p57 = por %p55, %p56
      %s58 = ssub.s32 %s19, %s31
      %s59 = ssub.s32 %s20, %s27
      %s60 = sor.u32 %s58, %s59
      %p61 = scmp.eq.s32.totalorder %s60, 0
      %s63 = sadd.s32 %s62, 1
      %s64 = scalar_select %p61, %s62, %s63
      %p67 = pneg %p61
      %p68 = scmp.eq.s32.totalorder %s12, 1
      %p69 = por %p67, %p68
      %p70 = scmp.ne.s32.totalorder %s62, %s65
      %p71 = scmp.eq.s32.totalorder %s12, 0
      %p72 = por %p70, %p71
      %p73 = scmp.ne.s32.totalorder %s62, %s65
      %p74 = scmp.eq.s32.totalorder %s17, 1
      %p75 = por %p73, %p74
      %p76 = scmp.ne.s32.totalorder %s65, %s66
      %p77 = scmp.eq.s32.totalorder %s17, 0
      %p78 = por %p76, %p77
      %p79 = scmp.ne.s32.totalorder %s65, %s66
      %p80 = scmp.eq.s32.totalorder %s18, 1
      %p81 = por %p79, %p80
      %p83 = scmp.ne.s32.totalorder %s66, %s82
      %p84 = scmp.eq.s32.totalorder %s18, 0
      %p85 = por %p83, %p84
      %s86 = ssub.s32 %s19, %s31
      %s87 = ssub.s32 %s20, %s27
      %s88 = sor.u32 %s86, %s87
      %p89 = scmp.eq.s32.totalorder %s88, 0
      %s91 = sadd.s32 %s90, 1
      %s92 = scalar_select %p89, %s90, %s91
      %p95 = pneg %p89
      %p96 = scmp.eq.s32.totalorder %s12, 1
      %p97 = por %p95, %p96
      %p98 = scmp.ne.s32.totalorder %s90, %s93
      %p99 = scmp.eq.s32.totalorder %s12, 0
      %p100 = por %p98, %p99
      %p101 = scmp.ne.s32.totalorder %s90, %s93
      %p102 = scmp.eq.s32.totalorder %s17, 1
      %p103 = por %p101, %p102
      %p104 = scmp.ne.s32.totalorder %s93, %s94
      %p105 = scmp.eq.s32.totalorder %s17, 0
      %p106 = por %p104, %p105
      %p107 = scmp.ne.s32.totalorder %s93, %s94
      %p108 = scmp.eq.s32.totalorder %s18, 1
      %p109 = por %p107, %p108
      %p111 = scmp.ne.s32.totalorder %s94, %s110
      %p112 = scmp.eq.s32.totalorder %s18, 0
      %p113 = por %p111, %p112
      %s114 = ssub.s32 %s19, %s31
      %s115 = ssub.s32 %s20, %s27
      %s116 = sor.u32 %s114, %s115
      %p117 = scmp.eq.s32.totalorder %s116, 0
      %s119 = sadd.s32 %s118, 1
      %s120 = scalar_select %p117, %s118, %s119
      %p123 = pneg %p117
      %p124 = scmp.eq.s32.totalorder %s12, 1
      %p125 = por %p123, %p124
      %p126 = scmp.ne.s32.totalorder %s118, %s121
      %p127 = scmp.eq.s32.totalorder %s12, 0
      %p128 = por %p126, %p127
      %p129 = scmp.ne.s32.totalorder %s118, %s121
      %p130 = scmp.eq.s32.totalorder %s17, 1
      %p131 = por %p129, %p130
      %p132 = scmp.ne.s32.totalorder %s121, %s122
      %p133 = scmp.eq.s32.totalorder %s17, 0
      %p134 = por %p132, %p133
      %p135 = scmp.ne.s32.totalorder %s121, %s122
      %p136 = scmp.eq.s32.totalorder %s18, 1
      %p137 = por %p135, %p136
      %p139 = scmp.ne.s32.totalorder %s122, %s138
      %p140 = scmp.eq.s32.totalorder %s18, 0
      %p141 = por %p139, %p140
      %p142 = scmp.le.s32.totalorder 1, %s12
      %p143 = scmp.lt.s32.totalorder %s12, 3
      %p144 = pnand %p142, %p143
      %p145 = pneg %p144
      // Predicated region
      $region9: #{bottleneck_forward.11} parent=5 // pred_check
        _
      $region10: #{bottleneck_forward.11} parent=5 // pred_check_branch
        %147 = sbr.rel (%p144) target = $region12
      $region11: #{bottleneck_forward.11} parent=5 // pred_region
        %s148 = ssub.s32 %s12, 1
      $region12: #{bottleneck_forward.11} parent=5 // pred_fallthru
        _
      %p149 = scmp.lt.s32.totalorder %s12, 2
      // Predicated region
      $region13: #{bottleneck_forward.11} parent=5 // pred_check
        %p150 = pneg %p149
      $region14: #{bottleneck_forward.11} parent=5 // pred_check_branch
        %152 = sbr.rel (%p150) target = $region16
      $region15: #{bottleneck_forward.11} parent=5 // pred_region
        // Predicated region
        $region17: #{bottleneck_forward.11} parent=15 // pred_check
          %p153 = pneg %p44
        $region18: #{bottleneck_forward.11} parent=15 // pred_check_branch
          %155 = sbr.rel (%p153) target = $region20
        $region19: #{bottleneck_forward.11} parent=15 // pred_region
          %p156 = scmp.lt.s32.totalorder %s19, 1
          %s157 = scalar_select %p156, %s19, 1
          %s158 = scalar_lea.vmem %s0, %s157
        $region20: #{bottleneck_forward.11} parent=15 // pred_fallthru
          _
        // Predicated region
        $region21: #{bottleneck_forward.11} parent=15 // pred_check
          %p159 = pneg %p72
        $region22: #{bottleneck_forward.11} parent=15 // pred_check_branch
          %161 = sbr.rel (%p159) target = $region24
        $region23: #{bottleneck_forward.11} parent=15 // pred_region
          %s162 = smul.u32 8, %s20
          %p163 = scmp.lt.s32.totalorder %s19, 1
          %s164 = scalar_select %p163, %s19, 1
          %p165 = scmp.lt.s32.totalorder %s162, 7
          %s166 = scalar_select %p165, %s162, 7
          %s167 = smul.addr %s164, 8
          %s168 = sadd.s32 %s166, %s167
          %s169 = smul.addr %s168, 4
          %s170 = scalar_lea.vmem %s1, %s169
          %s171 = smul.u32 8, %s20
        $region24: #{bottleneck_forward.11} parent=15 // pred_fallthru
          _
        // Predicated region
        $region25: #{bottleneck_forward.11} parent=15 // pred_check
          %p172 = pneg %p100
        $region26: #{bottleneck_forward.11} parent=15 // pred_check_branch
          %174 = sbr.rel (%p172) target = $region28
        $region27: #{bottleneck_forward.11} parent=15 // pred_region
          %s175 = smul.u32 8, %s20
          %p176 = scmp.lt.s32.totalorder %s19, 1
          %s177 = scalar_select %p176, %s19, 1
          %p178 = scmp.lt.s32.totalorder %s175, 7
          %s179 = scalar_select %p178, %s175, 7
          %s180 = smul.addr %s177, 8
          %s181 = sadd.s32 %s179, %s180
          %s182 = smul.addr %s181, 4
          %s183 = scalar_lea.vmem %s2, %s182
          %s184 = smul.u32 8, %s20
        $region28: #{bottleneck_forward.11} parent=15 // pred_fallthru
          _
      $region16: #{bottleneck_forward.11} parent=5 // pred_fallthru
        _
      %p185 = scmp.le.s32.totalorder 1, %s12
      %p186 = scmp.lt.s32.totalorder %s12, 3
      %p187 = pnand %p185, %p186
      %p188 = pneg %p187
      // Predicated region
      $region29: #{bottleneck_forward.11} parent=5 // pred_check
        _
      $region30: #{bottleneck_forward.11} parent=5 // pred_check_branch
        %190 = sbr.rel (%p187) target = $region32
      $region31: #{bottleneck_forward.11} parent=5 // pred_region
        %s191 = ssub.s32 %s12, 1
        %p192 = scmp.lt.s32.totalorder %s21, 1
        %s193 = scalar_select %p192, %s21, 1
        %s194 = scalar_lea.vmem %s0, %s193
        %p195 = pneg %p50
        %p196 = pneg %p47
        %s197 = smul.u32 8, %s22
        %p198 = scmp.lt.s32.totalorder %s21, 1
        %s199 = scalar_select %p198, %s21, 1
        %p200 = scmp.lt.s32.totalorder %s197, 7
        %s201 = scalar_select %p200, %s197, 7
        %s202 = smul.addr %s199, 8
        %s203 = sadd.s32 %s201, %s202
        %s204 = smul.addr %s203, 4
        %s205 = scalar_lea.vmem %s1, %s204
        %p206 = pneg %p78
        %p207 = pneg %p75
        %s208 = smul.u32 8, %s22
        %p209 = scmp.lt.s32.totalorder %s21, 1
        %s210 = scalar_select %p209, %s21, 1
        %p211 = scmp.lt.s32.totalorder %s208, 7
        %s212 = scalar_select %p211, %s208, 7
        %s213 = smul.addr %s210, 8
        %s214 = sadd.s32 %s212, %s213
        %s215 = smul.addr %s214, 4
        %s216 = scalar_lea.vmem %s2, %s215
        %p217 = pneg %p106
        %p218 = pneg %p103
        %p219 = pneg %p134
        %p220 = pneg %p131
        %s221 = sand.u32 %s121, 1
        %s222 = scalar_lea.sflag [#allocation3], %s221
        %s223 = sand.u32 %s121, 1
        %s224 = smul.addr %s223, 32
        %s225 = scalar_lea.vmem [#allocation2], %s224
        %p226 = scmp.lt.s32.totalorder %s21, 1
        %s227 = scalar_select %p226, %s21, 1
        %s228 = scalar_lea.vmem %s0, %s227
        %s229 = smul.u32 8, %s22
        %p230 = scmp.lt.s32.totalorder %s21, 1
        %s231 = scalar_select %p230, %s21, 1
        %p232 = scmp.lt.s32.totalorder %s229, 7
        %s233 = scalar_select %p232, %s229, 7
        %s234 = smul.addr %s231, 8
        %s235 = sadd.s32 %s233, %s234
        %s236 = smul.addr %s235, 4
        %s237 = scalar_lea.vmem %s1, %s236
        %s238 = smul.u32 8, %s22
        %s239 = smul.u32 8, %s22
        %p240 = scmp.lt.s32.totalorder %s21, 1
        %s241 = scalar_select %p240, %s21, 1
        %p242 = scmp.lt.s32.totalorder %s239, 7
        %s243 = scalar_select %p242, %s239, 7
        %s244 = smul.addr %s241, 8
        %s245 = sadd.s32 %s243, %s244
        %s246 = smul.addr %s245, 4
        %s247 = scalar_lea.vmem %s2, %s246
        %s248 = smul.u32 8, %s22
        %s249 = smul.u32 8, %s22
        %v250 = vld [vmem:[%s237] sm:$0xf]
        %v251 = vld [vmem:[%s237 + $0x4] sm:$0xf]
        %v252 = vld [vmem:[%s237 + $0x8] sm:$0xf]
        %v253 = vld [vmem:[%s237 + $0xc] sm:$0xf]
        %v254 = vld [vmem:[%s237 + $0x10] sm:$0xf]
        %v255 = vld [vmem:[%s237 + $0x14] sm:$0xf]
        %v256 = vld [vmem:[%s237 + $0x18] sm:$0xf]
        %v257 = vld [vmem:[%s237 + $0x1c] sm:$0xf]
        %v258 = vunpack.c.l.bf16 %v250
        %v259 = vunpack.c.l.bf16 %v251
        %v260 = vunpack.c.l.bf16 %v252
        %v261 = vunpack.c.l.bf16 %v253
        %v262 = vunpack.c.l.bf16 %v254
        %v263 = vunpack.c.l.bf16 %v255
        %v264 = vunpack.c.l.bf16 %v256
        %v265 = vunpack.c.l.bf16 %v257
        %v266 = vld [vmem:[%s228] sm:$0x1]
        %v268 = vlaneseq
        %v269 = vshrl.u32 %v268, 7
        %v270 = vsub.s32 0, %v269
        %v271 = vrot.slane %v266, %v270
        %v273 = vmul.f32 %v258, %v271
        %v274 = vmul.f32 %v259, %v271
        %v275 = vmul.f32 %v260, %v271
        %v276 = vmul.f32 %v261, %v271
        %v277 = vmul.f32 %v262, %v271
        %v278 = vmul.f32 %v263, %v271
        %v279 = vmul.f32 %v264, %v271
        %v280 = vmul.f32 %v265, %v271
        %v281 = vld [vmem:[%s247] sm:$0xf]
        %v282 = vld [vmem:[%s247 + $0x4] sm:$0xf]
        %v283 = vld [vmem:[%s247 + $0x8] sm:$0xf]
        %v284 = vld [vmem:[%s247 + $0xc] sm:$0xf]
        %v285 = vld [vmem:[%s247 + $0x10] sm:$0xf]
        %v286 = vld [vmem:[%s247 + $0x14] sm:$0xf]
        %v287 = vld [vmem:[%s247 + $0x18] sm:$0xf]
        %v288 = vld [vmem:[%s247 + $0x1c] sm:$0xf]
        %v289 = vunpack.c.l.bf16 %v281
        %v290 = vunpack.c.l.bf16 %v282
        %v291 = vunpack.c.l.bf16 %v283
        %v292 = vunpack.c.l.bf16 %v284
        %v293 = vunpack.c.l.bf16 %v285
        %v294 = vunpack.c.l.bf16 %v286
        %v295 = vunpack.c.l.bf16 %v287
        %v296 = vunpack.c.l.bf16 %v288
        %v297 = vadd.f32 %v273, %v289
        %v298 = vadd.f32 %v274, %v290
        %v299 = vadd.f32 %v275, %v291
        %v300 = vadd.f32 %v276, %v292
        %v301 = vadd.f32 %v277, %v293
        %v302 = vadd.f32 %v278, %v294
        %v303 = vadd.f32 %v279, %v295
        %v304 = vadd.f32 %v280, %v296
        %v305 = vmax.f32 %v297, 0.0
        %v306 = vmax.f32 %v298, 0.0
        %v307 = vmax.f32 %v299, 0.0
        %v308 = vmax.f32 %v300, 0.0
        %v309 = vmax.f32 %v301, 0.0
        %v310 = vmax.f32 %v302, 0.0
        %v311 = vmax.f32 %v303, 0.0
        %v312 = vmax.f32 %v304, 0.0
        %v313 = vpack.c.bf16 %v306, %v305
        %v314 = vpack.c.bf16 %v308, %v307
        %v315 = vpack.c.bf16 %v310, %v309
        %v316 = vpack.c.bf16 %v312, %v311
        %v321 = vunpack.c.l.b16 %v313
        %v322 = vunpack.c.h.b16 %v313
        %v323 = vunpack.c.l.b16 %v314
        %v324 = vunpack.c.h.b16 %v314
        %v325 = vunpack.c.l.b16 %v315
        %v326 = vunpack.c.h.b16 %v315
        %v327 = vunpack.c.l.b16 %v316
        %v328 = vunpack.c.h.b16 %v316
        %v329 = vpack.c.b16 %v321, %v321
        %v330 = vpack.c.b16 %v322, %v322
        %v331 = vpack.c.b16 %v323, %v323
        %v332 = vpack.c.b16 %v324, %v324
        %v333 = vpack.c.b16 %v325, %v325
        %v334 = vpack.c.b16 %v326, %v326
        %v335 = vpack.c.b16 %v327, %v327
        %v336 = vpack.c.b16 %v328, %v328
        %vm345 = vcmask 125952
        %346 = vst.msk [vmem:[%s225] sm:$0xf] %vm345, %v329
        %347 = vst.msk [vmem:[%s225 + $0x4] sm:$0xf] %vm345, %v330
        %348 = vst.msk [vmem:[%s225 + $0x8] sm:$0xf] %vm345, %v331
        %349 = vst.msk [vmem:[%s225 + $0xc] sm:$0xf] %vm345, %v332
        %350 = vst.msk [vmem:[%s225 + $0x10] sm:$0xf] %vm345, %v333
        %351 = vst.msk [vmem:[%s225 + $0x14] sm:$0xf] %vm345, %v334
        %352 = vst.msk [vmem:[%s225 + $0x18] sm:$0xf] %vm345, %v335
        %353 = vst.msk [vmem:[%s225 + $0x1c] sm:$0xf] %vm345, %v336
        %s354 = sand.u32 %s121, 1
        %s355 = scalar_lea.sflag [#allocation3], %s354
        %s356 = sand.u32 %s121, 1
        %s357 = smul.addr %s356, 32
        %s358 = scalar_lea.vmem [#allocation2], %s357
        // Predicated region
        $region33: #{bottleneck_forward.11} parent=31 // pred_check
          %p359 = pneg %p131
        $region34: #{bottleneck_forward.11} parent=31 // pred_check_branch
          %361 = sbr.rel (%p359) target = $region36
        $region35: #{bottleneck_forward.11} parent=31 // pred_region
          %s362 = smul.u32 8, %s22
          %s364 = ssub.s32 512, 512
          %365 = vsyncadd %s355, %s364
          %s366 = smul.addr %s21, 8
          %s367 = sadd.s32 %s362, %s366
          %s368 = smul.addr %s367, 64
          %s369 = scalar_lea.hbm %s3, %s368
          %s370 = sshll.u32 %s358, 4
          %s371 = int_to_ptr.vmem [resolvable:$true] %s370
          %376 = dma.vmem_to_hbm [thread:$0]  %s371, 512, %s369, %s355, 64, 64, 4
        $region36: #{bottleneck_forward.11} parent=31 // pred_fallthru
          _
      $region32: #{bottleneck_forward.11} parent=5 // pred_fallthru
        _
      %p377 = scmp.le.s32.totalorder 2, %s12
      // Predicated region
      $region37: #{bottleneck_forward.11} parent=5 // pred_check
        %p378 = pneg %p377
      $region38: #{bottleneck_forward.11} parent=5 // pred_check_branch
        %380 = sbr.rel (%p378) target = $region40
      $region39: #{bottleneck_forward.11} parent=5 // pred_region
        %s381 = ssub.s32 %s12, 2
        // Predicated region
        $region41: #{bottleneck_forward.11} parent=39 // pred_check
          %p382 = pneg %p137
        $region42: #{bottleneck_forward.11} parent=39 // pred_check_branch
          %384 = sbr.rel (%p382) target = $region44
        $region43: #{bottleneck_forward.11} parent=39 // pred_region
          %s385 = sand.u32 %s122, 1
          %s386 = scalar_lea.sflag [#allocation3], %s385
          %s387 = sand.u32 %s122, 1
          %s388 = smul.addr %s387, 32
          %s389 = scalar_lea.vmem [#allocation2], %s388
          %390 = dma.done %s386, 512
        $region44: #{bottleneck_forward.11} parent=39 // pred_fallthru
          _
      $region40: #{bottleneck_forward.11} parent=5 // pred_fallthru
        _
    $region6: #{bottleneck_forward.11} parent=1 // loop_footer
      %s16 = sadd.s32 1, %s12
    $region7: #{bottleneck_forward.11} parent=1 // loop_footer_branch
      %11 = sbr.rel target = $region3
    $region8: #{bottleneck_forward.11} parent=1 // loop_exit
      _
    %391 = vsyncpa [#allocation3], 1
    %s392 = scalar_lea.sflag [#allocation3], 1
    %393 = vsyncpa %s392, 1

// kernel: bottleneck_forward.9
$region0: #{bottleneck_forward.9}
  #allocation0 [shape = 'u32[]', space=smem, size = 0x4, offset = 0x4, fixed_abs, tag = 'smem constant byte address 0x4 - core index']
  #allocation1 [shape = 'u32[144,128]{1,0:T(1,128)}', space=vmem, size = 0x12000, scoped, tag = 'internal scratch']
  %s0 = inlined_call_operand.vmem [shape: bf16[2,64,4], index: 0, kind: input, shape index: {}]
  %s1 = inlined_call_operand.vmem [shape: bf16[4,16], index: 1, kind: input, shape index: {}]
  %s2 = inlined_call_operand.vmem [shape: f32[1,16], index: 2, kind: input, shape index: {}]
  %s3 = inlined_call_operand.vmem [shape: bf16[2,64,16], index: 3, kind: output, shape index: {0}]
  %s4 = inlined_call_operand.vmem [shape: f32[2,1,16], index: 4, kind: output, shape index: {1}]
  %5 = xla_tuple %s3, %s4
  %s6 = sld [smem:[#allocation0]]
  $region57: #{bottleneck_forward.9} parent=0
    _
  %s8 = ssub.s32 1, %s6
  %s9 = scalar_select 0, %s8, %s6
  loop: start=0, step=1, limit=4
  $region2: #{bottleneck_forward.9} parent=0 // loop_pre_header
    _
  $region3: #{bottleneck_forward.9} parent=0 // loop_header
    %s11 = sphi 0, %s15
    %p12 = scmp.ge.s32.totalorder %s11, 4
    %s18 = sphi 0, %s30
    %s19 = sphi 0, %s26
    %s20 = sphi 0, %s18
    %s21 = sphi 0, %s19
    %s22 = sphi 0, %s20
    %s23 = sphi 0, %s21
    %s35 = sphi 0, %s37
    %s38 = sphi 0, %s35
    %s39 = sphi 0, %s38
    %s55 = sphi 0, %s39
    %s59 = sphi 0, %s59
    %s61 = sphi 0, %s59
    %s62 = sphi 0, %s61
    %s76 = sphi 0, %s62
    %s80 = sphi 0, %s80
    %s82 = sphi 0, %s80
    %s83 = sphi 0, %s82
    %s97 = sphi 0, %s83
    %s105 = sphi 0, %s107
    %s108 = sphi 0, %s105
    %s109 = sphi 0, %s108
    %s125 = sphi 0, %s109
    %s131 = sphi 0, %s133
    %s134 = sphi 0, %s131
    %s135 = sphi 0, %s134
    %s151 = sphi 0, %s135
  $region4: #{bottleneck_forward.9} parent=0 // loop_header_branch
    %14 = sbr.rel (%p12) target = $region8
  $region5: #{bottleneck_forward.9} parent=0 // loop_body
    %s16 = ssub.s32 %s11, 1
    %s17 = ssub.s32 %s11, 2
    %s24 = sadd.s32 1, %s19
    %p25 = scmp.ge.s32.totalorder %s24, 1
    %s26 = scalar_select %p25, 0, %s24
    %s27 = sadd.s32 1, %s18
    %s28 = scalar_select %p25, %s27, %s18
    %p29 = scmp.ge.s32.totalorder %s28, 2
    %s30 = scalar_select %p29, 0, %s28
    %s31 = ssub.s32 %s18, %s30
    %s32 = ssub.s32 %s19, %s26
    %s33 = sor.u32 %s31, %s32
    %p34 = scmp.eq.s32.totalorder %s33, 0
    %s36 = sadd.s32 %s35, 1
    %s37 = scalar_select %p34, %s35, %s36
    %p40 = pneg %p34
    %p41 = scmp.eq.s32.totalorder %s11, 1
    %p42 = por %p40, %p41
    %p43 = scmp.ne.s32.totalorder %s35, %s38
    %p44 = scmp.eq.s32.totalorder %s11, 0
    %p45 = por %p43, %p44
    %p46 = scmp.ne.s32.totalorder %s35, %s38
    %p47 = scmp.eq.s32.totalorder %s16, 1
    %p48 = por %p46, %p47
    %p49 = scmp.ne.s32.totalorder %s38, %s39
    %p50 = scmp.eq.s32.totalorder %s16, 0
    %p51 = por %p49, %p50
    %p52 = scmp.ne.s32.totalorder %s38, %s39
    %p53 = scmp.eq.s32.totalorder %s17, 1
    %p54 = por %p52, %p53
    %p56 = scmp.ne.s32.totalorder %s39, %s55
    %p57 = scmp.eq.s32.totalorder %s17, 0
    %p58 = por %p56, %p57
    %s60 = sadd.s32 %s59, 1
    %p63 = scmp.eq.s32.totalorder %s11, 1
    %p64 = scmp.ne.s32.totalorder %s59, %s61
    %p65 = scmp.eq.s32.totalorder %s11, 0
    %p66 = por %p64, %p65
    %p67 = scmp.ne.s32.totalorder %s59, %s61
    %p68 = scmp.eq.s32.totalorder %s16, 1
    %p69 = por %p67, %p68
    %p70 = scmp.ne.s32.totalorder %s61, %s62
    %p71 = scmp.eq.s32.totalorder %s16, 0
    %p72 = por %p70, %p71
    %p73 = scmp.ne.s32.totalorder %s61, %s62
    %p74 = scmp.eq.s32.totalorder %s17, 1
    %p75 = por %p73, %p74
    %p77 = scmp.ne.s32.totalorder %s62, %s76
    %p78 = scmp.eq.s32.totalorder %s17, 0
    %p79 = por %p77, %p78
    %s81 = sadd.s32 %s80, 1
    %p84 = scmp.eq.s32.totalorder %s11, 1
    %p85 = scmp.ne.s32.totalorder %s80, %s82
    %p86 = scmp.eq.s32.totalorder %s11, 0
    %p87 = por %p85, %p86
    %p88 = scmp.ne.s32.totalorder %s80, %s82
    %p89 = scmp.eq.s32.totalorder %s16, 1
    %p90 = por %p88, %p89
    %p91 = scmp.ne.s32.totalorder %s82, %s83
    %p92 = scmp.eq.s32.totalorder %s16, 0
    %p93 = por %p91, %p92
    %p94 = scmp.ne.s32.totalorder %s82, %s83
    %p95 = scmp.eq.s32.totalorder %s17, 1
    %p96 = por %p94, %p95
    %p98 = scmp.ne.s32.totalorder %s83, %s97
    %p99 = scmp.eq.s32.totalorder %s17, 0
    %p100 = por %p98, %p99
    %s101 = ssub.s32 %s18, %s30
    %s102 = ssub.s32 %s19, %s26
    %s103 = sor.u32 %s101, %s102
    %p104 = scmp.eq.s32.totalorder %s103, 0
    %s106 = sadd.s32 %s105, 1
    %s107 = scalar_select %p104, %s105, %s106
    %p110 = pneg %p104
    %p111 = scmp.eq.s32.totalorder %s11, 1
    %p112 = por %p110, %p111
    %p113 = scmp.ne.s32.totalorder %s105, %s108
    %p114 = scmp.eq.s32.totalorder %s11, 0
    %p115 = por %p113, %p114
    %p116 = scmp.ne.s32.totalorder %s105, %s108
    %p117 = scmp.eq.s32.totalorder %s16, 1
    %p118 = por %p116, %p117
    %p119 = scmp.ne.s32.totalorder %s108, %s109
    %p120 = scmp.eq.s32.totalorder %s16, 0
    %p121 = por %p119, %p120
    %p122 = scmp.ne.s32.totalorder %s108, %s109
    %p123 = scmp.eq.s32.totalorder %s17, 1
    %p124 = por %p122, %p123
    %p126 = scmp.ne.s32.totalorder %s109, %s125
    %p127 = scmp.eq.s32.totalorder %s17, 0
    %p128 = por %p126, %p127
    %s129 = ssub.s32 %s18, %s30
    %p130 = scmp.eq.s32.totalorder %s129, 0
    %s132 = sadd.s32 %s131, 1
    %s133 = scalar_select %p130, %s131, %s132
    %p136 = pneg %p130
    %p137 = scmp.eq.s32.totalorder %s11, 1
    %p138 = por %p136, %p137
    %p139 = scmp.ne.s32.totalorder %s131, %s134
    %p140 = scmp.eq.s32.totalorder %s11, 0
    %p141 = por %p139, %p140
    %p142 = scmp.ne.s32.totalorder %s131, %s134
    %p143 = scmp.eq.s32.totalorder %s16, 1
    %p144 = por %p142, %p143
    %p145 = scmp.ne.s32.totalorder %s134, %s135
    %p146 = scmp.eq.s32.totalorder %s16, 0
    %p147 = por %p145, %p146
    %p148 = scmp.ne.s32.totalorder %s134, %s135
    %p149 = scmp.eq.s32.totalorder %s17, 1
    %p150 = por %p148, %p149
    %p152 = scmp.ne.s32.totalorder %s135, %s151
    %p153 = scmp.eq.s32.totalorder %s17, 0
    %p154 = por %p152, %p153
    %p155 = scmp.le.s32.totalorder 1, %s11
    %p156 = scmp.lt.s32.totalorder %s11, 3
    %p157 = pnand %p155, %p156
    %p158 = pneg %p157
    // Predicated region
    $region9: #{bottleneck_forward.9} parent=5 // pred_check
      _
    $region10: #{bottleneck_forward.9} parent=5 // pred_check_branch
      %160 = sbr.rel (%p157) target = $region12
    $region11: #{bottleneck_forward.9} parent=5 // pred_region
      %s161 = ssub.s32 %s11, 1
      // Predicated region
      $region13: #{bottleneck_forward.9} parent=11 // pred_check
        %p162 = pneg %p72
      $region14: #{bottleneck_forward.9} parent=11 // pred_check_branch
        %164 = sbr.rel (%p162) target = $region16
      $region15: #{bottleneck_forward.9} parent=11 // pred_region
        _
      $region16: #{bottleneck_forward.9} parent=11 // pred_fallthru
        _
      // Predicated region
      $region17: #{bottleneck_forward.9} parent=11 // pred_check
        %p165 = pneg %p93
      $region18: #{bottleneck_forward.9} parent=11 // pred_check_branch
        %167 = sbr.rel (%p165) target = $region20
      $region19: #{bottleneck_forward.9} parent=11 // pred_region
        _
      $region20: #{bottleneck_forward.9} parent=11 // pred_fallthru
        _
    $region12: #{bottleneck_forward.9} parent=5 // pred_fallthru
      _
    %p168 = scmp.lt.s32.totalorder %s11, 2
    // Predicated region
    $region21: #{bottleneck_forward.9} parent=5 // pred_check
      %p169 = pneg %p168
    $region22: #{bottleneck_forward.9} parent=5 // pred_check_branch
      %171 = sbr.rel (%p169) target = $region24
    $region23: #{bottleneck_forward.9} parent=5 // pred_region
      // Predicated region
      $region25: #{bottleneck_forward.9} parent=23 // pred_check
        %p172 = pneg %p45
      $region26: #{bottleneck_forward.9} parent=23 // pred_check_branch
        %174 = sbr.rel (%p172) target = $region28
      $region27: #{bottleneck_forward.9} parent=23 // pred_region
        %s175 = smul.u32 8, %s19
        %p176 = scmp.lt.s32.totalorder %s18, 1
        %s177 = scalar_select %p176, %s18, 1
        %p178 = scmp.lt.s32.totalorder %s175, 7
        %s179 = scalar_select %p178, %s175, 7
        %s180 = smul.addr %s177, 8
        %s181 = sadd.s32 %s179, %s180
        %s182 = smul.addr %s181, 4
        %s183 = scalar_lea.vmem %s0, %s182
        %s184 = smul.u32 8, %s19
      $region28: #{bottleneck_forward.9} parent=23 // pred_fallthru
        _
    $region24: #{bottleneck_forward.9} parent=5 // pred_fallthru
      _
    %p185 = scmp.le.s32.totalorder 1, %s11
    %p186 = scmp.lt.s32.totalorder %s11, 3
    %p187 = pnand %p185, %p186
    %p188 = pneg %p187
    // Predicated region
    $region29: #{bottleneck_forward.9} parent=5 // pred_check
      _
    $region30: #{bottleneck_forward.9} parent=5 // pred_check_branch
      %190 = sbr.rel (%p187) target = $region32
    $region31: #{bottleneck_forward.9} parent=5 // pred_region
      %s191 = ssub.s32 %s11, 1
      %s192 = smul.u32 8, %s21
      %p193 = scmp.lt.s32.totalorder %s20, 1
      %s194 = scalar_select %p193, %s20, 1
      %p195 = scmp.lt.s32.totalorder %s192, 7
      %s196 = scalar_select %p195, %s192, 7
      %s197 = smul.addr %s194, 8
      %s198 = sadd.s32 %s196, %s197
      %s199 = smul.addr %s198, 4
      %s200 = scalar_lea.vmem %s0, %s199
      %p201 = pneg %p51
      %p202 = pneg %p48
      %p203 = pneg %p72
      %p204 = pneg %p69
      %p205 = pneg %p93
      %p206 = pneg %p90
      %p207 = pneg %p121
      %p208 = pneg %p118
      %s209 = smul.u32 8, %s21
      %p210 = scmp.lt.s32.totalorder %s20, 1
      %s211 = scalar_select %p210, %s20, 1
      %p212 = scmp.lt.s32.totalorder %s209, 7
      %s213 = scalar_select %p212, %s209, 7
      %s214 = smul.addr %s211, 8
      %s215 = sadd.s32 %s213, %s214
      %s216 = smul.addr %s215, 4
      %s217 = scalar_lea.vmem %s3, %s216
      %p218 = pneg %p147
      %p219 = pneg %p144
      %p220 = scmp.lt.s32.totalorder %s20, 1
      %s221 = scalar_select %p220, %s20, 1
      %s222 = scalar_lea.vmem %s4, %s221
      %s223 = smul.u32 8, %s21
      %p224 = scmp.lt.s32.totalorder %s20, 1
      %s225 = scalar_select %p224, %s20, 1
      %p226 = scmp.lt.s32.totalorder %s223, 7
      %s227 = scalar_select %p226, %s223, 7
      %s228 = smul.addr %s225, 8
      %s229 = sadd.s32 %s227, %s228
      %s230 = smul.addr %s229, 4
      %s231 = scalar_lea.vmem %s0, %s230
      %s232 = smul.u32 8, %s21
      %s233 = smul.u32 8, %s21
      %p234 = scmp.lt.s32.totalorder %s20, 1
      %s235 = scalar_select %p234, %s20, 1
      %p236 = scmp.lt.s32.totalorder %s233, 7
      %s237 = scalar_select %p236, %s233, 7
      %s238 = smul.addr %s235, 8
      %s239 = sadd.s32 %s237, %s238
      %s240 = smul.addr %s239, 4
      %s241 = scalar_lea.vmem %s3, %s240
      %s242 = smul.u32 8, %s21
      %p243 = scmp.lt.s32.totalorder %s20, 1
      %s244 = scalar_select %p243, %s20, 1
      %s245 = scalar_lea.vmem %s4, %s244
      %v247 = vld [vmem:[%s231] sm:$0xf]
      %v248 = vld [vmem:[%s231 + $0x4] sm:$0xf]
      %v249 = vld [vmem:[%s231 + $0x8] sm:$0xf]
      %v250 = vld [vmem:[%s231 + $0xc] sm:$0xf]
      %v251 = vld [vmem:[%s231 + $0x10] sm:$0xf]
      %v252 = vld [vmem:[%s231 + $0x14] sm:$0xf]
      %v253 = vld [vmem:[%s231 + $0x18] sm:$0xf]
      %v254 = vld [vmem:[%s231 + $0x1c] sm:$0xf]
      %v255 = vld [vmem:[%s1] sm:$0x3]
      %v256 = vld [vmem:[%s2] sm:$0x1]
      %v258 = vlaneseq
      %v259 = vshrl.u32 %v258, 7
      %v260 = vsub.s32 0, %v259
      %v261 = vrot.slane %v256, %v260
      %v271 = vunpack.c.l.b16 %v247
      %v272 = vunpack.c.l.b16 %v248
      %v273 = vunpack.c.l.b16 %v249
      %v274 = vunpack.c.l.b16 %v250
      %v275 = vunpack.c.l.b16 %v251
      %v276 = vunpack.c.l.b16 %v252
      %v277 = vunpack.c.l.b16 %v253
      %v278 = vunpack.c.l.b16 %v254
      %v279 = vpack.c.b16 %v272, %v271
      %v280 = vpack.c.b16 %v274, %v273
      %v281 = vpack.c.b16 %v276, %v275
      %v282 = vpack.c.b16 %v278, %v277
      %vm283 = vcmask 31744
      %v285 = vsel %vm283, %v279, 0
      %v288 = vsel %vm283, %v280, 0
      %v291 = vsel %vm283, %v281, 0
      %v294 = vsel %vm283, %v282, 0
      %vm296 = vcmask 1041408
      %v298 = vsel %vm296, %v255, 0
      %300 = vmatprep.subr.bf16.mxu0 0
      %301 = vmatpush1.bf16.msra.mxu0 %v298
      %302 = vmatprep.subr.bf16.mxu0 0
      %303 = vmatpush1.bf16.msra.mxu0 0
      %304 = vmatprep.subr.bf16.mxu0 0
      %305 = vmatpush1.bf16.msra.mxu0 0
      %306 = vmatprep.subr.bf16.mxu0 0
      %307 = vmatpush1.bf16.msra.mxu0 0
      %308 = vmatprep.subr.bf16.mxu0 0
      %309 = vmatpush1.bf16.msra.mxu0 0
      %310 = vmatprep.subr.bf16.mxu0 0
      %311 = vmatpush1.bf16.msra.mxu0 0
      %312 = vmatprep.subr.bf16.mxu0 0
      %313 = vmatpush1.bf16.msra.mxu0 0
      %314 = vmatprep.subr.bf16.mxu0 0
      %315 = vmatpush1.bf16.msra.mxu0 0
      %316 = vmatprep.subr.bf16.mxu0 0
      %317 = vmatpush1.bf16.msra.mxu0 0
      %318 = vmatprep.subr.bf16.mxu0 0
      %319 = vmatpush1.bf16.msra.mxu0 0
      %320 = vmatprep.subr.bf16.mxu0 0
      %321 = vmatpush1.bf16.msra.mxu0 0
      %322 = vmatprep.subr.bf16.mxu0 0
      %323 = vmatpush1.bf16.msra.mxu0 0
      %324 = vmatprep.subr.bf16.mxu0 0
      %325 = vmatpush1.bf16.msra.mxu0 0
      %326 = vmatprep.subr.bf16.mxu0 0
      %327 = vmatpush1.bf16.msra.mxu0 0
      %328 = vmatprep.subr.bf16.mxu0 0
      %329 = vmatpush1.bf16.msra.mxu0 0
      %330 = vmatprep.subr.bf16.mxu0 0
      %331 = vmatpush1.bf16.msra.mxu0 0
      %332 = vmatprep.mubr.bf16.mxu0 0
      %333 = vmatmul.mubr.bf16.gmra.mrb[0].mxu0 %v285
      %v334 = vpop.f32.mrb[0].mxu0
      %v335 = vadd.f32 %v261, %v334
      %v336 = vpop.f32.mrb[0].mxu0
      %v337 = vpop.f32.mrb[0].mxu0
      %v338 = vadd.f32 %v261, %v337
      %v339 = vpop.f32.mrb[0].mxu0
      %340 = vmatprep.mubr.bf16.mxu0 0
      %341 = vmatmul.mubr.bf16.gmra.mrb[0].mxu0 %v288
      %v342 = vpop.f32.mrb[0].mxu0
      %v343 = vadd.f32 %v261, %v342
      %v344 = vpop.f32.mrb[0].mxu0
      %v345 = vpop.f32.mrb[0].mxu0
      %v346 = vadd.f32 %v261, %v345
      %v347 = vpop.f32.mrb[0].mxu0
      %348 = vmatprep.mubr.bf16.mxu0 0
      %349 = vmatmul.mubr.bf16.gmra.mrb[0].mxu0 %v291
      %v350 = vpop.f32.mrb[0].mxu0
      %v351 = vadd.f32 %v261, %v350
      %v352 = vpop.f32.mrb[0].mxu0
      %v353 = vpop.f32.mrb[0].mxu0
      %v354 = vadd.f32 %v261, %v353
      %v355 = vpop.f32.mrb[0].mxu0
      %356 = vmatprep.mubr.bf16.mxu0 0
      %357 = vmatmul.mubr.bf16.gmra.mrb[0].mxu0 %v294
      %v358 = vpop.f32.mrb[0].mxu0
      %v359 = vadd.f32 %v261, %v358
      %v360 = vpop.f32.mrb[0].mxu0
      %v361 = vpop.f32.mrb[0].mxu0
      %v362 = vadd.f32 %v261, %v361
      %v363 = vpop.f32.mrb[0].mxu0
      %364 = vdwg.mxu0
      %v365 = vpack.c.bf16 %v338, %v335
      %v366 = vpack.c.bf16 %v346, %v343
      %v367 = vpack.c.bf16 %v354, %v351
      %v368 = vpack.c.bf16 %v362, %v359
      %v373 = vunpack.c.l.b16 %v365
      %v374 = vunpack.c.h.b16 %v365
      %v375 = vunpack.c.l.b16 %v366
      %v376 = vunpack.c.h.b16 %v366
      %v377 = vunpack.c.l.b16 %v367
      %v378 = vunpack.c.h.b16 %v367
      %v379 = vunpack.c.l.b16 %v368
      %v380 = vunpack.c.h.b16 %v368
      %v381 = vpack.c.b16 %v373, %v373
      %v382 = vpack.c.b16 %v374, %v374
      %v383 = vpack.c.b16 %v375, %v375
      %v384 = vpack.c.b16 %v376, %v376
      %v385 = vpack.c.b16 %v377, %v377
      %v386 = vpack.c.b16 %v378, %v378
      %v387 = vpack.c.b16 %v379, %v379
      %v388 = vpack.c.b16 %v380, %v380
      %vm397 = vcmask 125952
      %398 = vst.msk [vmem:[%s241] sm:$0xf] %vm397, %v381
      %399 = vst.msk [vmem:[%s241 + $0x4] sm:$0xf] %vm397, %v382
      %400 = vst.msk [vmem:[%s241 + $0x8] sm:$0xf] %vm397, %v383
      %401 = vst.msk [vmem:[%s241 + $0xc] sm:$0xf] %vm397, %v384
      %402 = vst.msk [vmem:[%s241 + $0x10] sm:$0xf] %vm397, %v385
      %403 = vst.msk [vmem:[%s241 + $0x14] sm:$0xf] %vm397, %v386
      %404 = vst.msk [vmem:[%s241 + $0x18] sm:$0xf] %vm397, %v387
      %405 = vst.msk [vmem:[%s241 + $0x1c] sm:$0xf] %vm397, %v388
      %p406 = scmp.eq.s32.totalorder %s21, 0
      // Predicated region
      $region33: #{bottleneck_forward.9} parent=31 // pred_check
        %p407 = pneg %p406
      $region34: #{bottleneck_forward.9} parent=31 // pred_check_branch
        %409 = sbr.rel (%p407) target = $region36
      $region35: #{bottleneck_forward.9} parent=31 // pred_region
        %vm410 = vcmask 122880
        %411 = vst.msk [vmem:[%s245] sm:$0x1] %vm410, 0.0
      $region36: #{bottleneck_forward.9} parent=31 // pred_fallthru
        _
      %v412 = vld [vmem:[%s245] sm:$0x1]
      %vm413 = vcmask 130048
      %v414 = vsel %vm413, %v335, 0.0
      %v415 = vsel %vm413, %v338, 0.0
      %v416 = vadd.f32 %v414, %v415
      %v417 = vsel %vm413, %v343, 0.0
      %v418 = vadd.f32 %v416, %v417
      %v419 = vsel %vm413, %v346, 0.0
      %v420 = vadd.f32 %v418, %v419
      %v421 = vsel %vm413, %v351, 0.0
      %v422 = vadd.f32 %v420, %v421
      %v423 = vsel %vm413, %v354, 0.0
      %v424 = vadd.f32 %v422, %v423
      %v425 = vsel %vm413, %v359, 0.0
      %v426 = vadd.f32 %v424, %v425
      %v427 = vsel %vm413, %v362, 0.0
      %v428 = vadd.f32 %v426, %v427
      %v429 = vrot.slane %v428, 4
      %v430 = vadd.f32 %v428, %v429
      %v431 = vrot.slane %v430, 2
      %v432 = vadd.f32 %v430, %v431
      %v433 = vrot.slane %v432, 1
      %v434 = vadd.f32 %v432, %v433
      %v435 = vadd.f32 %v412, %v434
      %vm436 = vcmask 122880
      %437 = vst.msk [vmem:[%s245] sm:$0x1] %vm436, %v435
      %s438 = smul.u32 8, %s21
      %p439 = scmp.lt.s32.totalorder %s20, 1
      %s440 = scalar_select %p439, %s20, 1
      %p441 = scmp.lt.s32.totalorder %s438, 7
      %s442 = scalar_select %p441, %s438, 7
      %s443 = smul.addr %s440, 8
      %s444 = sadd.s32 %s442, %s443
      %s445 = smul.addr %s444, 4
      %s446 = scalar_lea.vmem %s3, %s445
      %p447 = scmp.lt.s32.totalorder %s20, 1
      %s448 = scalar_select %p447, %s20, 1
      %s449 = scalar_lea.vmem %s4, %s448
      // Predicated region
      $region37: #{bottleneck_forward.9} parent=31 // pred_check
        %p450 = pneg %p118
      $region38: #{bottleneck_forward.9} parent=31 // pred_check_branch
        %452 = sbr.rel (%p450) target = $region40
      $region39: #{bottleneck_forward.9} parent=31 // pred_region
        %s453 = smul.u32 8, %s21
      $region40: #{bottleneck_forward.9} parent=31 // pred_fallthru
        _
      // Predicated region
      $region41: #{bottleneck_forward.9} parent=31 // pred_check
        %p454 = pneg %p144
      $region42: #{bottleneck_forward.9} parent=31 // pred_check_branch
        %456 = sbr.rel (%p454) target = $region44
      $region43: #{bottleneck_forward.9} parent=31 // pred_region
        _
      $region44: #{bottleneck_forward.9} parent=31 // pred_fallthru
        _
    $region32: #{bottleneck_forward.9} parent=5 // pred_fallthru
      _
    %p457 = scmp.le.s32.totalorder 2, %s11
    // Predicated region
    $region45: #{bottleneck_forward.9} parent=5 // pred_check
      %p458 = pneg %p457
    $region46: #{bottleneck_forward.9} parent=5 // pred_check_branch
      %460 = sbr.rel (%p458) target = $region48
    $region47: #{bottleneck_forward.9} parent=5 // pred_region
      %s461 = ssub.s32 %s11, 2
      // Predicated region
      $region49: #{bottleneck_forward.9} parent=47 // pred_check
        %p462 = pneg %p124
      $region50: #{bottleneck_forward.9} parent=47 // pred_check_branch
        %464 = sbr.rel (%p462) target = $region52
      $region51: #{bottleneck_forward.9} parent=47 // pred_region
        %s465 = smul.u32 8, %s23
        %p466 = scmp.lt.s32.totalorder %s22, 1
        %s467 = scalar_select %p466, %s22, 1
        %p468 = scmp.lt.s32.totalorder %s465, 7
        %s469 = scalar_select %p468, %s465, 7
        %s470 = smul.addr %s467, 8
        %s471 = sadd.s32 %s469, %s470
        %s472 = smul.addr %s471, 4
        %s473 = scalar_lea.vmem %s3, %s472
      $region52: #{bottleneck_forward.9} parent=47 // pred_fallthru
        _
      // Predicated region
      $region53: #{bottleneck_forward.9} parent=47 // pred_check
        %p474 = pneg %p150
      $region54: #{bottleneck_forward.9} parent=47 // pred_check_branch
        %476 = sbr.rel (%p474) target = $region56
      $region55: #{bottleneck_forward.9} parent=47 // pred_region
        %p477 = scmp.lt.s32.totalorder %s22, 1
        %s478 = scalar_select %p477, %s22, 1
        %s479 = scalar_lea.vmem %s4, %s478
      $region56: #{bottleneck_forward.9} parent=47 // pred_fallthru
        _
    $region48: #{bottleneck_forward.9} parent=5 // pred_fallthru
      _
  $region6: #{bottleneck_forward.9} parent=0 // loop_footer
    %s15 = sadd.s32 1, %s11
  $region7: #{bottleneck_forward.9} parent=0 // loop_footer_branch
    %10 = sbr.rel target = $region3
  $region8: #{bottleneck_forward.9} parent=0 // loop_exit
    _

// kernel: bottleneck_forward.8
$region0: #{bottleneck_forward.8}
  #allocation0 [shape = 'u32[]', space=smem, size = 0x4, offset = 0x4, fixed_abs, tag = 'smem constant byte address 0x4 - core index']
  #allocation1 [shape = 'u32[144,128]{1,0:T(1,128)}', space=vmem, size = 0x12000, scoped, tag = 'internal scratch']
  %s0 = inlined_call_operand.vmem [shape: bf16[2,2,80,12], index: 0, kind: input, shape index: {}]
  %s1 = inlined_call_operand.vmem [shape: bf16[3,12,4], index: 1, kind: input, shape index: {}]
  %s2 = inlined_call_operand.vmem [shape: f32[1,4], index: 2, kind: input, shape index: {}]
  %s3 = inlined_call_operand.vmem [shape: bf16[2,64,4], index: 3, kind: output, shape index: {}]
  %s4 = sld [smem:[#allocation0]]
  $region45: #{bottleneck_forward.8} parent=0
    _
  %s6 = ssub.s32 1, %s4
  %s7 = scalar_select 0, %s6, %s4
  loop: start=0, step=1, limit=4
  $region2: #{bottleneck_forward.8} parent=0 // loop_pre_header
    _
  $region3: #{bottleneck_forward.8} parent=0 // loop_header
    %s9 = sphi 0, %s13
    %p10 = scmp.ge.s32.totalorder %s9, 4
    %s16 = sphi 0, %s28
    %s17 = sphi 0, %s24
    %s18 = sphi 0, %s16
    %s19 = sphi 0, %s17
    %s20 = sphi 0, %s18
    %s21 = sphi 0, %s19
    %s31 = sphi 0, %s33
    %s34 = sphi 0, %s31
    %s35 = sphi 0, %s34
    %s51 = sphi 0, %s35
    %s55 = sphi 0, %s55
    %s57 = sphi 0, %s55
    %s58 = sphi 0, %s57
    %s72 = sphi 0, %s58
    %s76 = sphi 0, %s76
    %s78 = sphi 0, %s76
    %s79 = sphi 0, %s78
    %s93 = sphi 0, %s79
    %s101 = sphi 0, %s103
    %s104 = sphi 0, %s101
    %s105 = sphi 0, %s104
    %s121 = sphi 0, %s105
  $region4: #{bottleneck_forward.8} parent=0 // loop_header_branch
    %12 = sbr.rel (%p10) target = $region8
  $region5: #{bottleneck_forward.8} parent=0 // loop_body
    %s14 = ssub.s32 %s9, 1
    %s15 = ssub.s32 %s9, 2
    %s22 = sadd.s32 1, %s17
    %p23 = scmp.ge.s32.totalorder %s22, 1
    %s24 = scalar_select %p23, 0, %s22
    %s25 = sadd.s32 1, %s16
    %s26 = scalar_select %p23, %s25, %s16
    %p27 = scmp.ge.s32.totalorder %s26, 2
    %s28 = scalar_select %p27, 0, %s26
    %s29 = ssub.s32 %s16, %s28
    %p30 = scmp.eq.s32.totalorder %s29, 0
    %s32 = sadd.s32 %s31, 1
    %s33 = scalar_select %p30, %s31, %s32
    %p36 = pneg %p30
    %p37 = scmp.eq.s32.totalorder %s9, 1
    %p38 = por %p36, %p37
    %p39 = scmp.ne.s32.totalorder %s31, %s34
    %p40 = scmp.eq.s32.totalorder %s9, 0
    %p41 = por %p39, %p40
    %p42 = scmp.ne.s32.totalorder %s31, %s34
    %p43 = scmp.eq.s32.totalorder %s14, 1
    %p44 = por %p42, %p43
    %p45 = scmp.ne.s32.totalorder %s34, %s35
    %p46 = scmp.eq.s32.totalorder %s14, 0
    %p47 = por %p45, %p46
    %p48 = scmp.ne.s32.totalorder %s34, %s35
    %p49 = scmp.eq.s32.totalorder %s15, 1
    %p50 = por %p48, %p49
    %p52 = scmp.ne.s32.totalorder %s35, %s51
    %p53 = scmp.eq.s32.totalorder %s15, 0
    %p54 = por %p52, %p53
    %s56 = sadd.s32 %s55, 1
    %p59 = scmp.eq.s32.totalorder %s9, 1
    %p60 = scmp.ne.s32.totalorder %s55, %s57
    %p61 = scmp.eq.s32.totalorder %s9, 0
    %p62 = por %p60, %p61
    %p63 = scmp.ne.s32.totalorder %s55, %s57
    %p64 = scmp.eq.s32.totalorder %s14, 1
    %p65 = por %p63, %p64
    %p66 = scmp.ne.s32.totalorder %s57, %s58
    %p67 = scmp.eq.s32.totalorder %s14, 0
    %p68 = por %p66, %p67
    %p69 = scmp.ne.s32.totalorder %s57, %s58
    %p70 = scmp.eq.s32.totalorder %s15, 1
    %p71 = por %p69, %p70
    %p73 = scmp.ne.s32.totalorder %s58, %s72
    %p74 = scmp.eq.s32.totalorder %s15, 0
    %p75 = por %p73, %p74
    %s77 = sadd.s32 %s76, 1
    %p80 = scmp.eq.s32.totalorder %s9, 1
    %p81 = scmp.ne.s32.totalorder %s76, %s78
    %p82 = scmp.eq.s32.totalorder %s9, 0
    %p83 = por %p81, %p82
    %p84 = scmp.ne.s32.totalorder %s76, %s78
    %p85 = scmp.eq.s32.totalorder %s14, 1
    %p86 = por %p84, %p85
    %p87 = scmp.ne.s32.totalorder %s78, %s79
    %p88 = scmp.eq.s32.totalorder %s14, 0
    %p89 = por %p87, %p88
    %p90 = scmp.ne.s32.totalorder %s78, %s79
    %p91 = scmp.eq.s32.totalorder %s15, 1
    %p92 = por %p90, %p91
    %p94 = scmp.ne.s32.totalorder %s79, %s93
    %p95 = scmp.eq.s32.totalorder %s15, 0
    %p96 = por %p94, %p95
    %s97 = ssub.s32 %s16, %s28
    %s98 = ssub.s32 %s17, %s24
    %s99 = sor.u32 %s97, %s98
    %p100 = scmp.eq.s32.totalorder %s99, 0
    %s102 = sadd.s32 %s101, 1
    %s103 = scalar_select %p100, %s101, %s102
    %p106 = pneg %p100
    %p107 = scmp.eq.s32.totalorder %s9, 1
    %p108 = por %p106, %p107
    %p109 = scmp.ne.s32.totalorder %s101, %s104
    %p110 = scmp.eq.s32.totalorder %s9, 0
    %p111 = por %p109, %p110
    %p112 = scmp.ne.s32.totalorder %s101, %s104
    %p113 = scmp.eq.s32.totalorder %s14, 1
    %p114 = por %p112, %p113
    %p115 = scmp.ne.s32.totalorder %s104, %s105
    %p116 = scmp.eq.s32.totalorder %s14, 0
    %p117 = por %p115, %p116
    %p118 = scmp.ne.s32.totalorder %s104, %s105
    %p119 = scmp.eq.s32.totalorder %s15, 1
    %p120 = por %p118, %p119
    %p122 = scmp.ne.s32.totalorder %s105, %s121
    %p123 = scmp.eq.s32.totalorder %s15, 0
    %p124 = por %p122, %p123
    %p125 = scmp.le.s32.totalorder 1, %s9
    %p126 = scmp.lt.s32.totalorder %s9, 3
    %p127 = pnand %p125, %p126
    %p128 = pneg %p127
    // Predicated region
    $region9: #{bottleneck_forward.8} parent=5 // pred_check
      _
    $region10: #{bottleneck_forward.8} parent=5 // pred_check_branch
      %130 = sbr.rel (%p127) target = $region12
    $region11: #{bottleneck_forward.8} parent=5 // pred_region
      %s131 = ssub.s32 %s9, 1
      // Predicated region
      $region13: #{bottleneck_forward.8} parent=11 // pred_check
        %p132 = pneg %p68
      $region14: #{bottleneck_forward.8} parent=11 // pred_check_branch
        %134 = sbr.rel (%p132) target = $region16
      $region15: #{bottleneck_forward.8} parent=11 // pred_region
        _
      $region16: #{bottleneck_forward.8} parent=11 // pred_fallthru
        _
      // Predicated region
      $region17: #{bottleneck_forward.8} parent=11 // pred_check
        %p135 = pneg %p89
      $region18: #{bottleneck_forward.8} parent=11 // pred_check_branch
        %137 = sbr.rel (%p135) target = $region20
      $region19: #{bottleneck_forward.8} parent=11 // pred_region
        _
      $region20: #{bottleneck_forward.8} parent=11 // pred_fallthru
        _
    $region12: #{bottleneck_forward.8} parent=5 // pred_fallthru
      _
    %p138 = scmp.lt.s32.totalorder %s9, 2
    // Predicated region
    $region21: #{bottleneck_forward.8} parent=5 // pred_check
      %p139 = pneg %p138
    $region22: #{bottleneck_forward.8} parent=5 // pred_check_branch
      %141 = sbr.rel (%p139) target = $region24
    $region23: #{bottleneck_forward.8} parent=5 // pred_region
      // Predicated region
      $region25: #{bottleneck_forward.8} parent=23 // pred_check
        %p142 = pneg %p41
      $region26: #{bottleneck_forward.8} parent=23 // pred_check_branch
        %144 = sbr.rel (%p142) target = $region28
      $region27: #{bottleneck_forward.8} parent=23 // pred_region
        %p145 = scmp.lt.s32.totalorder %s16, 1
        %s146 = scalar_select %p145, %s16, 1
        %s147 = smul.addr %s146, 20
        %s148 = smul.addr %s147, 4
        %s149 = scalar_lea.vmem %s0, %s148
      $region28: #{bottleneck_forward.8} parent=23 // pred_fallthru
        _
    $region24: #{bottleneck_forward.8} parent=5 // pred_fallthru
      _
    %p150 = scmp.le.s32.totalorder 1, %s9
    %p151 = scmp.lt.s32.totalorder %s9, 3
    %p152 = pnand %p150, %p151
    %p153 = pneg %p152
    // Predicated region
    $region29: #{bottleneck_forward.8} parent=5 // pred_check
      _
    $region30: #{bottleneck_forward.8} parent=5 // pred_check_branch
      %155 = sbr.rel (%p152) target = $region32
    $region31: #{bottleneck_forward.8} parent=5 // pred_region
      %s156 = ssub.s32 %s9, 1
      %p157 = scmp.lt.s32.totalorder %s18, 1
      %s158 = scalar_select %p157, %s18, 1
      %s159 = smul.addr %s158, 20
      %s160 = smul.addr %s159, 4
      %s161 = scalar_lea.vmem %s0, %s160
      %p162 = pneg %p47
      %p163 = pneg %p44
      %p164 = pneg %p68
      %p165 = pneg %p65
      %p166 = pneg %p89
      %p167 = pneg %p86
      %p168 = pneg %p117
      %p169 = pneg %p114
      %s170 = smul.u32 8, %s19
      %p171 = scmp.lt.s32.totalorder %s18, 1
      %s172 = scalar_select %p171, %s18, 1
      %p173 = scmp.lt.s32.totalorder %s170, 7
      %s174 = scalar_select %p173, %s170, 7
      %s175 = smul.addr %s172, 8
      %s176 = sadd.s32 %s174, %s175
      %s177 = smul.addr %s176, 4
      %s178 = scalar_lea.vmem %s3, %s177
      %p179 = scmp.lt.s32.totalorder %s18, 1
      %s180 = scalar_select %p179, %s18, 1
      %s181 = smul.addr %s180, 20
      %s182 = smul.addr %s181, 4
      %s183 = scalar_lea.vmem %s0, %s182
      %s184 = smul.u32 8, %s19
      %p185 = scmp.lt.s32.totalorder %s18, 1
      %s186 = scalar_select %p185, %s18, 1
      %p187 = scmp.lt.s32.totalorder %s184, 7
      %s188 = scalar_select %p187, %s184, 7
      %s189 = smul.addr %s186, 8
      %s190 = sadd.s32 %s188, %s189
      %s191 = smul.addr %s190, 4
      %s192 = scalar_lea.vmem %s3, %s191
      %s193 = smul.u32 8, %s19
      %s195 = smul.u32 %s19, 64
      %s196 = sshra.s32 %s195, 3
      %s197 = sand.u32 %s195, 7
      %s198 = smul.addr %s196, 4
      %s199 = scalar_lea.vmem %s183, %s198
      %v200 = vld [vmem:[%s199] sm:$0xf]
      %v201 = vld [vmem:[%s199 + $0x4] sm:$0xf]
      %v202 = vld [vmem:[%s199 + $0x8] sm:$0xf]
      %v203 = vld [vmem:[%s199 + $0xc] sm:$0xf]
      %v204 = vld [vmem:[%s199 + $0x10] sm:$0xf]
      %v205 = vld [vmem:[%s199 + $0x14] sm:$0xf]
      %v206 = vld [vmem:[%s199 + $0x18] sm:$0xf]
      %v207 = vld [vmem:[%s199 + $0x1c] sm:$0xf]
      %v208 = vld [vmem:[%s1] sm:$0xf]
      %v209 = vld [vmem:[%s1 + $0x4] sm:$0x3]
      %s210 = sadd.s32 %s196, 10
      %s211 = smul.addr %s210, 4
      %s212 = scalar_lea.vmem %s183, %s211
      %v213 = vld [vmem:[%s212] sm:$0xf]
      %v214 = vld [vmem:[%s212 + $0x4] sm:$0xf]
      %v215 = vld [vmem:[%s212 + $0x8] sm:$0xf]
      %v216 = vld [vmem:[%s212 + $0xc] sm:$0xf]
      %v217 = vld [vmem:[%s212 + $0x10] sm:$0xf]
      %v218 = vld [vmem:[%s212 + $0x14] sm:$0xf]
      %v219 = vld [vmem:[%s212 + $0x18] sm:$0xf]
      %v220 = vld [vmem:[%s212 + $0x1c] sm:$0xf]
      %s221 = scalar_lea.vmem %s1, 8
      %v222 = vld [vmem:[%s221] sm:$0xf]
      %v223 = vld [vmem:[%s221 + $0x4] sm:$0x3]
      %v232 = vunpack.c.l.b16 %v213
      %v233 = vunpack.c.l.b16 %v214
      %v234 = vunpack.c.l.b16 %v215
      %v235 = vunpack.c.l.b16 %v216
      %v236 = vunpack.c.l.b16 %v217
      %v237 = vunpack.c.l.b16 %v218
      %v238 = vunpack.c.l.b16 %v219
      %v239 = vunpack.c.l.b16 %v220
      %v240 = vpack.c.b16 %v233, %v232
      %v241 = vpack.c.b16 %v235, %v234
      %v242 = vpack.c.b16 %v237, %v236
      %v243 = vpack.c.b16 %v239, %v238
      %v246 = vunpack.c.l.b16 %v222
      %v247 = vunpack.c.l.b16 %v223
      %v248 = vpack.c.b16 %v247, %v246
      %vm249 = vcmask 97280
      %v251 = vsel %vm249, %v240, 0
      %v254 = vsel %vm249, %v241, 0
      %v257 = vsel %vm249, %v242, 0
      %v260 = vsel %vm249, %v243, 0
      %vm262 = vcmask 1045504
      %v264 = vsel %vm262, %v248, 0
      %266 = vmatprep.subr.bf16.mxu0 0
      %267 = vmatpush1.bf16.msra.mxu0 %v264
      %268 = vmatprep.subr.bf16.mxu0 0
      %269 = vmatpush1.bf16.msra.mxu0 0
      %270 = vmatprep.subr.bf16.mxu0 0
      %271 = vmatpush1.bf16.msra.mxu0 0
      %272 = vmatprep.subr.bf16.mxu0 0
      %273 = vmatpush1.bf16.msra.mxu0 0
      %274 = vmatprep.subr.bf16.mxu0 0
      %275 = vmatpush1.bf16.msra.mxu0 0
      %276 = vmatprep.subr.bf16.mxu0 0
      %277 = vmatpush1.bf16.msra.mxu0 0
      %278 = vmatprep.subr.bf16.mxu0 0
      %279 = vmatpush1.bf16.msra.mxu0 0
      %280 = vmatprep.subr.bf16.mxu0 0
      %281 = vmatpush1.bf16.msra.mxu0 0
      %282 = vmatprep.subr.bf16.mxu0 0
      %283 = vmatpush1.bf16.msra.mxu0 0
      %284 = vmatprep.subr.bf16.mxu0 0
      %285 = vmatpush1.bf16.msra.mxu0 0
      %286 = vmatprep.subr.bf16.mxu0 0
      %287 = vmatpush1.bf16.msra.mxu0 0
      %288 = vmatprep.subr.bf16.mxu0 0
      %289 = vmatpush1.bf16.msra.mxu0 0
      %290 = vmatprep.subr.bf16.mxu0 0
      %291 = vmatpush1.bf16.msra.mxu0 0
      %292 = vmatprep.subr.bf16.mxu0 0
      %293 = vmatpush1.bf16.msra.mxu0 0
      %294 = vmatprep.subr.bf16.mxu0 0
      %295 = vmatpush1.bf16.msra.mxu0 0
      %296 = vmatprep.subr.bf16.mxu0 0
      %297 = vmatpush1.bf16.msra.mxu0 0
      %298 = vmatprep.mubr.bf16.mxu0 0
      %299 = vmatmul.mubr.bf16.gmra.mrb[0].mxu0 %v251
      %v300 = vpop.f32.mrb[0].mxu0
      %v301 = vadd.f32 0.0, %v300
      %v302 = vpop.f32.mrb[0].mxu0
      %v303 = vpop.f32.mrb[0].mxu0
      %v304 = vadd.f32 0.0, %v303
      %v305 = vpop.f32.mrb[0].mxu0
      %306 = vmatprep.mubr.bf16.mxu0 0
      %307 = vmatmul.mubr.bf16.gmra.mrb[0].mxu0 %v254
      %v308 = vpop.f32.mrb[0].mxu0
      %v309 = vadd.f32 0.0, %v308
      %v310 = vpop.f32.mrb[0].mxu0
      %v311 = vpop.f32.mrb[0].mxu0
      %v312 = vadd.f32 0.0, %v311
      %v313 = vpop.f32.mrb[0].mxu0
      %314 = vmatprep.mubr.bf16.mxu0 0
      %315 = vmatmul.mubr.bf16.gmra.mrb[0].mxu0 %v257
      %v316 = vpop.f32.mrb[0].mxu0
      %v317 = vadd.f32 0.0, %v316
      %v318 = vpop.f32.mrb[0].mxu0
      %v319 = vpop.f32.mrb[0].mxu0
      %v320 = vadd.f32 0.0, %v319
      %v321 = vpop.f32.mrb[0].mxu0
      %322 = vmatprep.mubr.bf16.mxu0 0
      %323 = vmatmul.mubr.bf16.gmra.mrb[0].mxu0 %v260
      %v324 = vpop.f32.mrb[0].mxu0
      %v325 = vadd.f32 0.0, %v324
      %v326 = vpop.f32.mrb[0].mxu0
      %v327 = vpop.f32.mrb[0].mxu0
      %v328 = vadd.f32 0.0, %v327
      %v329 = vpop.f32.mrb[0].mxu0
      %330 = vdwg.mxu0
      %v339 = vunpack.c.l.b16 %v200
      %v340 = vunpack.c.l.b16 %v201
      %v341 = vunpack.c.l.b16 %v202
      %v342 = vunpack.c.l.b16 %v203
      %v343 = vunpack.c.l.b16 %v204
      %v344 = vunpack.c.l.b16 %v205
      %v345 = vunpack.c.l.b16 %v206
      %v346 = vunpack.c.l.b16 %v207
      %v347 = vpack.c.b16 %v340, %v339
      %v348 = vpack.c.b16 %v342, %v341
      %v349 = vpack.c.b16 %v344, %v343
      %v350 = vpack.c.b16 %v346, %v345
      %v353 = vunpack.c.l.b16 %v208
      %v354 = vunpack.c.l.b16 %v209
      %v355 = vpack.c.b16 %v354, %v353
      %v357 = vsel %vm249, %v347, 0
      %v360 = vsel %vm249, %v348, 0
      %v363 = vsel %vm249, %v349, 0
      %v366 = vsel %vm249, %v350, 0
      %v369 = vsel %vm262, %v355, 0
      %371 = vmatprep.subr.bf16.mxu0 0
      %372 = vmatpush1.bf16.msra.mxu0 %v369
      %373 = vmatprep.subr.bf16.mxu0 0
      %374 = vmatpush1.bf16.msra.mxu0 0
      %375 = vmatprep.subr.bf16.mxu0 0
      %376 = vmatpush1.bf16.msra.mxu0 0
      %377 = vmatprep.subr.bf16.mxu0 0
      %378 = vmatpush1.bf16.msra.mxu0 0
      %379 = vmatprep.subr.bf16.mxu0 0
      %380 = vmatpush1.bf16.msra.mxu0 0
      %381 = vmatprep.subr.bf16.mxu0 0
      %382 = vmatpush1.bf16.msra.mxu0 0
      %383 = vmatprep.subr.bf16.mxu0 0
      %384 = vmatpush1.bf16.msra.mxu0 0
      %385 = vmatprep.subr.bf16.mxu0 0
      %386 = vmatpush1.bf16.msra.mxu0 0
      %387 = vmatprep.subr.bf16.mxu0 0
      %388 = vmatpush1.bf16.msra.mxu0 0
      %389 = vmatprep.subr.bf16.mxu0 0
      %390 = vmatpush1.bf16.msra.mxu0 0
      %391 = vmatprep.subr.bf16.mxu0 0
      %392 = vmatpush1.bf16.msra.mxu0 0
      %393 = vmatprep.subr.bf16.mxu0 0
      %394 = vmatpush1.bf16.msra.mxu0 0
      %395 = vmatprep.subr.bf16.mxu0 0
      %396 = vmatpush1.bf16.msra.mxu0 0
      %397 = vmatprep.subr.bf16.mxu0 0
      %398 = vmatpush1.bf16.msra.mxu0 0
      %399 = vmatprep.subr.bf16.mxu0 0
      %400 = vmatpush1.bf16.msra.mxu0 0
      %401 = vmatprep.subr.bf16.mxu0 0
      %402 = vmatpush1.bf16.msra.mxu0 0
      %403 = vmatprep.mubr.bf16.mxu0 0
      %404 = vmatmul.mubr.bf16.gmra.mrb[0].mxu0 %v357
      %v405 = vpop.f32.mrb[0].mxu0
      %v406 = vadd.f32 %v301, %v405
      %v407 = vpop.f32.mrb[0].mxu0
      %v408 = vpop.f32.mrb[0].mxu0
      %v409 = vadd.f32 %v304, %v408
      %v410 = vpop.f32.mrb[0].mxu0
      %411 = vmatprep.mubr.bf16.mxu0 0
      %412 = vmatmul.mubr.bf16.gmra.mrb[0].mxu0 %v360
      %v413 = vpop.f32.mrb[0].mxu0
      %v414 = vadd.f32 %v309, %v413
      %v415 = vpop.f32.mrb[0].mxu0
      %v416 = vpop.f32.mrb[0].mxu0
      %v417 = vadd.f32 %v312, %v416
      %v418 = vpop.f32.mrb[0].mxu0
      %419 = vmatprep.mubr.bf16.mxu0 0
      %420 = vmatmul.mubr.bf16.gmra.mrb[0].mxu0 %v363
      %v421 = vpop.f32.mrb[0].mxu0
      %v422 = vadd.f32 %v317, %v421
      %v423 = vpop.f32.mrb[0].mxu0
      %v424 = vpop.f32.mrb[0].mxu0
      %v425 = vadd.f32 %v320, %v424
      %v426 = vpop.f32.mrb[0].mxu0
      %427 = vmatprep.mubr.bf16.mxu0 0
      %428 = vmatmul.mubr.bf16.gmra.mrb[0].mxu0 %v366
      %v429 = vpop.f32.mrb[0].mxu0
      %v430 = vadd.f32 %v325, %v429
      %v431 = vpop.f32.mrb[0].mxu0
      %v432 = vpop.f32.mrb[0].mxu0
      %v433 = vadd.f32 %v328, %v432
      %v434 = vpop.f32.mrb[0].mxu0
      %435 = vdwg.mxu0
      %s436 = sadd.s32 %s195, 8
      %s437 = sshra.s32 %s436, 3
      %s438 = sand.u32 %s436, 7
      %s439 = smul.addr %s437, 4
      %s440 = scalar_lea.vmem %s183, %s439
      %v441 = vld [vmem:[%s440] sm:$0xf]
      %v442 = vld [vmem:[%s440 + $0x4] sm:$0xf]
      %v443 = vld [vmem:[%s440 + $0x8] sm:$0xf]
      %v444 = vld [vmem:[%s440 + $0xc] sm:$0xf]
      %v445 = vld [vmem:[%s440 + $0x10] sm:$0xf]
      %v446 = vld [vmem:[%s440 + $0x14] sm:$0xf]
      %v447 = vld [vmem:[%s440 + $0x18] sm:$0xf]
      %v448 = vld [vmem:[%s440 + $0x1c] sm:$0xf]
      %s449 = scalar_lea.vmem %s1, 16
      %v450 = vld [vmem:[%s449] sm:$0xf]
      %v451 = vld [vmem:[%s449 + $0x4] sm:$0x3]
      %v460 = vunpack.c.l.b16 %v441
      %v461 = vunpack.c.l.b16 %v442
      %v462 = vunpack.c.l.b16 %v443
      %v463 = vunpack.c.l.b16 %v444
      %v464 = vunpack.c.l.b16 %v445
      %v465 = vunpack.c.l.b16 %v446
      %v466 = vunpack.c.l.b16 %v447
      %v467 = vunpack.c.l.b16 %v448
      %v468 = vpack.c.b16 %v461, %v460
      %v469 = vpack.c.b16 %v463, %v462
      %v470 = vpack.c.b16 %v465, %v464
      %v471 = vpack.c.b16 %v467, %v466
      %v474 = vunpack.c.l.b16 %v450
      %v475 = vunpack.c.l.b16 %v451
      %v476 = vpack.c.b16 %v475, %v474
      %v478 = vsel %vm249, %v468, 0
      %v481 = vsel %vm249, %v469, 0
      %v484 = vsel %vm249, %v470, 0
      %v487 = vsel %vm249, %v471, 0
      %v490 = vsel %vm262, %v476, 0
      %492 = vmatprep.subr.bf16.mxu0 0
      %493 = vmatpush1.bf16.msra.mxu0 %v490
      %494 = vmatprep.subr.bf16.mxu0 0
      %495 = vmatpush1.bf16.msra.mxu0 0
      %496 = vmatprep.subr.bf16.mxu0 0
      %497 = vmatpush1.bf16.msra.mxu0 0
      %498 = vmatprep.subr.bf16.mxu0 0
      %499 = vmatpush1.bf16.msra.mxu0 0
      %500 = vmatprep.subr.bf16.mxu0 0
      %501 = vmatpush1.bf16.msra.mxu0 0
      %502 = vmatprep.subr.bf16.mxu0 0
      %503 = vmatpush1.bf16.msra.mxu0 0
      %504 = vmatprep.subr.bf16.mxu0 0
      %505 = vmatpush1.bf16.msra.mxu0 0
      %506 = vmatprep.subr.bf16.mxu0 0
      %507 = vmatpush1.bf16.msra.mxu0 0
      %508 = vmatprep.subr.bf16.mxu0 0
      %509 = vmatpush1.bf16.msra.mxu0 0
      %510 = vmatprep.subr.bf16.mxu0 0
      %511 = vmatpush1.bf16.msra.mxu0 0
      %512 = vmatprep.subr.bf16.mxu0 0
      %513 = vmatpush1.bf16.msra.mxu0 0
      %514 = vmatprep.subr.bf16.mxu0 0
      %515 = vmatpush1.bf16.msra.mxu0 0
      %516 = vmatprep.subr.bf16.mxu0 0
      %517 = vmatpush1.bf16.msra.mxu0 0
      %518 = vmatprep.subr.bf16.mxu0 0
      %519 = vmatpush1.bf16.msra.mxu0 0
      %520 = vmatprep.subr.bf16.mxu0 0
      %521 = vmatpush1.bf16.msra.mxu0 0
      %522 = vmatprep.subr.bf16.mxu0 0
      %523 = vmatpush1.bf16.msra.mxu0 0
      %524 = vmatprep.mubr.bf16.mxu0 0
      %525 = vmatmul.mubr.bf16.gmra.mrb[0].mxu0 %v478
      %v526 = vpop.f32.mrb[0].mxu0
      %v527 = vadd.f32 0.0, %v526
      %v528 = vpop.f32.mrb[0].mxu0
      %v529 = vpop.f32.mrb[0].mxu0
      %v530 = vadd.f32 0.0, %v529
      %v531 = vpop.f32.mrb[0].mxu0
      %532 = vmatprep.mubr.bf16.mxu0 0
      %533 = vmatmul.mubr.bf16.gmra.mrb[0].mxu0 %v481
      %v534 = vpop.f32.mrb[0].mxu0
      %v535 = vadd.f32 0.0, %v534
      %v536 = vpop.f32.mrb[0].mxu0
      %v537 = vpop.f32.mrb[0].mxu0
      %v538 = vadd.f32 0.0, %v537
      %v539 = vpop.f32.mrb[0].mxu0
      %540 = vmatprep.mubr.bf16.mxu0 0
      %541 = vmatmul.mubr.bf16.gmra.mrb[0].mxu0 %v484
      %v542 = vpop.f32.mrb[0].mxu0
      %v543 = vadd.f32 0.0, %v542
      %v544 = vpop.f32.mrb[0].mxu0
      %v545 = vpop.f32.mrb[0].mxu0
      %v546 = vadd.f32 0.0, %v545
      %v547 = vpop.f32.mrb[0].mxu0
      %548 = vmatprep.mubr.bf16.mxu0 0
      %549 = vmatmul.mubr.bf16.gmra.mrb[0].mxu0 %v487
      %v550 = vpop.f32.mrb[0].mxu0
      %v551 = vadd.f32 0.0, %v550
      %v552 = vpop.f32.mrb[0].mxu0
      %v553 = vpop.f32.mrb[0].mxu0
      %v554 = vadd.f32 0.0, %v553
      %v555 = vpop.f32.mrb[0].mxu0
      %556 = vdwg.mxu0
      %v557 = vadd.f32 %v406, %v527
      %v558 = vadd.f32 %v409, %v530
      %v559 = vadd.f32 %v414, %v535
      %v560 = vadd.f32 %v417, %v538
      %v561 = vadd.f32 %v422, %v543
      %v562 = vadd.f32 %v425, %v546
      %v563 = vadd.f32 %v430, %v551
      %v564 = vadd.f32 %v433, %v554
      %v565 = vld [vmem:[%s2] sm:$0x1]
      %v567 = vlaneseq
      %v568 = vshrl.u32 %v567, 7
      %v569 = vsub.s32 0, %v568
      %v570 = vrot.slane %v565, %v569
      %v572 = vadd.f32 %v557, %v570
      %v573 = vadd.f32 %v558, %v570
      %v574 = vadd.f32 %v559, %v570
      %v575 = vadd.f32 %v560, %v570
      %v576 = vadd.f32 %v561, %v570
      %v577 = vadd.f32 %v562, %v570
      %v578 = vadd.f32 %v563, %v570
      %v579 = vadd.f32 %v564, %v570
      %v580 = vmax.f32 %v572, 0.0
      %v581 = vmax.f32 %v573, 0.0
      %v582 = vmax.f32 %v574, 0.0
      %v583 = vmax.f32 %v575, 0.0
      %v584 = vmax.f32 %v576, 0.0
      %v585 = vmax.f32 %v577, 0.0
      %v586 = vmax.f32 %v578, 0.0
      %v587 = vmax.f32 %v579, 0.0
      %v588 = vpack.c.bf16 %v581, %v580
      %v589 = vpack.c.bf16 %v583, %v582
      %v590 = vpack.c.bf16 %v585, %v584
      %v591 = vpack.c.bf16 %v587, %v586
      %v596 = vunpack.c.l.b16 %v588
      %v597 = vunpack.c.h.b16 %v588
      %v598 = vunpack.c.l.b16 %v589
      %v599 = vunpack.c.h.b16 %v589
      %v600 = vunpack.c.l.b16 %v590
      %v601 = vunpack.c.h.b16 %v590
      %v602 = vunpack.c.l.b16 %v591
      %v603 = vunpack.c.h.b16 %v591
      %v604 = vpack.c.b16 %v596, %v596
      %v605 = vpack.c.b16 %v597, %v597
      %v606 = vpack.c.b16 %v598, %v598
      %v607 = vpack.c.b16 %v599, %v599
      %v608 = vpack.c.b16 %v600, %v600
      %v609 = vpack.c.b16 %v601, %v601
      %v610 = vpack.c.b16 %v602, %v602
      %v611 = vpack.c.b16 %v603, %v603
      %vm620 = vcmask 27648
      %621 = vst.msk [vmem:[%s192] sm:$0xf] %vm620, %v604
      %622 = vst.msk [vmem:[%s192 + $0x4] sm:$0xf] %vm620, %v605
      %623 = vst.msk [vmem:[%s192 + $0x8] sm:$0xf] %vm620, %v606
      %624 = vst.msk [vmem:[%s192 + $0xc] sm:$0xf] %vm620, %v607
      %625 = vst.msk [vmem:[%s192 + $0x10] sm:$0xf] %vm620, %v608
      %626 = vst.msk [vmem:[%s192 + $0x14] sm:$0xf] %vm620, %v609
      %627 = vst.msk [vmem:[%s192 + $0x18] sm:$0xf] %vm620, %v610
      %628 = vst.msk [vmem:[%s192 + $0x1c] sm:$0xf] %vm620, %v611
      %s629 = smul.u32 8, %s19
      %p630 = scmp.lt.s32.totalorder %s18, 1
      %s631 = scalar_select %p630, %s18, 1
      %p632 = scmp.lt.s32.totalorder %s629, 7
      %s633 = scalar_select %p632, %s629, 7
      %s634 = smul.addr %s631, 8
      %s635 = sadd.s32 %s633, %s634
      %s636 = smul.addr %s635, 4
      %s637 = scalar_lea.vmem %s3, %s636
      // Predicated region
      $region33: #{bottleneck_forward.8} parent=31 // pred_check
        %p638 = pneg %p114
      $region34: #{bottleneck_forward.8} parent=31 // pred_check_branch
        %640 = sbr.rel (%p638) target = $region36
      $region35: #{bottleneck_forward.8} parent=31 // pred_region
        %s641 = smul.u32 8, %s19
      $region36: #{bottleneck_forward.8} parent=31 // pred_fallthru
        _
    $region32: #{bottleneck_forward.8} parent=5 // pred_fallthru
      _
    %p642 = scmp.le.s32.totalorder 2, %s9
    // Predicated region
    $region37: #{bottleneck_forward.8} parent=5 // pred_check
      %p643 = pneg %p642
    $region38: #{bottleneck_forward.8} parent=5 // pred_check_branch
      %645 = sbr.rel (%p643) target = $region40
    $region39: #{bottleneck_forward.8} parent=5 // pred_region
      %s646 = ssub.s32 %s9, 2
      // Predicated region
      $region41: #{bottleneck_forward.8} parent=39 // pred_check
        %p647 = pneg %p120
      $region42: #{bottleneck_forward.8} parent=39 // pred_check_branch
        %649 = sbr.rel (%p647) target = $region44
      $region43: #{bottleneck_forward.8} parent=39 // pred_region
        %s650 = smul.u32 8, %s21
        %p651 = scmp.lt.s32.totalorder %s20, 1
        %s652 = scalar_select %p651, %s20, 1
        %p653 = scmp.lt.s32.totalorder %s650, 7
        %s654 = scalar_select %p653, %s650, 7
        %s655 = smul.addr %s652, 8
        %s656 = sadd.s32 %s654, %s655
        %s657 = smul.addr %s656, 4
        %s658 = scalar_lea.vmem %s3, %s657
      $region44: #{bottleneck_forward.8} parent=39 // pred_fallthru
        _
    $region40: #{bottleneck_forward.8} parent=5 // pred_fallthru
      _
  $region6: #{bottleneck_forward.8} parent=0 // loop_footer
    %s13 = sadd.s32 1, %s9
  $region7: #{bottleneck_forward.8} parent=0 // loop_footer_branch
    %8 = sbr.rel target = $region3
  $region8: #{bottleneck_forward.8} parent=0 // loop_exit
    _

</llo_original>
